<compile_context>
chip_gen: v7x
topology: tpu7x:2x2x1
jax: 0.10.0
libtpu: 0.0.40
codegen_flags: <defaults>
</compile_context>

<pallas_src>
import functools

import jax
import jax.numpy as jnp
import numpy as np
from jax.experimental import pallas as pl
from jax.experimental.pallas import tpu as pltpu


def _mm(a, w):
    return jnp.dot(a, w, preferred_element_type=jnp.float32)


def _seg_sum(S, x):
    """scatter_add over edge rows: S^T @ x, expressed by contracting over E (axis 0)."""
    return jax.lax.dot_general(
        S, x, dimension_numbers=(((0,), (0,)), ((), ())),
        preferred_element_type=jnp.float32)


def _gram_constants(T):
    """0/1 expansion matrices so the per-edge (4,T)x(4,T) gram and the phi broadcast
    run as dense matmuls instead of unaligned lane slices + concats."""
    ncol = 16 * T
    cols = np.arange(ncol)
    j = cols // (4 * T)
    k = (cols // T) % 4
    t = cols % T
    RA = np.zeros((4 * T, ncol), np.float32)
    RA[j * T + t, cols] = 1.0              # (cd @ RA)[:, col] = cd[:, T*j + t]
    RB = np.zeros((4 * T, ncol), np.float32)
    RB[k * T + t, cols] = 1.0              # (cd @ RB)[:, col] = cd[:, T*k + t]
    BS = np.zeros((ncol, 16), np.float32)
    BS[cols, j * 4 + k] = 1.0              # sum over t into gram entry (j, k)
    q = np.arange(4 * T)
    RP = np.zeros((4, 4 * T), np.float32)
    RP[q // T, q] = 1.0                    # (phi @ RP)[:, T*j + t] = phi[:, j]
    return (jnp.asarray(RA), jnp.asarray(RB), jnp.asarray(BS), jnp.asarray(RP))


def _gmnl_kernel(coords_weight,
                 h_ref, c_ref, ea_ref, srow_ref, scol_ref, invdeg_ref,
                 ra_ref, rb_ref, bs_ref, rp_ref,
                 wsrc_ref, wtgt_ref, wrad_ref, wea_ref, b1e_ref,
                 w2e_ref, b2e_ref, wc1_ref, bc1_ref, wc2_ref,
                 wn1h_ref, wn1a_ref, bn1_ref, wn2_ref, bn2_ref,
                 out_ref):
    f32, bf16 = jnp.float32, jnp.bfloat16
    B, N, _ = h_ref.shape
    D_c = c_ref.shape[2]                       # 4*T
    F_out = wn2_ref.shape[1]
    pad = out_ref.shape[2] - (F_out + D_c)     # lane padding of the output slab

    S_row = srow_ref[...]                      # [E, N] bf16 one-hot (exact)
    S_col = scol_ref[...]                      # [E, N] bf16
    inv_deg = invdeg_ref[...]                  # [N, 1] f32 = 1 / clamp(degree, 1)
    RA, RB, BS, RP = ra_ref[...], rb_ref[...], bs_ref[...], rp_ref[...]

    # batch-independent edge_attr projection, hoisted out of the batch loop
    ea_term = _mm(ea_ref[...], wea_ref[...])                  # [E, H] f32

    for b in range(B):                         # B small & static -> unrolled
        hb = h_ref[b]                          # [N, F_in] f32 (kept f32 for residual)
        cb = c_ref[b]                          # [N, 4T]   f32
        hb16, cb16 = hb.astype(bf16), cb.astype(bf16)

        # --- project node features BEFORE gathering (N rows instead of E) ---
        hp_src = _mm(hb16, wsrc_ref[...])                     # [N, H]
        hp_tgt = _mm(hb16, wtgt_ref[...])                     # [N, H]

        # --- gathers via one-hot matmul (MXU) ---
        src_p = _mm(S_row, hp_src.astype(bf16))               # [E, H]
        tgt_p = _mm(S_col, hp_tgt.astype(bf16))               # [E, H]
        crow = _mm(S_row, cb16)                               # [E, 4T]
        ccol = _mm(S_col, cb16)
        cd = crow - ccol                                      # coord_diff, f32

        # --- coord2radial: per-edge 4x4 gram via constant expansion matmuls ---
        a_j = _mm(cd, RA)                                     # [E, 16T]
        a_k = _mm(cd, RB)                                     # [E, 16T]
        cdp = _mm(a_j * a_k, BS)                              # [E, 16] gram, row-major (j,k)
        sumsq = jnp.sum(cdp * cdp, axis=1, keepdims=True)
        radial = cdp * jax.lax.rsqrt(jnp.maximum(sumsq, 1e-24))   # F.normalize(p=2, eps=1e-12)

        # --- edge MLP with split weights (concat-free) ---
        pre1 = (src_p + tgt_p + _mm(radial.astype(bf16), wrad_ref[...])
                + ea_term + b1e_ref[...])
        m1 = jnp.maximum(pre1, 0.0)
        edge_feat = jnp.maximum(_mm(m1.astype(bf16), w2e_ref[...]) + b2e_ref[...], 0.0)

        # --- coord model: trans = clip(coord_diff * coord_mlp(edge_feat)); segment mean; residual ---
        cm = jnp.maximum(_mm(edge_feat.astype(bf16), wc1_ref[...]) + bc1_ref[...], 0.0)
        phi = _mm(cm.astype(bf16), wc2_ref[...])              # [E, 4] (no bias)
        trans = jnp.clip(cd * _mm(phi, RP), -100.0, 100.0)    # phi broadcast to [E, 4T]
        agg_c = _seg_sum(S_row, trans.astype(bf16))           # [N, 4T] scatter_add over row
        cnew = cb + coords_weight * (agg_c * inv_deg)         # segment mean + residual

        # --- node model (Fs=None): split wn1, no concat; recurrent residual ---
        agg_h = _seg_sum(S_row, edge_feat.astype(bf16))       # [N, H]
        n1 = jnp.maximum(_mm(hb16, wn1h_ref[...])
                         + _mm(agg_h.astype(bf16), wn1a_ref[...]) + bn1_ref[...], 0.0)
        hnew = hb + _mm(n1.astype(bf16), wn2_ref[...]) + bn2_ref[...]

        # --- single lane-dense output slab (padded to a multiple of 128 lanes) ---
        parts = [hnew, cnew]
        if pad > 0:
            parts.append(jnp.zeros((N, pad), f32))
        out_ref[b] = jnp.concatenate(parts, axis=1)


def gmnl_forward(h, coord, edge_index, edge_attr, params, *, coords_weight=1.0):
    """h: [B,N,F_in] f32, coord: [B,N,4,T] f32, edge_index=(row,col) int32 [E],
    edge_attr: [E,Ea]. Returns (h_out [B,N,F_out], coord_out [B,N,4,T])."""
    B, N, F_in = h.shape
    assert coord.shape[2] == 4
    T = coord.shape[3]
    D_c = 4 * T
    row, col = edge_index
    bf16 = jnp.bfloat16

    # One-hot gather/scatter matrices (0/1 exact in bf16) + precomputed row degrees.
    S_row = jax.nn.one_hot(row, N, dtype=bf16)                # [E, N]
    S_col = jax.nn.one_hot(col, N, dtype=bf16)                # [E, N]
    deg = jnp.zeros((N,), jnp.float32).at[row].add(1.0)
    inv_deg = (1.0 / jnp.maximum(deg, 1.0)).reshape(N, 1)     # count.clamp(min=1)

    RA, RB, BS, RP = _gram_constants(T)

    (w1e, b1e, w2e, b2e, wc1, bc1, wc2, wn1, bn1, wn2, bn2) = params
    F_out = wn2.shape[1]

    # Row-wise weight splits so the in-kernel concats disappear
    # (edge concat order: [source, target, radial, edge_attr]; node: [h, agg]).
    w_src = w1e[:F_in]
    w_tgt = w1e[F_in:2 * F_in]
    w_rad = w1e[2 * F_in:2 * F_in + 16]
    w_ea = w1e[2 * F_in + 16:]
    wn1_h = wn1[:F_in]
    wn1_a = wn1[F_in:]

    def b16(x):
        return x.astype(bf16)

    slab = ((F_out + D_c + 127) // 128) * 128                 # lane-dense output width
    c_flat = coord.reshape(B, N, D_c).astype(jnp.float32)

    inputs = (
        h.astype(jnp.float32), c_flat, b16(edge_attr), S_row, S_col, inv_deg,
        RA, RB, BS, RP,
        b16(w_src), b16(w_tgt), b16(w_rad), b16(w_ea), b1e.astype(jnp.float32),
        b16(w2e), b2e.astype(jnp.float32), b16(wc1), bc1.astype(jnp.float32), b16(wc2),
        b16(wn1_h), b16(wn1_a), bn1.astype(jnp.float32), b16(wn2), bn2.astype(jnp.float32),
    )

    vmem_spec = pl.BlockSpec(memory_space=pltpu.MemorySpace.VMEM)
    out = pl.pallas_call(
        functools.partial(_gmnl_kernel, float(coords_weight)),
        out_shape=jax.ShapeDtypeStruct((B, N, slab), jnp.float32),
        in_specs=[vmem_spec] * len(inputs),
        out_specs=vmem_spec,
    )(*inputs)

    hs = out[:, :, :F_out]
    c_out = out[:, :, F_out:F_out + D_c].reshape(B, N, 4, T)
    return hs, c_out


def init_params(key, F_in, F_out, H, Ea):
    """Deterministic synthetic weights matching GMNL's __init__ shapes (attention/tanh off, Fs=None)."""
    din_edge = 2 * F_in + 16 + Ea        # input_edge + edge_coords_nf + edges_in_d
    din_node = H + F_in                  # hidden_nf + input_nf (+ nodes_att_dim=0)
    ks = jax.random.split(key, 6)

    def lin(k, din, dout, scale=None):
        s = scale if scale is not None else 1.0 / jnp.sqrt(float(din))
        return jax.random.uniform(k, (din, dout), jnp.float32, -s, s)

    w1e = lin(ks[0], din_edge, H)
    b1e = jnp.zeros((1, H), jnp.float32)
    w2e = lin(ks[1], H, H)
    b2e = jnp.zeros((1, H), jnp.float32)
    wc1 = lin(ks[2], H, H)
    bc1 = jnp.zeros((1, H), jnp.float32)
    wc2 = lin(ks[3], H, 4, scale=0.001)          # xavier(gain=0.001)-style tiny init, no bias
    wn1 = lin(ks[4], din_node, H)
    bn1 = jnp.zeros((1, H), jnp.float32)
    wn2 = lin(ks[5], H, F_out)
    bn2 = jnp.zeros((1, F_out), jnp.float32)
    return (w1e, b1e, w2e, b2e, wc1, bc1, wc2, wn1, bn1, wn2, bn2)


def ref_forward(h, coord, row, col, edge_attr, params, coords_weight=1.0):
    """Plain-JAX f32 reference matching GMNL.forward (attention=False, tanh=False, Fs=None)."""
    w1e, b1e, w2e, b2e, wc1, bc1, wc2, wn1, bn1, wn2, bn2 = params
    B, N, _ = h.shape
    E = row.shape[0]
    hs, cs = [], []
    for b in range(B):
        hb, cb = h[b], coord[b]
        cd = cb[row] - cb[col]                                  # [E,4,T]
        cdp = jnp.einsum('ejt,ekt->ejk', cd, cd).reshape(E, 16)
        radial = cdp / jnp.maximum(jnp.linalg.norm(cdp, axis=-1, keepdims=True), 1e-12)
        ein = jnp.concatenate([hb[row], hb[col], radial, edge_attr], axis=1)
        ef = jax.nn.relu(jax.nn.relu(ein @ w1e + b1e) @ w2e + b2e)
        phi = jax.nn.relu(ef @ wc1 + bc1) @ wc2                 # [E,4]
        trans = jnp.clip(cd * phi[:, :, None], -100.0, 100.0)
        seg = jax.ops.segment_sum(trans, row, num_segments=N)
        cnt = jax.ops.segment_sum(jnp.ones_like(trans), row, num_segments=N)
        cs.append(cb + coords_weight * (seg / jnp.maximum(cnt, 1.0)))
        agg_h = jax.ops.segment_sum(ef, row, num_segments=N)
        nin = jnp.concatenate([hb, agg_h], axis=1)
        hs.append(hb + (jax.nn.relu(nin @ wn1 + bn1) @ wn2 + bn2))
    return jnp.stack(hs), jnp.stack(cs)


if __name__ == "__main__":
    # Small shapes: B=2 graphs, N=8 nodes, F_in=F_out=8 (residual requires equality),
    # hidden=32, edge_attr dim=4, coord block (4, T=3), fully connected edges (E=56).
    B, N, F_in, F_out, H, Ea, T = 2, 8, 8, 8, 32, 4, 3

    key = jax.random.PRNGKey(0)
    k1, k2, k3, k4 = jax.random.split(key, 4)
    h = jax.random.normal(k1, (B, N, F_in), jnp.float32)
    coord = jax.random.normal(k2, (B, N, 4, T), jnp.float32)

    rows, cols = [], []
    for i in range(N):
        for j in range(N):
            if i != j:
                rows.append(i)
                cols.append(j)
    row = jnp.array(rows, dtype=jnp.int32)
    col = jnp.array(cols, dtype=jnp.int32)
    edge_attr = jax.random.normal(k3, (row.shape[0], Ea), jnp.float32)

    params = init_params(k4, F_in, F_out, H, Ea)

    hs, coords_out = gmnl_forward(h, coord, (row, col), edge_attr, params)
    jax.block_until_ready((hs, coords_out))

    hs_ref, coords_ref = ref_forward(h, coord, row, col, edge_attr, params)
    assert hs.shape == (B, N, F_out) and coords_out.shape == (B, N, 4, T)
    # bf16 MXU operands (f32 accumulation) shift numerics slightly vs the f32 reference.
    assert jnp.allclose(hs, hs_ref, atol=2e-2, rtol=2e-2), "h mismatch vs reference"
    assert jnp.allclose(coords_out, coords_ref, atol=2e-2, rtol=2e-2), "coord mismatch vs reference"

    print("KERNEL_OK")
</pallas_src>

<mosaic_0001>
module attributes {stable_mosaic.version = 11 : i64} {
  func.func @_gmnl_kernel(%arg0: memref<2x8x8xf32, #tpu.memory_space<vmem>>, %arg1: memref<2x8x12xf32, #tpu.memory_space<vmem>>, %arg2: memref<56x4xbf16, #tpu.memory_space<vmem>>, %arg3: memref<56x8xbf16, #tpu.memory_space<vmem>>, %arg4: memref<56x8xbf16, #tpu.memory_space<vmem>>, %arg5: memref<8x1xf32, #tpu.memory_space<vmem>>, %arg6: memref<12x48xf32, #tpu.memory_space<vmem>>, %arg7: memref<12x48xf32, #tpu.memory_space<vmem>>, %arg8: memref<48x16xf32, #tpu.memory_space<vmem>>, %arg9: memref<4x12xf32, #tpu.memory_space<vmem>>, %arg10: memref<8x32xbf16, #tpu.memory_space<vmem>>, %arg11: memref<8x32xbf16, #tpu.memory_space<vmem>>, %arg12: memref<16x32xbf16, #tpu.memory_space<vmem>>, %arg13: memref<4x32xbf16, #tpu.memory_space<vmem>>, %arg14: memref<1x32xf32, #tpu.memory_space<vmem>>, %arg15: memref<32x32xbf16, #tpu.memory_space<vmem>>, %arg16: memref<1x32xf32, #tpu.memory_space<vmem>>, %arg17: memref<32x32xbf16, #tpu.memory_space<vmem>>, %arg18: memref<1x32xf32, #tpu.memory_space<vmem>>, %arg19: memref<32x4xbf16, #tpu.memory_space<vmem>>, %arg20: memref<8x32xbf16, #tpu.memory_space<vmem>>, %arg21: memref<32x32xbf16, #tpu.memory_space<vmem>>, %arg22: memref<1x32xf32, #tpu.memory_space<vmem>>, %arg23: memref<32x8xbf16, #tpu.memory_space<vmem>>, %arg24: memref<1x8xf32, #tpu.memory_space<vmem>>, %arg25: memref<2x8x128xf32, #tpu.memory_space<vmem>>) attributes {dimension_semantics = [], scalar_prefetch = 0 : i64, scratch_operands = 0 : i64, tpu.core_type = #tpu.core_type<tc>} {
    %c0 = arith.constant 0 : index
    %c0_0 = arith.constant 0 : index
    %0 = vector.load %arg3[%c0, %c0_0] : memref<56x8xbf16, #tpu.memory_space<vmem>>, vector<56x8xbf16>
    %c0_1 = arith.constant 0 : index
    %c0_2 = arith.constant 0 : index
    %1 = vector.load %arg4[%c0_1, %c0_2] : memref<56x8xbf16, #tpu.memory_space<vmem>>, vector<56x8xbf16>
    %c0_3 = arith.constant 0 : index
    %c0_4 = arith.constant 0 : index
    %2 = vector.load %arg5[%c0_3, %c0_4] : memref<8x1xf32, #tpu.memory_space<vmem>>, vector<8x1xf32>
    %c0_5 = arith.constant 0 : index
    %c0_6 = arith.constant 0 : index
    %3 = vector.load %arg6[%c0_5, %c0_6] : memref<12x48xf32, #tpu.memory_space<vmem>>, vector<12x48xf32>
    %c0_7 = arith.constant 0 : index
    %c0_8 = arith.constant 0 : index
    %4 = vector.load %arg7[%c0_7, %c0_8] : memref<12x48xf32, #tpu.memory_space<vmem>>, vector<12x48xf32>
    %c0_9 = arith.constant 0 : index
    %c0_10 = arith.constant 0 : index
    %5 = vector.load %arg8[%c0_9, %c0_10] : memref<48x16xf32, #tpu.memory_space<vmem>>, vector<48x16xf32>
    %c0_11 = arith.constant 0 : index
    %c0_12 = arith.constant 0 : index
    %6 = vector.load %arg9[%c0_11, %c0_12] : memref<4x12xf32, #tpu.memory_space<vmem>>, vector<4x12xf32>
    %c0_13 = arith.constant 0 : index
    %c0_14 = arith.constant 0 : index
    %7 = vector.load %arg2[%c0_13, %c0_14] : memref<56x4xbf16, #tpu.memory_space<vmem>>, vector<56x4xbf16>
    %c0_15 = arith.constant 0 : index
    %c0_16 = arith.constant 0 : index
    %8 = vector.load %arg13[%c0_15, %c0_16] : memref<4x32xbf16, #tpu.memory_space<vmem>>, vector<4x32xbf16>
    %cst = arith.constant dense<0.000000e+00> : vector<56x32xf32>
    %9 = tpu.matmul %7, %8, %cst {dimension_numbers = #tpu.dot_dimension_numbers<[1], [0], [0], [1], [0, 0, 1, 1], [], []>} : vector<56x4xbf16>, vector<4x32xbf16>, vector<56x32xf32> -> vector<56x32xf32>
    %c0_17 = arith.constant 0 : index
    %c0_18 = arith.constant 0 : index
    %c0_19 = arith.constant 0 : index
    %10 = vector.load %arg0[%c0_17, %c0_18, %c0_19] : memref<2x8x8xf32, #tpu.memory_space<vmem>>, vector<1x8x8xf32>
    %11 = vector.shape_cast %10 : vector<1x8x8xf32> to vector<8x8xf32>
    %c0_20 = arith.constant 0 : index
    %c0_21 = arith.constant 0 : index
    %c0_22 = arith.constant 0 : index
    %12 = vector.load %arg1[%c0_20, %c0_21, %c0_22] : memref<2x8x12xf32, #tpu.memory_space<vmem>>, vector<1x8x12xf32>
    %13 = vector.shape_cast %12 : vector<1x8x12xf32> to vector<8x12xf32>
    %14 = arith.truncf %11 : vector<8x8xf32> to vector<8x8xbf16>
    %15 = arith.truncf %13 : vector<8x12xf32> to vector<8x12xbf16>
    %c0_23 = arith.constant 0 : index
    %c0_24 = arith.constant 0 : index
    %16 = vector.load %arg10[%c0_23, %c0_24] : memref<8x32xbf16, #tpu.memory_space<vmem>>, vector<8x32xbf16>
    %cst_25 = arith.constant dense<0.000000e+00> : vector<8x32xf32>
    %17 = tpu.matmul %14, %16, %cst_25 {dimension_numbers = #tpu.dot_dimension_numbers<[1], [0], [0], [1], [0, 0, 1, 1], [], []>} : vector<8x8xbf16>, vector<8x32xbf16>, vector<8x32xf32> -> vector<8x32xf32>
    %c0_26 = arith.constant 0 : index
    %c0_27 = arith.constant 0 : index
    %18 = vector.load %arg11[%c0_26, %c0_27] : memref<8x32xbf16, #tpu.memory_space<vmem>>, vector<8x32xbf16>
    %cst_28 = arith.constant dense<0.000000e+00> : vector<8x32xf32>
    %19 = tpu.matmul %14, %18, %cst_28 {dimension_numbers = #tpu.dot_dimension_numbers<[1], [0], [0], [1], [0, 0, 1, 1], [], []>} : vector<8x8xbf16>, vector<8x32xbf16>, vector<8x32xf32> -> vector<8x32xf32>
    %20 = arith.truncf %17 : vector<8x32xf32> to vector<8x32xbf16>
    %cst_29 = arith.constant dense<0.000000e+00> : vector<56x32xf32>
    %21 = tpu.matmul %0, %20, %cst_29 {dimension_numbers = #tpu.dot_dimension_numbers<[1], [0], [0], [1], [0, 0, 1, 1], [], []>} : vector<56x8xbf16>, vector<8x32xbf16>, vector<56x32xf32> -> vector<56x32xf32>
    %22 = arith.truncf %19 : vector<8x32xf32> to vector<8x32xbf16>
    %cst_30 = arith.constant dense<0.000000e+00> : vector<56x32xf32>
    %23 = tpu.matmul %1, %22, %cst_30 {dimension_numbers = #tpu.dot_dimension_numbers<[1], [0], [0], [1], [0, 0, 1, 1], [], []>} : vector<56x8xbf16>, vector<8x32xbf16>, vector<56x32xf32> -> vector<56x32xf32>
    %cst_31 = arith.constant dense<0.000000e+00> : vector<56x12xf32>
    %24 = tpu.matmul %0, %15, %cst_31 {dimension_numbers = #tpu.dot_dimension_numbers<[1], [0], [0], [1], [0, 0, 1, 1], [], []>} : vector<56x8xbf16>, vector<8x12xbf16>, vector<56x12xf32> -> vector<56x12xf32>
    %cst_32 = arith.constant dense<0.000000e+00> : vector<56x12xf32>
    %25 = tpu.matmul %1, %15, %cst_32 {dimension_numbers = #tpu.dot_dimension_numbers<[1], [0], [0], [1], [0, 0, 1, 1], [], []>} : vector<56x8xbf16>, vector<8x12xbf16>, vector<56x12xf32> -> vector<56x12xf32>
    %26 = arith.subf %24, %25 : vector<56x12xf32>
    %cst_33 = arith.constant dense<0.000000e+00> : vector<56x48xf32>
    %27 = tpu.matmul %26, %3, %cst_33 {dimension_numbers = #tpu.dot_dimension_numbers<[1], [0], [0], [1], [0, 0, 1, 1], [], []>} : vector<56x12xf32>, vector<12x48xf32>, vector<56x48xf32> -> vector<56x48xf32>
    %cst_34 = arith.constant dense<0.000000e+00> : vector<56x48xf32>
    %28 = tpu.matmul %26, %4, %cst_34 {dimension_numbers = #tpu.dot_dimension_numbers<[1], [0], [0], [1], [0, 0, 1, 1], [], []>} : vector<56x12xf32>, vector<12x48xf32>, vector<56x48xf32> -> vector<56x48xf32>
    %29 = arith.mulf %27, %28 : vector<56x48xf32>
    %cst_35 = arith.constant dense<0.000000e+00> : vector<56x16xf32>
    %30 = tpu.matmul %29, %5, %cst_35 {dimension_numbers = #tpu.dot_dimension_numbers<[1], [0], [0], [1], [0, 0, 1, 1], [], []>} : vector<56x48xf32>, vector<48x16xf32>, vector<56x16xf32> -> vector<56x16xf32>
    %31 = arith.mulf %30, %30 : vector<56x16xf32>
    %cst_36 = arith.constant dense<0.000000e+00> : vector<56xf32>
    %32 = vector.multi_reduction <add>, %31, %cst_36 [1] : vector<56x16xf32> to vector<56xf32>
    %33 = vector.shape_cast %32 : vector<56xf32> to vector<56x1xf32>
    %cst_37 = arith.constant 1.000000e-24 : f32
    %34 = vector.broadcast %cst_37 : f32 to vector<56x1xf32>
    %35 = arith.maximumf %33, %34 : vector<56x1xf32>
    %36 = math.rsqrt %35 : vector<56x1xf32>
    %37 = vector.broadcast %36 : vector<56x1xf32> to vector<56x16xf32>
    %38 = arith.mulf %30, %37 : vector<56x16xf32>
    %39 = arith.addf %21, %23 : vector<56x32xf32>
    %40 = arith.truncf %38 : vector<56x16xf32> to vector<56x16xbf16>
    %c0_38 = arith.constant 0 : index
    %c0_39 = arith.constant 0 : index
    %41 = vector.load %arg12[%c0_38, %c0_39] : memref<16x32xbf16, #tpu.memory_space<vmem>>, vector<16x32xbf16>
    %cst_40 = arith.constant dense<0.000000e+00> : vector<56x32xf32>
    %42 = tpu.matmul %40, %41, %cst_40 {dimension_numbers = #tpu.dot_dimension_numbers<[1], [0], [0], [1], [0, 0, 1, 1], [], []>} : vector<56x16xbf16>, vector<16x32xbf16>, vector<56x32xf32> -> vector<56x32xf32>
    %43 = arith.addf %39, %42 : vector<56x32xf32>
    %44 = arith.addf %43, %9 : vector<56x32xf32>
    %c0_41 = arith.constant 0 : index
    %c0_42 = arith.constant 0 : index
    %45 = vector.load %arg14[%c0_41, %c0_42] : memref<1x32xf32, #tpu.memory_space<vmem>>, vector<1x32xf32>
    %46 = vector.broadcast %45 : vector<1x32xf32> to vector<56x32xf32>
    %47 = arith.addf %44, %46 : vector<56x32xf32>
    %cst_43 = arith.constant 0.000000e+00 : f32
    %48 = vector.broadcast %cst_43 : f32 to vector<56x32xf32>
    %49 = arith.maximumf %47, %48 : vector<56x32xf32>
    %50 = arith.truncf %49 : vector<56x32xf32> to vector<56x32xbf16>
    %c0_44 = arith.constant 0 : index
    %c0_45 = arith.constant 0 : index
    %51 = vector.load %arg15[%c0_44, %c0_45] : memref<32x32xbf16, #tpu.memory_space<vmem>>, vector<32x32xbf16>
    %cst_46 = arith.constant dense<0.000000e+00> : vector<56x32xf32>
    %52 = tpu.matmul %50, %51, %cst_46 {dimension_numbers = #tpu.dot_dimension_numbers<[1], [0], [0], [1], [0, 0, 1, 1], [], []>} : vector<56x32xbf16>, vector<32x32xbf16>, vector<56x32xf32> -> vector<56x32xf32>
    %c0_47 = arith.constant 0 : index
    %c0_48 = arith.constant 0 : index
    %53 = vector.load %arg16[%c0_47, %c0_48] : memref<1x32xf32, #tpu.memory_space<vmem>>, vector<1x32xf32>
    %54 = vector.broadcast %53 : vector<1x32xf32> to vector<56x32xf32>
    %55 = arith.addf %52, %54 : vector<56x32xf32>
    %cst_49 = arith.constant 0.000000e+00 : f32
    %56 = vector.broadcast %cst_49 : f32 to vector<56x32xf32>
    %57 = arith.maximumf %55, %56 : vector<56x32xf32>
    %58 = arith.truncf %57 : vector<56x32xf32> to vector<56x32xbf16>
    %c0_50 = arith.constant 0 : index
    %c0_51 = arith.constant 0 : index
    %59 = vector.load %arg17[%c0_50, %c0_51] : memref<32x32xbf16, #tpu.memory_space<vmem>>, vector<32x32xbf16>
    %cst_52 = arith.constant dense<0.000000e+00> : vector<56x32xf32>
    %60 = tpu.matmul %58, %59, %cst_52 {dimension_numbers = #tpu.dot_dimension_numbers<[1], [0], [0], [1], [0, 0, 1, 1], [], []>} : vector<56x32xbf16>, vector<32x32xbf16>, vector<56x32xf32> -> vector<56x32xf32>
    %c0_53 = arith.constant 0 : index
    %c0_54 = arith.constant 0 : index
    %61 = vector.load %arg18[%c0_53, %c0_54] : memref<1x32xf32, #tpu.memory_space<vmem>>, vector<1x32xf32>
    %62 = vector.broadcast %61 : vector<1x32xf32> to vector<56x32xf32>
    %63 = arith.addf %60, %62 : vector<56x32xf32>
    %cst_55 = arith.constant 0.000000e+00 : f32
    %64 = vector.broadcast %cst_55 : f32 to vector<56x32xf32>
    %65 = arith.maximumf %63, %64 : vector<56x32xf32>
    %66 = arith.truncf %65 : vector<56x32xf32> to vector<56x32xbf16>
    %c0_56 = arith.constant 0 : index
    %c0_57 = arith.constant 0 : index
    %67 = vector.load %arg19[%c0_56, %c0_57] : memref<32x4xbf16, #tpu.memory_space<vmem>>, vector<32x4xbf16>
    %cst_58 = arith.constant dense<0.000000e+00> : vector<56x4xf32>
    %68 = tpu.matmul %66, %67, %cst_58 {dimension_numbers = #tpu.dot_dimension_numbers<[1], [0], [0], [1], [0, 0, 1, 1], [], []>} : vector<56x32xbf16>, vector<32x4xbf16>, vector<56x4xf32> -> vector<56x4xf32>
    %cst_59 = arith.constant dense<0.000000e+00> : vector<56x12xf32>
    %69 = tpu.matmul %68, %6, %cst_59 {dimension_numbers = #tpu.dot_dimension_numbers<[1], [0], [0], [1], [0, 0, 1, 1], [], []>} : vector<56x4xf32>, vector<4x12xf32>, vector<56x12xf32> -> vector<56x12xf32>
    %70 = arith.mulf %26, %69 : vector<56x12xf32>
    %cst_60 = arith.constant -1.000000e+02 : f32
    %cst_61 = arith.constant 1.000000e+02 : f32
    %71 = vector.broadcast %cst_60 : f32 to vector<56x12xf32>
    %72 = arith.maximumf %71, %70 : vector<56x12xf32>
    %73 = vector.broadcast %cst_61 : f32 to vector<56x12xf32>
    %74 = arith.minimumf %73, %72 : vector<56x12xf32>
    %75 = arith.truncf %74 : vector<56x12xf32> to vector<56x12xbf16>
    %cst_62 = arith.constant dense<0.000000e+00> : vector<8x12xf32>
    %76 = tpu.matmul %0, %75, %cst_62 {dimension_numbers = #tpu.dot_dimension_numbers<[0], [0], [1], [1], [0, 1, 1, 1], [], []>} : vector<56x8xbf16>, vector<56x12xbf16>, vector<8x12xf32> -> vector<8x12xf32>
    %77 = vector.broadcast %2 : vector<8x1xf32> to vector<8x12xf32>
    %78 = arith.mulf %76, %77 : vector<8x12xf32>
    %cst_63 = arith.constant 1.000000e+00 : f32
    %79 = vector.broadcast %cst_63 : f32 to vector<8x12xf32>
    %80 = arith.mulf %79, %78 : vector<8x12xf32>
    %81 = arith.addf %13, %80 : vector<8x12xf32>
    %82 = arith.truncf %57 : vector<56x32xf32> to vector<56x32xbf16>
    %cst_64 = arith.constant dense<0.000000e+00> : vector<8x32xf32>
    %83 = tpu.matmul %0, %82, %cst_64 {dimension_numbers = #tpu.dot_dimension_numbers<[0], [0], [1], [1], [0, 1, 1, 1], [], []>} : vector<56x8xbf16>, vector<56x32xbf16>, vector<8x32xf32> -> vector<8x32xf32>
    %c0_65 = arith.constant 0 : index
    %c0_66 = arith.constant 0 : index
    %84 = vector.load %arg20[%c0_65, %c0_66] : memref<8x32xbf16, #tpu.memory_space<vmem>>, vector<8x32xbf16>
    %cst_67 = arith.constant dense<0.000000e+00> : vector<8x32xf32>
    %85 = tpu.matmul %14, %84, %cst_67 {dimension_numbers = #tpu.dot_dimension_numbers<[1], [0], [0], [1], [0, 0, 1, 1], [], []>} : vector<8x8xbf16>, vector<8x32xbf16>, vector<8x32xf32> -> vector<8x32xf32>
    %86 = arith.truncf %83 : vector<8x32xf32> to vector<8x32xbf16>
    %c0_68 = arith.constant 0 : index
    %c0_69 = arith.constant 0 : index
    %87 = vector.load %arg21[%c0_68, %c0_69] : memref<32x32xbf16, #tpu.memory_space<vmem>>, vector<32x32xbf16>
    %cst_70 = arith.constant dense<0.000000e+00> : vector<8x32xf32>
    %88 = tpu.matmul %86, %87, %cst_70 {dimension_numbers = #tpu.dot_dimension_numbers<[1], [0], [0], [1], [0, 0, 1, 1], [], []>} : vector<8x32xbf16>, vector<32x32xbf16>, vector<8x32xf32> -> vector<8x32xf32>
    %89 = arith.addf %85, %88 : vector<8x32xf32>
    %c0_71 = arith.constant 0 : index
    %c0_72 = arith.constant 0 : index
    %90 = vector.load %arg22[%c0_71, %c0_72] : memref<1x32xf32, #tpu.memory_space<vmem>>, vector<1x32xf32>
    %91 = vector.broadcast %90 : vector<1x32xf32> to vector<8x32xf32>
    %92 = arith.addf %89, %91 : vector<8x32xf32>
    %cst_73 = arith.constant 0.000000e+00 : f32
    %93 = vector.broadcast %cst_73 : f32 to vector<8x32xf32>
    %94 = arith.maximumf %92, %93 : vector<8x32xf32>
    %95 = arith.truncf %94 : vector<8x32xf32> to vector<8x32xbf16>
    %c0_74 = arith.constant 0 : index
    %c0_75 = arith.constant 0 : index
    %96 = vector.load %arg23[%c0_74, %c0_75] : memref<32x8xbf16, #tpu.memory_space<vmem>>, vector<32x8xbf16>
    %cst_76 = arith.constant dense<0.000000e+00> : vector<8x8xf32>
    %97 = tpu.matmul %95, %96, %cst_76 {dimension_numbers = #tpu.dot_dimension_numbers<[1], [0], [0], [1], [0, 0, 1, 1], [], []>} : vector<8x32xbf16>, vector<32x8xbf16>, vector<8x8xf32> -> vector<8x8xf32>
    %98 = arith.addf %11, %97 : vector<8x8xf32>
    %c0_77 = arith.constant 0 : index
    %c0_78 = arith.constant 0 : index
    %99 = vector.load %arg24[%c0_77, %c0_78] : memref<1x8xf32, #tpu.memory_space<vmem>>, vector<1x8xf32>
    %100 = vector.broadcast %99 : vector<1x8xf32> to vector<8x8xf32>
    %101 = arith.addf %98, %100 : vector<8x8xf32>
    %cst_79 = arith.constant 0.000000e+00 : f32
    %102 = vector.broadcast %cst_79 : f32 to vector<8x108xf32>
    %103 = tpu.concatenate %101, %81, %102 in 1 : vector<8x8xf32>, vector<8x12xf32>, vector<8x108xf32> -> vector<8x128xf32>
    %c0_80 = arith.constant 0 : index
    %c0_81 = arith.constant 0 : index
    %c0_82 = arith.constant 0 : index
    %104 = vector.load %arg25[%c0_80, %c0_81, %c0_82] : memref<2x8x128xf32, #tpu.memory_space<vmem>>, vector<1x8x128xf32>
    %105 = vector.shape_cast %104 : vector<1x8x128xf32> to vector<8x128xf32>
    %106 = vector.shape_cast %103 : vector<8x128xf32> to vector<1x8x128xf32>
    tpu.vector_store %arg25[%c0_80, %c0_81, %c0_82], %106 {strides = array<i32>} : memref<2x8x128xf32, #tpu.memory_space<vmem>>, vector<1x8x128xf32>,
    %c1 = arith.constant 1 : index
    %c0_83 = arith.constant 0 : index
    %c0_84 = arith.constant 0 : index
    %107 = vector.load %arg0[%c1, %c0_83, %c0_84] : memref<2x8x8xf32, #tpu.memory_space<vmem>>, vector<1x8x8xf32>
    %108 = vector.shape_cast %107 : vector<1x8x8xf32> to vector<8x8xf32>
    %c1_85 = arith.constant 1 : index
    %c0_86 = arith.constant 0 : index
    %c0_87 = arith.constant 0 : index
    %109 = vector.load %arg1[%c1_85, %c0_86, %c0_87] : memref<2x8x12xf32, #tpu.memory_space<vmem>>, vector<1x8x12xf32>
    %110 = vector.shape_cast %109 : vector<1x8x12xf32> to vector<8x12xf32>
    %111 = arith.truncf %108 : vector<8x8xf32> to vector<8x8xbf16>
    %112 = arith.truncf %110 : vector<8x12xf32> to vector<8x12xbf16>
    %c0_88 = arith.constant 0 : index
    %c0_89 = arith.constant 0 : index
    %113 = vector.load %arg10[%c0_88, %c0_89] : memref<8x32xbf16, #tpu.memory_space<vmem>>, vector<8x32xbf16>
    %cst_90 = arith.constant dense<0.000000e+00> : vector<8x32xf32>
    %114 = tpu.matmul %111, %113, %cst_90 {dimension_numbers = #tpu.dot_dimension_numbers<[1], [0], [0], [1], [0, 0, 1, 1], [], []>} : vector<8x8xbf16>, vector<8x32xbf16>, vector<8x32xf32> -> vector<8x32xf32>
    %c0_91 = arith.constant 0 : index
    %c0_92 = arith.constant 0 : index
    %115 = vector.load %arg11[%c0_91, %c0_92] : memref<8x32xbf16, #tpu.memory_space<vmem>>, vector<8x32xbf16>
    %cst_93 = arith.constant dense<0.000000e+00> : vector<8x32xf32>
    %116 = tpu.matmul %111, %115, %cst_93 {dimension_numbers = #tpu.dot_dimension_numbers<[1], [0], [0], [1], [0, 0, 1, 1], [], []>} : vector<8x8xbf16>, vector<8x32xbf16>, vector<8x32xf32> -> vector<8x32xf32>
    %117 = arith.truncf %114 : vector<8x32xf32> to vector<8x32xbf16>
    %cst_94 = arith.constant dense<0.000000e+00> : vector<56x32xf32>
    %118 = tpu.matmul %0, %117, %cst_94 {dimension_numbers = #tpu.dot_dimension_numbers<[1], [0], [0], [1], [0, 0, 1, 1], [], []>} : vector<56x8xbf16>, vector<8x32xbf16>, vector<56x32xf32> -> vector<56x32xf32>
    %119 = arith.truncf %116 : vector<8x32xf32> to vector<8x32xbf16>
    %cst_95 = arith.constant dense<0.000000e+00> : vector<56x32xf32>
    %120 = tpu.matmul %1, %119, %cst_95 {dimension_numbers = #tpu.dot_dimension_numbers<[1], [0], [0], [1], [0, 0, 1, 1], [], []>} : vector<56x8xbf16>, vector<8x32xbf16>, vector<56x32xf32> -> vector<56x32xf32>
    %cst_96 = arith.constant dense<0.000000e+00> : vector<56x12xf32>
    %121 = tpu.matmul %0, %112, %cst_96 {dimension_numbers = #tpu.dot_dimension_numbers<[1], [0], [0], [1], [0, 0, 1, 1], [], []>} : vector<56x8xbf16>, vector<8x12xbf16>, vector<56x12xf32> -> vector<56x12xf32>
    %cst_97 = arith.constant dense<0.000000e+00> : vector<56x12xf32>
    %122 = tpu.matmul %1, %112, %cst_97 {dimension_numbers = #tpu.dot_dimension_numbers<[1], [0], [0], [1], [0, 0, 1, 1], [], []>} : vector<56x8xbf16>, vector<8x12xbf16>, vector<56x12xf32> -> vector<56x12xf32>
    %123 = arith.subf %121, %122 : vector<56x12xf32>
    %cst_98 = arith.constant dense<0.000000e+00> : vector<56x48xf32>
    %124 = tpu.matmul %123, %3, %cst_98 {dimension_numbers = #tpu.dot_dimension_numbers<[1], [0], [0], [1], [0, 0, 1, 1], [], []>} : vector<56x12xf32>, vector<12x48xf32>, vector<56x48xf32> -> vector<56x48xf32>
    %cst_99 = arith.constant dense<0.000000e+00> : vector<56x48xf32>
    %125 = tpu.matmul %123, %4, %cst_99 {dimension_numbers = #tpu.dot_dimension_numbers<[1], [0], [0], [1], [0, 0, 1, 1], [], []>} : vector<56x12xf32>, vector<12x48xf32>, vector<56x48xf32> -> vector<56x48xf32>
    %126 = arith.mulf %124, %125 : vector<56x48xf32>
    %cst_100 = arith.constant dense<0.000000e+00> : vector<56x16xf32>
    %127 = tpu.matmul %126, %5, %cst_100 {dimension_numbers = #tpu.dot_dimension_numbers<[1], [0], [0], [1], [0, 0, 1, 1], [], []>} : vector<56x48xf32>, vector<48x16xf32>, vector<56x16xf32> -> vector<56x16xf32>
    %128 = arith.mulf %127, %127 : vector<56x16xf32>
    %cst_101 = arith.constant dense<0.000000e+00> : vector<56xf32>
    %129 = vector.multi_reduction <add>, %128, %cst_101 [1] : vector<56x16xf32> to vector<56xf32>
    %130 = vector.shape_cast %129 : vector<56xf32> to vector<56x1xf32>
    %cst_102 = arith.constant 1.000000e-24 : f32
    %131 = vector.broadcast %cst_102 : f32 to vector<56x1xf32>
    %132 = arith.maximumf %130, %131 : vector<56x1xf32>
    %133 = math.rsqrt %132 : vector<56x1xf32>
    %134 = vector.broadcast %133 : vector<56x1xf32> to vector<56x16xf32>
    %135 = arith.mulf %127, %134 : vector<56x16xf32>
    %136 = arith.addf %118, %120 : vector<56x32xf32>
    %137 = arith.truncf %135 : vector<56x16xf32> to vector<56x16xbf16>
    %c0_103 = arith.constant 0 : index
    %c0_104 = arith.constant 0 : index
    %138 = vector.load %arg12[%c0_103, %c0_104] : memref<16x32xbf16, #tpu.memory_space<vmem>>, vector<16x32xbf16>
    %cst_105 = arith.constant dense<0.000000e+00> : vector<56x32xf32>
    %139 = tpu.matmul %137, %138, %cst_105 {dimension_numbers = #tpu.dot_dimension_numbers<[1], [0], [0], [1], [0, 0, 1, 1], [], []>} : vector<56x16xbf16>, vector<16x32xbf16>, vector<56x32xf32> -> vector<56x32xf32>
    %140 = arith.addf %136, %139 : vector<56x32xf32>
    %141 = arith.addf %140, %9 : vector<56x32xf32>
    %c0_106 = arith.constant 0 : index
    %c0_107 = arith.constant 0 : index
    %142 = vector.load %arg14[%c0_106, %c0_107] : memref<1x32xf32, #tpu.memory_space<vmem>>, vector<1x32xf32>
    %143 = vector.broadcast %142 : vector<1x32xf32> to vector<56x32xf32>
    %144 = arith.addf %141, %143 : vector<56x32xf32>
    %cst_108 = arith.constant 0.000000e+00 : f32
    %145 = vector.broadcast %cst_108 : f32 to vector<56x32xf32>
    %146 = arith.maximumf %144, %145 : vector<56x32xf32>
    %147 = arith.truncf %146 : vector<56x32xf32> to vector<56x32xbf16>
    %c0_109 = arith.constant 0 : index
    %c0_110 = arith.constant 0 : index
    %148 = vector.load %arg15[%c0_109, %c0_110] : memref<32x32xbf16, #tpu.memory_space<vmem>>, vector<32x32xbf16>
    %cst_111 = arith.constant dense<0.000000e+00> : vector<56x32xf32>
    %149 = tpu.matmul %147, %148, %cst_111 {dimension_numbers = #tpu.dot_dimension_numbers<[1], [0], [0], [1], [0, 0, 1, 1], [], []>} : vector<56x32xbf16>, vector<32x32xbf16>, vector<56x32xf32> -> vector<56x32xf32>
    %c0_112 = arith.constant 0 : index
    %c0_113 = arith.constant 0 : index
    %150 = vector.load %arg16[%c0_112, %c0_113] : memref<1x32xf32, #tpu.memory_space<vmem>>, vector<1x32xf32>
    %151 = vector.broadcast %150 : vector<1x32xf32> to vector<56x32xf32>
    %152 = arith.addf %149, %151 : vector<56x32xf32>
    %cst_114 = arith.constant 0.000000e+00 : f32
    %153 = vector.broadcast %cst_114 : f32 to vector<56x32xf32>
    %154 = arith.maximumf %152, %153 : vector<56x32xf32>
    %155 = arith.truncf %154 : vector<56x32xf32> to vector<56x32xbf16>
    %c0_115 = arith.constant 0 : index
    %c0_116 = arith.constant 0 : index
    %156 = vector.load %arg17[%c0_115, %c0_116] : memref<32x32xbf16, #tpu.memory_space<vmem>>, vector<32x32xbf16>
    %cst_117 = arith.constant dense<0.000000e+00> : vector<56x32xf32>
    %157 = tpu.matmul %155, %156, %cst_117 {dimension_numbers = #tpu.dot_dimension_numbers<[1], [0], [0], [1], [0, 0, 1, 1], [], []>} : vector<56x32xbf16>, vector<32x32xbf16>, vector<56x32xf32> -> vector<56x32xf32>
    %c0_118 = arith.constant 0 : index
    %c0_119 = arith.constant 0 : index
    %158 = vector.load %arg18[%c0_118, %c0_119] : memref<1x32xf32, #tpu.memory_space<vmem>>, vector<1x32xf32>
    %159 = vector.broadcast %158 : vector<1x32xf32> to vector<56x32xf32>
    %160 = arith.addf %157, %159 : vector<56x32xf32>
    %cst_120 = arith.constant 0.000000e+00 : f32
    %161 = vector.broadcast %cst_120 : f32 to vector<56x32xf32>
    %162 = arith.maximumf %160, %161 : vector<56x32xf32>
    %163 = arith.truncf %162 : vector<56x32xf32> to vector<56x32xbf16>
    %c0_121 = arith.constant 0 : index
    %c0_122 = arith.constant 0 : index
    %164 = vector.load %arg19[%c0_121, %c0_122] : memref<32x4xbf16, #tpu.memory_space<vmem>>, vector<32x4xbf16>
    %cst_123 = arith.constant dense<0.000000e+00> : vector<56x4xf32>
    %165 = tpu.matmul %163, %164, %cst_123 {dimension_numbers = #tpu.dot_dimension_numbers<[1], [0], [0], [1], [0, 0, 1, 1], [], []>} : vector<56x32xbf16>, vector<32x4xbf16>, vector<56x4xf32> -> vector<56x4xf32>
    %cst_124 = arith.constant dense<0.000000e+00> : vector<56x12xf32>
    %166 = tpu.matmul %165, %6, %cst_124 {dimension_numbers = #tpu.dot_dimension_numbers<[1], [0], [0], [1], [0, 0, 1, 1], [], []>} : vector<56x4xf32>, vector<4x12xf32>, vector<56x12xf32> -> vector<56x12xf32>
    %167 = arith.mulf %123, %166 : vector<56x12xf32>
    %cst_125 = arith.constant -1.000000e+02 : f32
    %cst_126 = arith.constant 1.000000e+02 : f32
    %168 = vector.broadcast %cst_125 : f32 to vector<56x12xf32>
    %169 = arith.maximumf %168, %167 : vector<56x12xf32>
    %170 = vector.broadcast %cst_126 : f32 to vector<56x12xf32>
    %171 = arith.minimumf %170, %169 : vector<56x12xf32>
    %172 = arith.truncf %171 : vector<56x12xf32> to vector<56x12xbf16>
    %cst_127 = arith.constant dense<0.000000e+00> : vector<8x12xf32>
    %173 = tpu.matmul %0, %172, %cst_127 {dimension_numbers = #tpu.dot_dimension_numbers<[0], [0], [1], [1], [0, 1, 1, 1], [], []>} : vector<56x8xbf16>, vector<56x12xbf16>, vector<8x12xf32> -> vector<8x12xf32>
    %174 = vector.broadcast %2 : vector<8x1xf32> to vector<8x12xf32>
    %175 = arith.mulf %173, %174 : vector<8x12xf32>
    %cst_128 = arith.constant 1.000000e+00 : f32
    %176 = vector.broadcast %cst_128 : f32 to vector<8x12xf32>
    %177 = arith.mulf %176, %175 : vector<8x12xf32>
    %178 = arith.addf %110, %177 : vector<8x12xf32>
    %179 = arith.truncf %154 : vector<56x32xf32> to vector<56x32xbf16>
    %cst_129 = arith.constant dense<0.000000e+00> : vector<8x32xf32>
    %180 = tpu.matmul %0, %179, %cst_129 {dimension_numbers = #tpu.dot_dimension_numbers<[0], [0], [1], [1], [0, 1, 1, 1], [], []>} : vector<56x8xbf16>, vector<56x32xbf16>, vector<8x32xf32> -> vector<8x32xf32>
    %c0_130 = arith.constant 0 : index
    %c0_131 = arith.constant 0 : index
    %181 = vector.load %arg20[%c0_130, %c0_131] : memref<8x32xbf16, #tpu.memory_space<vmem>>, vector<8x32xbf16>
    %cst_132 = arith.constant dense<0.000000e+00> : vector<8x32xf32>
    %182 = tpu.matmul %111, %181, %cst_132 {dimension_numbers = #tpu.dot_dimension_numbers<[1], [0], [0], [1], [0, 0, 1, 1], [], []>} : vector<8x8xbf16>, vector<8x32xbf16>, vector<8x32xf32> -> vector<8x32xf32>
    %183 = arith.truncf %180 : vector<8x32xf32> to vector<8x32xbf16>
    %c0_133 = arith.constant 0 : index
    %c0_134 = arith.constant 0 : index
    %184 = vector.load %arg21[%c0_133, %c0_134] : memref<32x32xbf16, #tpu.memory_space<vmem>>, vector<32x32xbf16>
    %cst_135 = arith.constant dense<0.000000e+00> : vector<8x32xf32>
    %185 = tpu.matmul %183, %184, %cst_135 {dimension_numbers = #tpu.dot_dimension_numbers<[1], [0], [0], [1], [0, 0, 1, 1], [], []>} : vector<8x32xbf16>, vector<32x32xbf16>, vector<8x32xf32> -> vector<8x32xf32>
    %186 = arith.addf %182, %185 : vector<8x32xf32>
    %c0_136 = arith.constant 0 : index
    %c0_137 = arith.constant 0 : index
    %187 = vector.load %arg22[%c0_136, %c0_137] : memref<1x32xf32, #tpu.memory_space<vmem>>, vector<1x32xf32>
    %188 = vector.broadcast %187 : vector<1x32xf32> to vector<8x32xf32>
    %189 = arith.addf %186, %188 : vector<8x32xf32>
    %cst_138 = arith.constant 0.000000e+00 : f32
    %190 = vector.broadcast %cst_138 : f32 to vector<8x32xf32>
    %191 = arith.maximumf %189, %190 : vector<8x32xf32>
    %192 = arith.truncf %191 : vector<8x32xf32> to vector<8x32xbf16>
    %c0_139 = arith.constant 0 : index
    %c0_140 = arith.constant 0 : index
    %193 = vector.load %arg23[%c0_139, %c0_140] : memref<32x8xbf16, #tpu.memory_space<vmem>>, vector<32x8xbf16>
    %cst_141 = arith.constant dense<0.000000e+00> : vector<8x8xf32>
    %194 = tpu.matmul %192, %193, %cst_141 {dimension_numbers = #tpu.dot_dimension_numbers<[1], [0], [0], [1], [0, 0, 1, 1], [], []>} : vector<8x32xbf16>, vector<32x8xbf16>, vector<8x8xf32> -> vector<8x8xf32>
    %195 = arith.addf %108, %194 : vector<8x8xf32>
    %c0_142 = arith.constant 0 : index
    %c0_143 = arith.constant 0 : index
    %196 = vector.load %arg24[%c0_142, %c0_143] : memref<1x8xf32, #tpu.memory_space<vmem>>, vector<1x8xf32>
    %197 = vector.broadcast %196 : vector<1x8xf32> to vector<8x8xf32>
    %198 = arith.addf %195, %197 : vector<8x8xf32>
    %cst_144 = arith.constant 0.000000e+00 : f32
    %199 = vector.broadcast %cst_144 : f32 to vector<8x108xf32>
    %200 = tpu.concatenate %198, %178, %199 in 1 : vector<8x8xf32>, vector<8x12xf32>, vector<8x108xf32> -> vector<8x128xf32>
    %c1_145 = arith.constant 1 : index
    %c0_146 = arith.constant 0 : index
    %c0_147 = arith.constant 0 : index
    %201 = vector.load %arg25[%c1_145, %c0_146, %c0_147] : memref<2x8x128xf32, #tpu.memory_space<vmem>>, vector<1x8x128xf32>
    %202 = vector.shape_cast %201 : vector<1x8x128xf32> to vector<8x128xf32>
    %203 = vector.shape_cast %200 : vector<8x128xf32> to vector<1x8x128xf32>
    tpu.vector_store %arg25[%c1_145, %c0_146, %c0_147], %203 {strides = array<i32>} : memref<2x8x128xf32, #tpu.memory_space<vmem>>, vector<1x8x128xf32>,
    return
  }
}

</mosaic_0001>

<llo_original>
// kernel: tpu_custom_call.1
$region0: #{tpu_custom_call.1}
  #allocation0 [shape = 'u32[]', space=smem, size = 0x4, offset = 0x4, fixed_abs, tag = 'smem constant byte address 0x4 - core index']
  #allocation1 [shape = 'u32[144,128]{1,0:T(1,128)}', space=vmem, size = 0x12000, scoped, tag = 'internal scratch']
  %s0 = inlined_call_operand.vmem [shape: f32[2,8,8], index: 0, kind: input, shape index: {}]
  %s1 = inlined_call_operand.vmem [shape: f32[2,8,12], index: 1, kind: input, shape index: {}]
  %s2 = inlined_call_operand.vmem [shape: bf16[56,4], index: 2, kind: input, shape index: {}]
  %s3 = inlined_call_operand.vmem [shape: bf16[56,8], index: 3, kind: input, shape index: {}]
  %s4 = inlined_call_operand.vmem [shape: bf16[56,8], index: 4, kind: input, shape index: {}]
  %s5 = inlined_call_operand.vmem [shape: f32[8,1], index: 5, kind: input, shape index: {}]
  %s6 = inlined_call_operand.vmem [shape: f32[12,48], index: 6, kind: input, shape index: {}]
  %s7 = inlined_call_operand.vmem [shape: f32[12,48], index: 7, kind: input, shape index: {}]
  %s8 = inlined_call_operand.vmem [shape: f32[48,16], index: 8, kind: input, shape index: {}]
  %s9 = inlined_call_operand.vmem [shape: f32[4,12], index: 9, kind: input, shape index: {}]
  %s10 = inlined_call_operand.vmem [shape: bf16[8,32], index: 10, kind: input, shape index: {}]
  %s11 = inlined_call_operand.vmem [shape: bf16[8,32], index: 11, kind: input, shape index: {}]
  %s12 = inlined_call_operand.vmem [shape: bf16[16,32], index: 12, kind: input, shape index: {}]
  %s13 = inlined_call_operand.vmem [shape: bf16[4,32], index: 13, kind: input, shape index: {}]
  %s14 = inlined_call_operand.vmem [shape: f32[1,32], index: 14, kind: input, shape index: {}]
  %s15 = inlined_call_operand.vmem [shape: bf16[32,32], index: 15, kind: input, shape index: {}]
  %s16 = inlined_call_operand.vmem [shape: f32[1,32], index: 16, kind: input, shape index: {}]
  %s17 = inlined_call_operand.vmem [shape: bf16[32,32], index: 17, kind: input, shape index: {}]
  %s18 = inlined_call_operand.vmem [shape: f32[1,32], index: 18, kind: input, shape index: {}]
  %s19 = inlined_call_operand.vmem [shape: bf16[32,4], index: 19, kind: input, shape index: {}]
  %s20 = inlined_call_operand.vmem [shape: bf16[8,32], index: 20, kind: input, shape index: {}]
  %s21 = inlined_call_operand.vmem [shape: bf16[32,32], index: 21, kind: input, shape index: {}]
  %s22 = inlined_call_operand.vmem [shape: f32[1,32], index: 22, kind: input, shape index: {}]
  %s23 = inlined_call_operand.vmem [shape: bf16[32,8], index: 23, kind: input, shape index: {}]
  %s24 = inlined_call_operand.vmem [shape: f32[1,8], index: 24, kind: input, shape index: {}]
  %s25 = inlined_call_operand.hbm [shape: f32[2,8,128], index: 25, kind: output, shape index: {}]
  %s26 = sld [smem:[#allocation0]]
  $region110: #{tpu_custom_call.1} parent=0
    _
  %s28 = ssub.s32 1, %s26
  %s29 = scalar_select 0, %s28, %s26
  $region1: #{tpu_custom_call.1} parent=0
    #allocation2 [shape = 'u8[8192]{0}', space=vmem, size = 0x2000, scoped, tag = 'output window, operand 0, single buffered']
    #allocation3 [shape = 's32[1]{0}', space=sflag, size = 0x4, scoped, tag = 'scoped memory for tpu_custom_call.1']
    %30 = vsyncpa [#allocation3], 0
    // Predicated region
    $region2: #{tpu_custom_call.1} parent=1 // pred_check
      _
    $region3: #{tpu_custom_call.1} parent=1 // pred_check_branch
      %32 = sbr.rel (0) target = $region5
    $region4: #{tpu_custom_call.1} parent=1 // pred_region
      _
    $region5: #{tpu_custom_call.1} parent=1 // pred_fallthru
      _
    // Predicated region
    $region6: #{tpu_custom_call.1} parent=1 // pred_check
      _
    $region7: #{tpu_custom_call.1} parent=1 // pred_check_branch
      %34 = sbr.rel (0) target = $region9
    $region8: #{tpu_custom_call.1} parent=1 // pred_region
      _
    $region9: #{tpu_custom_call.1} parent=1 // pred_fallthru
      _
    // Predicated region
    $region10: #{tpu_custom_call.1} parent=1 // pred_check
      _
    $region11: #{tpu_custom_call.1} parent=1 // pred_check_branch
      %36 = sbr.rel (0) target = $region13
    $region12: #{tpu_custom_call.1} parent=1 // pred_region
      _
    $region13: #{tpu_custom_call.1} parent=1 // pred_fallthru
      _
    // Predicated region
    $region14: #{tpu_custom_call.1} parent=1 // pred_check
      _
    $region15: #{tpu_custom_call.1} parent=1 // pred_check_branch
      %38 = sbr.rel (0) target = $region17
    $region16: #{tpu_custom_call.1} parent=1 // pred_region
      _
    $region17: #{tpu_custom_call.1} parent=1 // pred_fallthru
      _
    // Predicated region
    $region18: #{tpu_custom_call.1} parent=1 // pred_check
      _
    $region19: #{tpu_custom_call.1} parent=1 // pred_check_branch
      %40 = sbr.rel (0) target = $region21
    $region20: #{tpu_custom_call.1} parent=1 // pred_region
      _
    $region21: #{tpu_custom_call.1} parent=1 // pred_fallthru
      _
    // Predicated region
    $region22: #{tpu_custom_call.1} parent=1 // pred_check
      _
    $region23: #{tpu_custom_call.1} parent=1 // pred_check_branch
      %42 = sbr.rel (0) target = $region25
    $region24: #{tpu_custom_call.1} parent=1 // pred_region
      _
    $region25: #{tpu_custom_call.1} parent=1 // pred_fallthru
      _
    // Predicated region
    $region26: #{tpu_custom_call.1} parent=1 // pred_check
      _
    $region27: #{tpu_custom_call.1} parent=1 // pred_check_branch
      %44 = sbr.rel (0) target = $region29
    $region28: #{tpu_custom_call.1} parent=1 // pred_region
      _
    $region29: #{tpu_custom_call.1} parent=1 // pred_fallthru
      _
    // Predicated region
    $region30: #{tpu_custom_call.1} parent=1 // pred_check
      _
    $region31: #{tpu_custom_call.1} parent=1 // pred_check_branch
      %46 = sbr.rel (0) target = $region33
    $region32: #{tpu_custom_call.1} parent=1 // pred_region
      _
    $region33: #{tpu_custom_call.1} parent=1 // pred_fallthru
      _
    // Predicated region
    $region34: #{tpu_custom_call.1} parent=1 // pred_check
      _
    $region35: #{tpu_custom_call.1} parent=1 // pred_check_branch
      %48 = sbr.rel (0) target = $region37
    $region36: #{tpu_custom_call.1} parent=1 // pred_region
      _
    $region37: #{tpu_custom_call.1} parent=1 // pred_fallthru
      _
    // Predicated region
    $region38: #{tpu_custom_call.1} parent=1 // pred_check
      _
    $region39: #{tpu_custom_call.1} parent=1 // pred_check_branch
      %50 = sbr.rel (0) target = $region41
    $region40: #{tpu_custom_call.1} parent=1 // pred_region
      _
    $region41: #{tpu_custom_call.1} parent=1 // pred_fallthru
      _
    // Predicated region
    $region42: #{tpu_custom_call.1} parent=1 // pred_check
      _
    $region43: #{tpu_custom_call.1} parent=1 // pred_check_branch
      %52 = sbr.rel (0) target = $region45
    $region44: #{tpu_custom_call.1} parent=1 // pred_region
      _
    $region45: #{tpu_custom_call.1} parent=1 // pred_fallthru
      _
    // Predicated region
    $region46: #{tpu_custom_call.1} parent=1 // pred_check
      _
    $region47: #{tpu_custom_call.1} parent=1 // pred_check_branch
      %54 = sbr.rel (0) target = $region49
    $region48: #{tpu_custom_call.1} parent=1 // pred_region
      _
    $region49: #{tpu_custom_call.1} parent=1 // pred_fallthru
      _
    // Predicated region
    $region50: #{tpu_custom_call.1} parent=1 // pred_check
      _
    $region51: #{tpu_custom_call.1} parent=1 // pred_check_branch
      %56 = sbr.rel (0) target = $region53
    $region52: #{tpu_custom_call.1} parent=1 // pred_region
      _
    $region53: #{tpu_custom_call.1} parent=1 // pred_fallthru
      _
    // Predicated region
    $region54: #{tpu_custom_call.1} parent=1 // pred_check
      _
    $region55: #{tpu_custom_call.1} parent=1 // pred_check_branch
      %58 = sbr.rel (0) target = $region57
    $region56: #{tpu_custom_call.1} parent=1 // pred_region
      _
    $region57: #{tpu_custom_call.1} parent=1 // pred_fallthru
      _
    // Predicated region
    $region58: #{tpu_custom_call.1} parent=1 // pred_check
      _
    $region59: #{tpu_custom_call.1} parent=1 // pred_check_branch
      %60 = sbr.rel (0) target = $region61
    $region60: #{tpu_custom_call.1} parent=1 // pred_region
      _
    $region61: #{tpu_custom_call.1} parent=1 // pred_fallthru
      _
    // Predicated region
    $region62: #{tpu_custom_call.1} parent=1 // pred_check
      _
    $region63: #{tpu_custom_call.1} parent=1 // pred_check_branch
      %62 = sbr.rel (0) target = $region65
    $region64: #{tpu_custom_call.1} parent=1 // pred_region
      _
    $region65: #{tpu_custom_call.1} parent=1 // pred_fallthru
      _
    // Predicated region
    $region66: #{tpu_custom_call.1} parent=1 // pred_check
      _
    $region67: #{tpu_custom_call.1} parent=1 // pred_check_branch
      %64 = sbr.rel (0) target = $region69
    $region68: #{tpu_custom_call.1} parent=1 // pred_region
      _
    $region69: #{tpu_custom_call.1} parent=1 // pred_fallthru
      _
    // Predicated region
    $region70: #{tpu_custom_call.1} parent=1 // pred_check
      _
    $region71: #{tpu_custom_call.1} parent=1 // pred_check_branch
      %66 = sbr.rel (0) target = $region73
    $region72: #{tpu_custom_call.1} parent=1 // pred_region
      _
    $region73: #{tpu_custom_call.1} parent=1 // pred_fallthru
      _
    // Predicated region
    $region74: #{tpu_custom_call.1} parent=1 // pred_check
      _
    $region75: #{tpu_custom_call.1} parent=1 // pred_check_branch
      %68 = sbr.rel (0) target = $region77
    $region76: #{tpu_custom_call.1} parent=1 // pred_region
      _
    $region77: #{tpu_custom_call.1} parent=1 // pred_fallthru
      _
    // Predicated region
    $region78: #{tpu_custom_call.1} parent=1 // pred_check
      _
    $region79: #{tpu_custom_call.1} parent=1 // pred_check_branch
      %70 = sbr.rel (0) target = $region81
    $region80: #{tpu_custom_call.1} parent=1 // pred_region
      _
    $region81: #{tpu_custom_call.1} parent=1 // pred_fallthru
      _
    // Predicated region
    $region82: #{tpu_custom_call.1} parent=1 // pred_check
      _
    $region83: #{tpu_custom_call.1} parent=1 // pred_check_branch
      %72 = sbr.rel (0) target = $region85
    $region84: #{tpu_custom_call.1} parent=1 // pred_region
      _
    $region85: #{tpu_custom_call.1} parent=1 // pred_fallthru
      _
    // Predicated region
    $region86: #{tpu_custom_call.1} parent=1 // pred_check
      _
    $region87: #{tpu_custom_call.1} parent=1 // pred_check_branch
      %74 = sbr.rel (0) target = $region89
    $region88: #{tpu_custom_call.1} parent=1 // pred_region
      _
    $region89: #{tpu_custom_call.1} parent=1 // pred_fallthru
      _
    // Predicated region
    $region90: #{tpu_custom_call.1} parent=1 // pred_check
      _
    $region91: #{tpu_custom_call.1} parent=1 // pred_check_branch
      %76 = sbr.rel (0) target = $region93
    $region92: #{tpu_custom_call.1} parent=1 // pred_region
      _
    $region93: #{tpu_custom_call.1} parent=1 // pred_fallthru
      _
    // Predicated region
    $region94: #{tpu_custom_call.1} parent=1 // pred_check
      _
    $region95: #{tpu_custom_call.1} parent=1 // pred_check_branch
      %78 = sbr.rel (0) target = $region97
    $region96: #{tpu_custom_call.1} parent=1 // pred_region
      _
    $region97: #{tpu_custom_call.1} parent=1 // pred_fallthru
      _
    // Predicated region
    $region98: #{tpu_custom_call.1} parent=1 // pred_check
      _
    $region99: #{tpu_custom_call.1} parent=1 // pred_check_branch
      %80 = sbr.rel (0) target = $region101
    $region100: #{tpu_custom_call.1} parent=1 // pred_region
      _
    $region101: #{tpu_custom_call.1} parent=1 // pred_fallthru
      _
    %v82 = vld [vmem:[%s3] sm:$0xf]
    %v83 = vld [vmem:[%s3 + $0x4] sm:$0xf]
    %v84 = vld [vmem:[%s3 + $0x8] sm:$0xf]
    %v85 = vld [vmem:[%s3 + $0xc] sm:$0xf]
    %v86 = vld [vmem:[%s3 + $0x10] sm:$0xf]
    %v87 = vld [vmem:[%s3 + $0x14] sm:$0xf]
    %v88 = vld [vmem:[%s3 + $0x18] sm:$0xf]
    %v89 = vld [vmem:[%s4] sm:$0xf]
    %v90 = vld [vmem:[%s4 + $0x4] sm:$0xf]
    %v91 = vld [vmem:[%s4 + $0x8] sm:$0xf]
    %v92 = vld [vmem:[%s4 + $0xc] sm:$0xf]
    %v93 = vld [vmem:[%s4 + $0x10] sm:$0xf]
    %v94 = vld [vmem:[%s4 + $0x14] sm:$0xf]
    %v95 = vld [vmem:[%s4 + $0x18] sm:$0xf]
    %v96 = vld [vmem:[%s5] sm:$0xff]
    %v97 = vld [vmem:[%s6] sm:$0xff]
    %v98 = vld [vmem:[%s6 + $0x8] sm:$0xf]
    %v99 = vld [vmem:[%s7] sm:$0xff]
    %v100 = vld [vmem:[%s7 + $0x8] sm:$0xf]
    %v101 = vld [vmem:[%s8] sm:$0xff]
    %v102 = vld [vmem:[%s8 + $0x8] sm:$0xff]
    %v103 = vld [vmem:[%s8 + $0x10] sm:$0xff]
    %v104 = vld [vmem:[%s8 + $0x18] sm:$0xff]
    %v105 = vld [vmem:[%s8 + $0x20] sm:$0xff]
    %v106 = vld [vmem:[%s8 + $0x28] sm:$0xff]
    %v107 = vld [vmem:[%s9] sm:$0xf]
    %v108 = vld [vmem:[%s2] sm:$0xf]
    %v109 = vld [vmem:[%s2 + $0x4] sm:$0xf]
    %v110 = vld [vmem:[%s2 + $0x8] sm:$0xf]
    %v111 = vld [vmem:[%s2 + $0xc] sm:$0xf]
    %v112 = vld [vmem:[%s2 + $0x10] sm:$0xf]
    %v113 = vld [vmem:[%s2 + $0x14] sm:$0xf]
    %v114 = vld [vmem:[%s2 + $0x18] sm:$0xf]
    %v115 = vld [vmem:[%s13] sm:$0x3]
    %v123 = vunpack.c.l.b16 %v108
    %v124 = vunpack.c.l.b16 %v109
    %v125 = vunpack.c.l.b16 %v110
    %v126 = vunpack.c.l.b16 %v111
    %v127 = vunpack.c.l.b16 %v112
    %v128 = vunpack.c.l.b16 %v113
    %v129 = vunpack.c.l.b16 %v114
    %v130 = vpack.c.b16 %v124, %v123
    %v131 = vpack.c.b16 %v126, %v125
    %v132 = vpack.c.b16 %v128, %v127
    %v133 = vpack.c.b16 %v129, %v129
    %vm134 = vcmask 31744
    %v136 = vsel %vm134, %v130, 0
    %v139 = vsel %vm134, %v131, 0
    %v142 = vsel %vm134, %v132, 0
    %v145 = vsel %vm134, %v133, 0
    %vm147 = vcmask 1041408
    %v149 = vsel %vm147, %v115, 0
    %151 = vmatprep.subr.bf16.mxu0 0
    %152 = vmatpush1.bf16.msra.mxu0 %v149
    %153 = vmatprep.subr.bf16.mxu0 0
    %154 = vmatpush1.bf16.msra.mxu0 0
    %155 = vmatprep.subr.bf16.mxu0 0
    %156 = vmatpush1.bf16.msra.mxu0 0
    %157 = vmatprep.subr.bf16.mxu0 0
    %158 = vmatpush1.bf16.msra.mxu0 0
    %159 = vmatprep.subr.bf16.mxu0 0
    %160 = vmatpush1.bf16.msra.mxu0 0
    %161 = vmatprep.subr.bf16.mxu0 0
    %162 = vmatpush1.bf16.msra.mxu0 0
    %163 = vmatprep.subr.bf16.mxu0 0
    %164 = vmatpush1.bf16.msra.mxu0 0
    %165 = vmatprep.subr.bf16.mxu0 0
    %166 = vmatpush1.bf16.msra.mxu0 0
    %167 = vmatprep.subr.bf16.mxu0 0
    %168 = vmatpush1.bf16.msra.mxu0 0
    %169 = vmatprep.subr.bf16.mxu0 0
    %170 = vmatpush1.bf16.msra.mxu0 0
    %171 = vmatprep.subr.bf16.mxu0 0
    %172 = vmatpush1.bf16.msra.mxu0 0
    %173 = vmatprep.subr.bf16.mxu0 0
    %174 = vmatpush1.bf16.msra.mxu0 0
    %175 = vmatprep.subr.bf16.mxu0 0
    %176 = vmatpush1.bf16.msra.mxu0 0
    %177 = vmatprep.subr.bf16.mxu0 0
    %178 = vmatpush1.bf16.msra.mxu0 0
    %179 = vmatprep.subr.bf16.mxu0 0
    %180 = vmatpush1.bf16.msra.mxu0 0
    %181 = vmatprep.subr.bf16.mxu0 0
    %182 = vmatpush1.bf16.msra.mxu0 0
    %183 = vmatprep.mubr.bf16.mxu0 0
    %184 = vmatmul.mubr.bf16.gmra.mrb[0].mxu0 %v136
    %v185 = vpop.f32.mrb[0].mxu0
    %v186 = vadd.f32 0.0, %v185
    %v187 = vpop.f32.mrb[0].mxu0
    %v188 = vpop.f32.mrb[0].mxu0
    %v189 = vadd.f32 0.0, %v188
    %v190 = vpop.f32.mrb[0].mxu0
    %191 = vmatprep.mubr.bf16.mxu0 0
    %192 = vmatmul.mubr.bf16.gmra.mrb[0].mxu0 %v139
    %v193 = vpop.f32.mrb[0].mxu0
    %v194 = vadd.f32 0.0, %v193
    %v195 = vpop.f32.mrb[0].mxu0
    %v196 = vpop.f32.mrb[0].mxu0
    %v197 = vadd.f32 0.0, %v196
    %v198 = vpop.f32.mrb[0].mxu0
    %199 = vmatprep.mubr.bf16.mxu0 0
    %200 = vmatmul.mubr.bf16.gmra.mrb[0].mxu0 %v142
    %v201 = vpop.f32.mrb[0].mxu0
    %v202 = vadd.f32 0.0, %v201
    %v203 = vpop.f32.mrb[0].mxu0
    %v204 = vpop.f32.mrb[0].mxu0
    %v205 = vadd.f32 0.0, %v204
    %v206 = vpop.f32.mrb[0].mxu0
    %207 = vmatprep.mubr.bf16.mxu0 0
    %208 = vmatmul.mubr.bf16.gmra.mrb[0].mxu0 %v145
    %v209 = vpop.f32.mrb[0].mxu0
    %v210 = vadd.f32 0.0, %v209
    %v211 = vpop.f32.mrb[0].mxu0
    %v212 = vpop.f32.mrb[0].mxu0
    %v213 = vpop.f32.mrb[0].mxu0
    %214 = vdwg.mxu0
    %v215 = vld [vmem:[%s0] sm:$0xff]
    %v216 = vld [vmem:[%s1] sm:$0xff]
    %v217 = vpack.c.bf16 %v215, %v215
    %v218 = vpack.c.bf16 %v216, %v216
    %v219 = vld [vmem:[%s10] sm:$0xf]
    %vm220 = vcmask 64512
    %v222 = vsel %vm220, %v217, 0
    %vm224 = vcmask 1043456
    %v226 = vsel %vm224, %v219, 0
    %228 = vmatprep.subr.bf16.mxu0 0
    %229 = vmatpush1.bf16.msra.mxu0 %v226
    %230 = vmatprep.subr.bf16.mxu0 0
    %231 = vmatpush1.bf16.msra.mxu0 0
    %232 = vmatprep.subr.bf16.mxu0 0
    %233 = vmatpush1.bf16.msra.mxu0 0
    %234 = vmatprep.subr.bf16.mxu0 0
    %235 = vmatpush1.bf16.msra.mxu0 0
    %236 = vmatprep.subr.bf16.mxu0 0
    %237 = vmatpush1.bf16.msra.mxu0 0
    %238 = vmatprep.subr.bf16.mxu0 0
    %239 = vmatpush1.bf16.msra.mxu0 0
    %240 = vmatprep.subr.bf16.mxu0 0
    %241 = vmatpush1.bf16.msra.mxu0 0
    %242 = vmatprep.subr.bf16.mxu0 0
    %243 = vmatpush1.bf16.msra.mxu0 0
    %244 = vmatprep.subr.bf16.mxu0 0
    %245 = vmatpush1.bf16.msra.mxu0 0
    %246 = vmatprep.subr.bf16.mxu0 0
    %247 = vmatpush1.bf16.msra.mxu0 0
    %248 = vmatprep.subr.bf16.mxu0 0
    %249 = vmatpush1.bf16.msra.mxu0 0
    %250 = vmatprep.subr.bf16.mxu0 0
    %251 = vmatpush1.bf16.msra.mxu0 0
    %252 = vmatprep.subr.bf16.mxu0 0
    %253 = vmatpush1.bf16.msra.mxu0 0
    %254 = vmatprep.subr.bf16.mxu0 0
    %255 = vmatpush1.bf16.msra.mxu0 0
    %256 = vmatprep.subr.bf16.mxu0 0
    %257 = vmatpush1.bf16.msra.mxu0 0
    %258 = vmatprep.subr.bf16.mxu0 0
    %259 = vmatpush1.bf16.msra.mxu0 0
    %260 = vmatprep.mubr.bf16.mxu0 0
    %261 = vmatmul.mubr.bf16.gmra.mrb[0].mxu0 %v222
    %v262 = vpop.f32.mrb[0].mxu0
    %v263 = vadd.f32 0.0, %v262
    %v264 = vpop.f32.mrb[0].mxu0
    %v265 = vpop.f32.mrb[0].mxu0
    %v266 = vpop.f32.mrb[0].mxu0
    %267 = vdwg.mxu0
    %v268 = vld [vmem:[%s11] sm:$0xf]
    %v270 = vsel %vm224, %v268, 0
    %272 = vmatprep.subr.bf16.mxu0 0
    %273 = vmatpush1.bf16.msra.mxu0 %v270
    %274 = vmatprep.subr.bf16.mxu0 0
    %275 = vmatpush1.bf16.msra.mxu0 0
    %276 = vmatprep.subr.bf16.mxu0 0
    %277 = vmatpush1.bf16.msra.mxu0 0
    %278 = vmatprep.subr.bf16.mxu0 0
    %279 = vmatpush1.bf16.msra.mxu0 0
    %280 = vmatprep.subr.bf16.mxu0 0
    %281 = vmatpush1.bf16.msra.mxu0 0
    %282 = vmatprep.subr.bf16.mxu0 0
    %283 = vmatpush1.bf16.msra.mxu0 0
    %284 = vmatprep.subr.bf16.mxu0 0
    %285 = vmatpush1.bf16.msra.mxu0 0
    %286 = vmatprep.subr.bf16.mxu0 0
    %287 = vmatpush1.bf16.msra.mxu0 0
    %288 = vmatprep.subr.bf16.mxu0 0
    %289 = vmatpush1.bf16.msra.mxu0 0
    %290 = vmatprep.subr.bf16.mxu0 0
    %291 = vmatpush1.bf16.msra.mxu0 0
    %292 = vmatprep.subr.bf16.mxu0 0
    %293 = vmatpush1.bf16.msra.mxu0 0
    %294 = vmatprep.subr.bf16.mxu0 0
    %295 = vmatpush1.bf16.msra.mxu0 0
    %296 = vmatprep.subr.bf16.mxu0 0
    %297 = vmatpush1.bf16.msra.mxu0 0
    %298 = vmatprep.subr.bf16.mxu0 0
    %299 = vmatpush1.bf16.msra.mxu0 0
    %300 = vmatprep.subr.bf16.mxu0 0
    %301 = vmatpush1.bf16.msra.mxu0 0
    %302 = vmatprep.subr.bf16.mxu0 0
    %303 = vmatpush1.bf16.msra.mxu0 0
    %304 = vmatprep.mubr.bf16.mxu0 0
    %305 = vmatmul.mubr.bf16.gmra.mrb[0].mxu0 %v222
    %v306 = vpop.f32.mrb[0].mxu0
    %v307 = vadd.f32 0.0, %v306
    %v308 = vpop.f32.mrb[0].mxu0
    %v309 = vpop.f32.mrb[0].mxu0
    %v310 = vpop.f32.mrb[0].mxu0
    %311 = vdwg.mxu0
    %v312 = vpack.c.bf16 %v263, %v263
    %v313 = vpack.c.bf16 %v307, %v307
    %v321 = vunpack.c.l.b16 %v89
    %v322 = vunpack.c.l.b16 %v90
    %v323 = vunpack.c.l.b16 %v91
    %v324 = vunpack.c.l.b16 %v92
    %v325 = vunpack.c.l.b16 %v93
    %v326 = vunpack.c.l.b16 %v94
    %v327 = vunpack.c.l.b16 %v95
    %v328 = vpack.c.b16 %v322, %v321
    %v329 = vpack.c.b16 %v324, %v323
    %v330 = vpack.c.b16 %v326, %v325
    %v331 = vpack.c.b16 %v327, %v327
    %v333 = vsel %vm220, %v328, 0
    %v336 = vsel %vm220, %v329, 0
    %v339 = vsel %vm220, %v330, 0
    %v342 = vsel %vm220, %v331, 0
    %v345 = vsel %vm224, %v313, 0
    %347 = vmatprep.subr.bf16.mxu0 0
    %348 = vmatpush1.bf16.msra.mxu0 %v345
    %349 = vmatprep.subr.bf16.mxu0 0
    %350 = vmatpush1.bf16.msra.mxu0 0
    %351 = vmatprep.subr.bf16.mxu0 0
    %352 = vmatpush1.bf16.msra.mxu0 0
    %353 = vmatprep.subr.bf16.mxu0 0
    %354 = vmatpush1.bf16.msra.mxu0 0
    %355 = vmatprep.subr.bf16.mxu0 0
    %356 = vmatpush1.bf16.msra.mxu0 0
    %357 = vmatprep.subr.bf16.mxu0 0
    %358 = vmatpush1.bf16.msra.mxu0 0
    %359 = vmatprep.subr.bf16.mxu0 0
    %360 = vmatpush1.bf16.msra.mxu0 0
    %361 = vmatprep.subr.bf16.mxu0 0
    %362 = vmatpush1.bf16.msra.mxu0 0
    %363 = vmatprep.subr.bf16.mxu0 0
    %364 = vmatpush1.bf16.msra.mxu0 0
    %365 = vmatprep.subr.bf16.mxu0 0
    %366 = vmatpush1.bf16.msra.mxu0 0
    %367 = vmatprep.subr.bf16.mxu0 0
    %368 = vmatpush1.bf16.msra.mxu0 0
    %369 = vmatprep.subr.bf16.mxu0 0
    %370 = vmatpush1.bf16.msra.mxu0 0
    %371 = vmatprep.subr.bf16.mxu0 0
    %372 = vmatpush1.bf16.msra.mxu0 0
    %373 = vmatprep.subr.bf16.mxu0 0
    %374 = vmatpush1.bf16.msra.mxu0 0
    %375 = vmatprep.subr.bf16.mxu0 0
    %376 = vmatpush1.bf16.msra.mxu0 0
    %377 = vmatprep.subr.bf16.mxu0 0
    %378 = vmatpush1.bf16.msra.mxu0 0
    %379 = vmatprep.mubr.bf16.mxu0 0
    %380 = vmatmul.mubr.bf16.gmra.mrb[0].mxu0 %v333
    %v381 = vpop.f32.mrb[0].mxu0
    %v382 = vadd.f32 0.0, %v381
    %v383 = vpop.f32.mrb[0].mxu0
    %v384 = vpop.f32.mrb[0].mxu0
    %v385 = vadd.f32 0.0, %v384
    %v386 = vpop.f32.mrb[0].mxu0
    %387 = vmatprep.mubr.bf16.mxu0 0
    %388 = vmatmul.mubr.bf16.gmra.mrb[0].mxu0 %v336
    %v389 = vpop.f32.mrb[0].mxu0
    %v390 = vadd.f32 0.0, %v389
    %v391 = vpop.f32.mrb[0].mxu0
    %v392 = vpop.f32.mrb[0].mxu0
    %v393 = vadd.f32 0.0, %v392
    %v394 = vpop.f32.mrb[0].mxu0
    %395 = vmatprep.mubr.bf16.mxu0 0
    %396 = vmatmul.mubr.bf16.gmra.mrb[0].mxu0 %v339
    %v397 = vpop.f32.mrb[0].mxu0
    %v398 = vadd.f32 0.0, %v397
    %v399 = vpop.f32.mrb[0].mxu0
    %v400 = vpop.f32.mrb[0].mxu0
    %v401 = vadd.f32 0.0, %v400
    %v402 = vpop.f32.mrb[0].mxu0
    %403 = vmatprep.mubr.bf16.mxu0 0
    %404 = vmatmul.mubr.bf16.gmra.mrb[0].mxu0 %v342
    %v405 = vpop.f32.mrb[0].mxu0
    %v406 = vadd.f32 0.0, %v405
    %v407 = vpop.f32.mrb[0].mxu0
    %v408 = vpop.f32.mrb[0].mxu0
    %v409 = vpop.f32.mrb[0].mxu0
    %410 = vdwg.mxu0
    %v418 = vunpack.c.l.b16 %v82
    %v419 = vunpack.c.l.b16 %v83
    %v420 = vunpack.c.l.b16 %v84
    %v421 = vunpack.c.l.b16 %v85
    %v422 = vunpack.c.l.b16 %v86
    %v423 = vunpack.c.l.b16 %v87
    %v424 = vunpack.c.l.b16 %v88
    %v425 = vpack.c.b16 %v419, %v418
    %v426 = vpack.c.b16 %v421, %v420
    %v427 = vpack.c.b16 %v423, %v422
    %v428 = vpack.c.b16 %v424, %v424
    %v430 = vsel %vm220, %v425, 0
    %v433 = vsel %vm220, %v426, 0
    %v436 = vsel %vm220, %v427, 0
    %v439 = vsel %vm220, %v428, 0
    %v442 = vsel %vm224, %v218, 0
    %444 = vmatprep.subr.bf16.mxu0 0
    %445 = vmatpush1.bf16.msra.mxu0 %v442
    %446 = vmatprep.subr.bf16.mxu0 0
    %447 = vmatpush1.bf16.msra.mxu0 0
    %448 = vmatprep.subr.bf16.mxu0 0
    %449 = vmatpush1.bf16.msra.mxu0 0
    %450 = vmatprep.subr.bf16.mxu0 0
    %451 = vmatpush1.bf16.msra.mxu0 0
    %452 = vmatprep.subr.bf16.mxu0 0
    %453 = vmatpush1.bf16.msra.mxu0 0
    %454 = vmatprep.subr.bf16.mxu0 0
    %455 = vmatpush1.bf16.msra.mxu0 0
    %456 = vmatprep.subr.bf16.mxu0 0
    %457 = vmatpush1.bf16.msra.mxu0 0
    %458 = vmatprep.subr.bf16.mxu0 0
    %459 = vmatpush1.bf16.msra.mxu0 0
    %460 = vmatprep.subr.bf16.mxu0 0
    %461 = vmatpush1.bf16.msra.mxu0 0
    %462 = vmatprep.subr.bf16.mxu0 0
    %463 = vmatpush1.bf16.msra.mxu0 0
    %464 = vmatprep.subr.bf16.mxu0 0
    %465 = vmatpush1.bf16.msra.mxu0 0
    %466 = vmatprep.subr.bf16.mxu0 0
    %467 = vmatpush1.bf16.msra.mxu0 0
    %468 = vmatprep.subr.bf16.mxu0 0
    %469 = vmatpush1.bf16.msra.mxu0 0
    %470 = vmatprep.subr.bf16.mxu0 0
    %471 = vmatpush1.bf16.msra.mxu0 0
    %472 = vmatprep.subr.bf16.mxu0 0
    %473 = vmatpush1.bf16.msra.mxu0 0
    %474 = vmatprep.subr.bf16.mxu0 0
    %475 = vmatpush1.bf16.msra.mxu0 0
    %476 = vmatprep.mubr.bf16.mxu0 0
    %477 = vmatmul.mubr.bf16.gmra.mrb[0].mxu0 %v430
    %v478 = vpop.f32.mrb[0].mxu0
    %v479 = vadd.f32 0.0, %v478
    %v480 = vpop.f32.mrb[0].mxu0
    %v481 = vpop.f32.mrb[0].mxu0
    %v482 = vadd.f32 0.0, %v481
    %v483 = vpop.f32.mrb[0].mxu0
    %484 = vmatprep.mubr.bf16.mxu0 0
    %485 = vmatmul.mubr.bf16.gmra.mrb[0].mxu0 %v433
    %v486 = vpop.f32.mrb[0].mxu0
    %v487 = vadd.f32 0.0, %v486
    %v488 = vpop.f32.mrb[0].mxu0
    %v489 = vpop.f32.mrb[0].mxu0
    %v490 = vadd.f32 0.0, %v489
    %v491 = vpop.f32.mrb[0].mxu0
    %492 = vmatprep.mubr.bf16.mxu0 0
    %493 = vmatmul.mubr.bf16.gmra.mrb[0].mxu0 %v436
    %v494 = vpop.f32.mrb[0].mxu0
    %v495 = vadd.f32 0.0, %v494
    %v496 = vpop.f32.mrb[0].mxu0
    %v497 = vpop.f32.mrb[0].mxu0
    %v498 = vadd.f32 0.0, %v497
    %v499 = vpop.f32.mrb[0].mxu0
    %500 = vmatprep.mubr.bf16.mxu0 0
    %501 = vmatmul.mubr.bf16.gmra.mrb[0].mxu0 %v439
    %v502 = vpop.f32.mrb[0].mxu0
    %v503 = vadd.f32 0.0, %v502
    %v504 = vpop.f32.mrb[0].mxu0
    %v505 = vpop.f32.mrb[0].mxu0
    %v506 = vpop.f32.mrb[0].mxu0
    %507 = vdwg.mxu0
    %508 = vmatprep.subr.bf16.mxu0 0
    %509 = vmatpush1.bf16.msra.mxu0 %v442
    %510 = vmatprep.subr.bf16.mxu0 0
    %511 = vmatpush1.bf16.msra.mxu0 0
    %512 = vmatprep.subr.bf16.mxu0 0
    %513 = vmatpush1.bf16.msra.mxu0 0
    %514 = vmatprep.subr.bf16.mxu0 0
    %515 = vmatpush1.bf16.msra.mxu0 0
    %516 = vmatprep.subr.bf16.mxu0 0
    %517 = vmatpush1.bf16.msra.mxu0 0
    %518 = vmatprep.subr.bf16.mxu0 0
    %519 = vmatpush1.bf16.msra.mxu0 0
    %520 = vmatprep.subr.bf16.mxu0 0
    %521 = vmatpush1.bf16.msra.mxu0 0
    %522 = vmatprep.subr.bf16.mxu0 0
    %523 = vmatpush1.bf16.msra.mxu0 0
    %524 = vmatprep.subr.bf16.mxu0 0
    %525 = vmatpush1.bf16.msra.mxu0 0
    %526 = vmatprep.subr.bf16.mxu0 0
    %527 = vmatpush1.bf16.msra.mxu0 0
    %528 = vmatprep.subr.bf16.mxu0 0
    %529 = vmatpush1.bf16.msra.mxu0 0
    %530 = vmatprep.subr.bf16.mxu0 0
    %531 = vmatpush1.bf16.msra.mxu0 0
    %532 = vmatprep.subr.bf16.mxu0 0
    %533 = vmatpush1.bf16.msra.mxu0 0
    %534 = vmatprep.subr.bf16.mxu0 0
    %535 = vmatpush1.bf16.msra.mxu0 0
    %536 = vmatprep.subr.bf16.mxu0 0
    %537 = vmatpush1.bf16.msra.mxu0 0
    %538 = vmatprep.subr.bf16.mxu0 0
    %539 = vmatpush1.bf16.msra.mxu0 0
    %540 = vmatprep.mubr.bf16.mxu0 0
    %541 = vmatmul.mubr.bf16.gmra.mrb[0].mxu0 %v333
    %v542 = vpop.f32.mrb[0].mxu0
    %v543 = vadd.f32 0.0, %v542
    %v544 = vpop.f32.mrb[0].mxu0
    %v545 = vpop.f32.mrb[0].mxu0
    %v546 = vadd.f32 0.0, %v545
    %v547 = vpop.f32.mrb[0].mxu0
    %548 = vmatprep.mubr.bf16.mxu0 0
    %549 = vmatmul.mubr.bf16.gmra.mrb[0].mxu0 %v336
    %v550 = vpop.f32.mrb[0].mxu0
    %v551 = vadd.f32 0.0, %v550
    %v552 = vpop.f32.mrb[0].mxu0
    %v553 = vpop.f32.mrb[0].mxu0
    %v554 = vadd.f32 0.0, %v553
    %v555 = vpop.f32.mrb[0].mxu0
    %556 = vmatprep.mubr.bf16.mxu0 0
    %557 = vmatmul.mubr.bf16.gmra.mrb[0].mxu0 %v339
    %v558 = vpop.f32.mrb[0].mxu0
    %v559 = vadd.f32 0.0, %v558
    %v560 = vpop.f32.mrb[0].mxu0
    %v561 = vpop.f32.mrb[0].mxu0
    %v562 = vadd.f32 0.0, %v561
    %v563 = vpop.f32.mrb[0].mxu0
    %564 = vmatprep.mubr.bf16.mxu0 0
    %565 = vmatmul.mubr.bf16.gmra.mrb[0].mxu0 %v342
    %v566 = vpop.f32.mrb[0].mxu0
    %v567 = vadd.f32 0.0, %v566
    %v568 = vpop.f32.mrb[0].mxu0
    %v569 = vpop.f32.mrb[0].mxu0
    %v570 = vpop.f32.mrb[0].mxu0
    %571 = vdwg.mxu0
    %v572 = vsub.f32 %v479, %v543
    %v573 = vsub.f32 %v482, %v546
    %v574 = vsub.f32 %v487, %v551
    %v575 = vsub.f32 %v490, %v554
    %v576 = vsub.f32 %v495, %v559
    %v577 = vsub.f32 %v498, %v562
    %v578 = vsub.f32 %v503, %v567
    %vm579 = vcmask 97280
    %v581 = vsel %vm579, %v572, 0
    %v584 = vsel %vm579, %v573, 0
    %v587 = vsel %vm579, %v574, 0
    %v590 = vsel %vm579, %v575, 0
    %v593 = vsel %vm579, %v576, 0
    %v596 = vsel %vm579, %v577, 0
    %v599 = vsel %vm579, %v578, 0
    %v602 = vsel %vm224, %v98, 0
    %604 = vmatprep.subr.mxu0 0.0
    %605 = vmatpush1.msra.mxu0 %v97
    %606 = vmatprep.subr.mxu0 0.0
    %607 = vmatpush1.msra.mxu0 %v602
    %608 = vmatprep.subr.mxu0 0.0
    %609 = vmatpush1.msra.mxu0 0.0
    %610 = vmatprep.subr.mxu0 0.0
    %611 = vmatpush1.msra.mxu0 0.0
    %612 = vmatprep.subr.mxu0 0.0
    %613 = vmatpush1.msra.mxu0 0.0
    %614 = vmatprep.subr.mxu0 0.0
    %615 = vmatpush1.msra.mxu0 0.0
    %616 = vmatprep.subr.mxu0 0.0
    %617 = vmatpush1.msra.mxu0 0.0
    %618 = vmatprep.subr.mxu0 0.0
    %619 = vmatpush1.msra.mxu0 0.0
    %620 = vmatprep.subr.mxu0 0.0
    %621 = vmatpush1.msra.mxu0 0.0
    %622 = vmatprep.subr.mxu0 0.0
    %623 = vmatpush1.msra.mxu0 0.0
    %624 = vmatprep.subr.mxu0 0.0
    %625 = vmatpush1.msra.mxu0 0.0
    %626 = vmatprep.subr.mxu0 0.0
    %627 = vmatpush1.msra.mxu0 0.0
    %628 = vmatprep.subr.mxu0 0.0
    %629 = vmatpush1.msra.mxu0 0.0
    %630 = vmatprep.subr.mxu0 0.0
    %631 = vmatpush1.msra.mxu0 0.0
    %632 = vmatprep.subr.mxu0 0.0
    %633 = vmatpush1.msra.mxu0 0.0
    %634 = vmatprep.subr.mxu0 0.0
    %635 = vmatpush1.msra.mxu0 0.0
    %636 = vmatprep.subr.mxu0 0.0
    %637 = vmatpush1.msra.mxu0 0.0
    %638 = vmatprep.subr.mxu0 0.0
    %639 = vmatpush1.msra.mxu0 0.0
    %640 = vmatprep.subr.mxu0 0.0
    %641 = vmatpush1.msra.mxu0 0.0
    %642 = vmatprep.subr.mxu0 0.0
    %643 = vmatpush1.msra.mxu0 0.0
    %644 = vmatprep.subr.mxu0 0.0
    %645 = vmatpush1.msra.mxu0 0.0
    %646 = vmatprep.subr.mxu0 0.0
    %647 = vmatpush1.msra.mxu0 0.0
    %648 = vmatprep.subr.mxu0 0.0
    %649 = vmatpush1.msra.mxu0 0.0
    %650 = vmatprep.subr.mxu0 0.0
    %651 = vmatpush1.msra.mxu0 0.0
    %652 = vmatprep.subr.mxu0 0.0
    %653 = vmatpush1.msra.mxu0 0.0
    %654 = vmatprep.subr.mxu0 0.0
    %655 = vmatpush1.msra.mxu0 0.0
    %656 = vmatprep.subr.mxu0 0.0
    %657 = vmatpush1.msra.mxu0 0.0
    %658 = vmatprep.subr.mxu0 0.0
    %659 = vmatpush1.msra.mxu0 0.0
    %660 = vmatprep.subr.mxu0 0.0
    %661 = vmatpush1.msra.mxu0 0.0
    %662 = vmatprep.subr.mxu0 0.0
    %663 = vmatpush1.msra.mxu0 0.0
    %664 = vmatprep.subr.mxu0 0.0
    %665 = vmatpush1.msra.mxu0 0.0
    %666 = vmatprep.subr.mxu0 0.0
    %667 = vmatpush1.msra.mxu0 0.0
    %668 = vmatprep.mubr.f32.mxu0 0.0
    %669 = vmatmul.mubr.f32.gmra.mrb[0].mxu0 %v581
    %v670 = vpop.f32.mrb[0].mxu0
    %v671 = vadd.f32 0.0, %v670
    %v672 = vpop.f32.mrb[0].mxu0
    %673 = vmatprep.mubr.f32.mxu0 0.0
    %674 = vmatmul.mubr.f32.gmra.mrb[0].mxu0 %v584
    %v675 = vpop.f32.mrb[0].mxu0
    %v676 = vadd.f32 0.0, %v675
    %v677 = vpop.f32.mrb[0].mxu0
    %678 = vmatprep.mubr.f32.mxu0 0.0
    %679 = vmatmul.mubr.f32.gmra.mrb[0].mxu0 %v587
    %v680 = vpop.f32.mrb[0].mxu0
    %v681 = vadd.f32 0.0, %v680
    %v682 = vpop.f32.mrb[0].mxu0
    %683 = vmatprep.mubr.f32.mxu0 0.0
    %684 = vmatmul.mubr.f32.gmra.mrb[0].mxu0 %v590
    %v685 = vpop.f32.mrb[0].mxu0
    %v686 = vadd.f32 0.0, %v685
    %v687 = vpop.f32.mrb[0].mxu0
    %688 = vmatprep.mubr.f32.mxu0 0.0
    %689 = vmatmul.mubr.f32.gmra.mrb[0].mxu0 %v593
    %v690 = vpop.f32.mrb[0].mxu0
    %v691 = vadd.f32 0.0, %v690
    %v692 = vpop.f32.mrb[0].mxu0
    %693 = vmatprep.mubr.f32.mxu0 0.0
    %694 = vmatmul.mubr.f32.gmra.mrb[0].mxu0 %v596
    %v695 = vpop.f32.mrb[0].mxu0
    %v696 = vadd.f32 0.0, %v695
    %v697 = vpop.f32.mrb[0].mxu0
    %698 = vmatprep.mubr.f32.mxu0 0.0
    %699 = vmatmul.mubr.f32.gmra.mrb[0].mxu0 %v599
    %v700 = vpop.f32.mrb[0].mxu0
    %v701 = vadd.f32 0.0, %v700
    %v702 = vpop.f32.mrb[0].mxu0
    %703 = vdwg.mxu0
    %v705 = vsel %vm224, %v100, 0
    %707 = vmatprep.subr.mxu0 0.0
    %708 = vmatpush1.msra.mxu0 %v99
    %709 = vmatprep.subr.mxu0 0.0
    %710 = vmatpush1.msra.mxu0 %v705
    %711 = vmatprep.subr.mxu0 0.0
    %712 = vmatpush1.msra.mxu0 0.0
    %713 = vmatprep.subr.mxu0 0.0
    %714 = vmatpush1.msra.mxu0 0.0
    %715 = vmatprep.subr.mxu0 0.0
    %716 = vmatpush1.msra.mxu0 0.0
    %717 = vmatprep.subr.mxu0 0.0
    %718 = vmatpush1.msra.mxu0 0.0
    %719 = vmatprep.subr.mxu0 0.0
    %720 = vmatpush1.msra.mxu0 0.0
    %721 = vmatprep.subr.mxu0 0.0
    %722 = vmatpush1.msra.mxu0 0.0
    %723 = vmatprep.subr.mxu0 0.0
    %724 = vmatpush1.msra.mxu0 0.0
    %725 = vmatprep.subr.mxu0 0.0
    %726 = vmatpush1.msra.mxu0 0.0
    %727 = vmatprep.subr.mxu0 0.0
    %728 = vmatpush1.msra.mxu0 0.0
    %729 = vmatprep.subr.mxu0 0.0
    %730 = vmatpush1.msra.mxu0 0.0
    %731 = vmatprep.subr.mxu0 0.0
    %732 = vmatpush1.msra.mxu0 0.0
    %733 = vmatprep.subr.mxu0 0.0
    %734 = vmatpush1.msra.mxu0 0.0
    %735 = vmatprep.subr.mxu0 0.0
    %736 = vmatpush1.msra.mxu0 0.0
    %737 = vmatprep.subr.mxu0 0.0
    %738 = vmatpush1.msra.mxu0 0.0
    %739 = vmatprep.subr.mxu0 0.0
    %740 = vmatpush1.msra.mxu0 0.0
    %741 = vmatprep.subr.mxu0 0.0
    %742 = vmatpush1.msra.mxu0 0.0
    %743 = vmatprep.subr.mxu0 0.0
    %744 = vmatpush1.msra.mxu0 0.0
    %745 = vmatprep.subr.mxu0 0.0
    %746 = vmatpush1.msra.mxu0 0.0
    %747 = vmatprep.subr.mxu0 0.0
    %748 = vmatpush1.msra.mxu0 0.0
    %749 = vmatprep.subr.mxu0 0.0
    %750 = vmatpush1.msra.mxu0 0.0
    %751 = vmatprep.subr.mxu0 0.0
    %752 = vmatpush1.msra.mxu0 0.0
    %753 = vmatprep.subr.mxu0 0.0
    %754 = vmatpush1.msra.mxu0 0.0
    %755 = vmatprep.subr.mxu0 0.0
    %756 = vmatpush1.msra.mxu0 0.0
    %757 = vmatprep.subr.mxu0 0.0
    %758 = vmatpush1.msra.mxu0 0.0
    %759 = vmatprep.subr.mxu0 0.0
    %760 = vmatpush1.msra.mxu0 0.0
    %761 = vmatprep.subr.mxu0 0.0
    %762 = vmatpush1.msra.mxu0 0.0
    %763 = vmatprep.subr.mxu0 0.0
    %764 = vmatpush1.msra.mxu0 0.0
    %765 = vmatprep.subr.mxu0 0.0
    %766 = vmatpush1.msra.mxu0 0.0
    %767 = vmatprep.subr.mxu0 0.0
    %768 = vmatpush1.msra.mxu0 0.0
    %769 = vmatprep.subr.mxu0 0.0
    %770 = vmatpush1.msra.mxu0 0.0
    %771 = vmatprep.mubr.f32.mxu0 0.0
    %772 = vmatmul.mubr.f32.gmra.mrb[0].mxu0 %v581
    %v773 = vpop.f32.mrb[0].mxu0
    %v774 = vadd.f32 0.0, %v773
    %v775 = vpop.f32.mrb[0].mxu0
    %776 = vmatprep.mubr.f32.mxu0 0.0
    %777 = vmatmul.mubr.f32.gmra.mrb[0].mxu0 %v584
    %v778 = vpop.f32.mrb[0].mxu0
    %v779 = vadd.f32 0.0, %v778
    %v780 = vpop.f32.mrb[0].mxu0
    %781 = vmatprep.mubr.f32.mxu0 0.0
    %782 = vmatmul.mubr.f32.gmra.mrb[0].mxu0 %v587
    %v783 = vpop.f32.mrb[0].mxu0
    %v784 = vadd.f32 0.0, %v783
    %v785 = vpop.f32.mrb[0].mxu0
    %786 = vmatprep.mubr.f32.mxu0 0.0
    %787 = vmatmul.mubr.f32.gmra.mrb[0].mxu0 %v590
    %v788 = vpop.f32.mrb[0].mxu0
    %v789 = vadd.f32 0.0, %v788
    %v790 = vpop.f32.mrb[0].mxu0
    %791 = vmatprep.mubr.f32.mxu0 0.0
    %792 = vmatmul.mubr.f32.gmra.mrb[0].mxu0 %v593
    %v793 = vpop.f32.mrb[0].mxu0
    %v794 = vadd.f32 0.0, %v793
    %v795 = vpop.f32.mrb[0].mxu0
    %796 = vmatprep.mubr.f32.mxu0 0.0
    %797 = vmatmul.mubr.f32.gmra.mrb[0].mxu0 %v596
    %v798 = vpop.f32.mrb[0].mxu0
    %v799 = vadd.f32 0.0, %v798
    %v800 = vpop.f32.mrb[0].mxu0
    %801 = vmatprep.mubr.f32.mxu0 0.0
    %802 = vmatmul.mubr.f32.gmra.mrb[0].mxu0 %v599
    %v803 = vpop.f32.mrb[0].mxu0
    %v804 = vadd.f32 0.0, %v803
    %v805 = vpop.f32.mrb[0].mxu0
    %806 = vdwg.mxu0
    %v807 = vmul.f32 %v671, %v774
    %v808 = vmul.f32 %v676, %v779
    %v809 = vmul.f32 %v681, %v784
    %v810 = vmul.f32 %v686, %v789
    %v811 = vmul.f32 %v691, %v794
    %v812 = vmul.f32 %v696, %v799
    %v813 = vmul.f32 %v701, %v804
    %vm814 = vcmask 392192
    %v816 = vsel %vm814, %v807, 0
    %v819 = vsel %vm814, %v808, 0
    %v822 = vsel %vm814, %v809, 0
    %v825 = vsel %vm814, %v810, 0
    %v828 = vsel %vm814, %v811, 0
    %v831 = vsel %vm814, %v812, 0
    %v834 = vsel %vm814, %v813, 0
    %836 = vmatprep.subr.mxu0 0.0
    %837 = vmatpush1.msra.mxu0 %v101
    %838 = vmatprep.subr.mxu0 0.0
    %839 = vmatpush1.msra.mxu0 %v102
    %840 = vmatprep.subr.mxu0 0.0
    %841 = vmatpush1.msra.mxu0 %v103
    %842 = vmatprep.subr.mxu0 0.0
    %843 = vmatpush1.msra.mxu0 %v104
    %844 = vmatprep.subr.mxu0 0.0
    %845 = vmatpush1.msra.mxu0 %v105
    %846 = vmatprep.subr.mxu0 0.0
    %847 = vmatpush1.msra.mxu0 %v106
    %848 = vmatprep.subr.mxu0 0.0
    %849 = vmatpush1.msra.mxu0 0.0
    %850 = vmatprep.subr.mxu0 0.0
    %851 = vmatpush1.msra.mxu0 0.0
    %852 = vmatprep.subr.mxu0 0.0
    %853 = vmatpush1.msra.mxu0 0.0
    %854 = vmatprep.subr.mxu0 0.0
    %855 = vmatpush1.msra.mxu0 0.0
    %856 = vmatprep.subr.mxu0 0.0
    %857 = vmatpush1.msra.mxu0 0.0
    %858 = vmatprep.subr.mxu0 0.0
    %859 = vmatpush1.msra.mxu0 0.0
    %860 = vmatprep.subr.mxu0 0.0
    %861 = vmatpush1.msra.mxu0 0.0
    %862 = vmatprep.subr.mxu0 0.0
    %863 = vmatpush1.msra.mxu0 0.0
    %864 = vmatprep.subr.mxu0 0.0
    %865 = vmatpush1.msra.mxu0 0.0
    %866 = vmatprep.subr.mxu0 0.0
    %867 = vmatpush1.msra.mxu0 0.0
    %868 = vmatprep.subr.mxu0 0.0
    %869 = vmatpush1.msra.mxu0 0.0
    %870 = vmatprep.subr.mxu0 0.0
    %871 = vmatpush1.msra.mxu0 0.0
    %872 = vmatprep.subr.mxu0 0.0
    %873 = vmatpush1.msra.mxu0 0.0
    %874 = vmatprep.subr.mxu0 0.0
    %875 = vmatpush1.msra.mxu0 0.0
    %876 = vmatprep.subr.mxu0 0.0
    %877 = vmatpush1.msra.mxu0 0.0
    %878 = vmatprep.subr.mxu0 0.0
    %879 = vmatpush1.msra.mxu0 0.0
    %880 = vmatprep.subr.mxu0 0.0
    %881 = vmatpush1.msra.mxu0 0.0
    %882 = vmatprep.subr.mxu0 0.0
    %883 = vmatpush1.msra.mxu0 0.0
    %884 = vmatprep.subr.mxu0 0.0
    %885 = vmatpush1.msra.mxu0 0.0
    %886 = vmatprep.subr.mxu0 0.0
    %887 = vmatpush1.msra.mxu0 0.0
    %888 = vmatprep.subr.mxu0 0.0
    %889 = vmatpush1.msra.mxu0 0.0
    %890 = vmatprep.subr.mxu0 0.0
    %891 = vmatpush1.msra.mxu0 0.0
    %892 = vmatprep.subr.mxu0 0.0
    %893 = vmatpush1.msra.mxu0 0.0
    %894 = vmatprep.subr.mxu0 0.0
    %895 = vmatpush1.msra.mxu0 0.0
    %896 = vmatprep.subr.mxu0 0.0
    %897 = vmatpush1.msra.mxu0 0.0
    %898 = vmatprep.subr.mxu0 0.0
    %899 = vmatpush1.msra.mxu0 0.0
    %900 = vmatprep.mubr.f32.mxu0 0.0
    %901 = vmatmul.mubr.f32.gmra.mrb[0].mxu0 %v816
    %v902 = vpop.f32.mrb[0].mxu0
    %v903 = vadd.f32 0.0, %v902
    %v904 = vpop.f32.mrb[0].mxu0
    %905 = vmatprep.mubr.f32.mxu0 0.0
    %906 = vmatmul.mubr.f32.gmra.mrb[0].mxu0 %v819
    %v907 = vpop.f32.mrb[0].mxu0
    %v908 = vadd.f32 0.0, %v907
    %v909 = vpop.f32.mrb[0].mxu0
    %910 = vmatprep.mubr.f32.mxu0 0.0
    %911 = vmatmul.mubr.f32.gmra.mrb[0].mxu0 %v822
    %v912 = vpop.f32.mrb[0].mxu0
    %v913 = vadd.f32 0.0, %v912
    %v914 = vpop.f32.mrb[0].mxu0
    %915 = vmatprep.mubr.f32.mxu0 0.0
    %916 = vmatmul.mubr.f32.gmra.mrb[0].mxu0 %v825
    %v917 = vpop.f32.mrb[0].mxu0
    %v918 = vadd.f32 0.0, %v917
    %v919 = vpop.f32.mrb[0].mxu0
    %920 = vmatprep.mubr.f32.mxu0 0.0
    %921 = vmatmul.mubr.f32.gmra.mrb[0].mxu0 %v828
    %v922 = vpop.f32.mrb[0].mxu0
    %v923 = vadd.f32 0.0, %v922
    %v924 = vpop.f32.mrb[0].mxu0
    %925 = vmatprep.mubr.f32.mxu0 0.0
    %926 = vmatmul.mubr.f32.gmra.mrb[0].mxu0 %v831
    %v927 = vpop.f32.mrb[0].mxu0
    %v928 = vadd.f32 0.0, %v927
    %v929 = vpop.f32.mrb[0].mxu0
    %930 = vmatprep.mubr.f32.mxu0 0.0
    %931 = vmatmul.mubr.f32.gmra.mrb[0].mxu0 %v834
    %v932 = vpop.f32.mrb[0].mxu0
    %v933 = vadd.f32 0.0, %v932
    %v934 = vpop.f32.mrb[0].mxu0
    %935 = vdwg.mxu0
    %v936 = vmul.f32 %v903, %v903
    %v937 = vmul.f32 %v908, %v908
    %v938 = vmul.f32 %v913, %v913
    %v939 = vmul.f32 %v918, %v918
    %v940 = vmul.f32 %v923, %v923
    %v941 = vmul.f32 %v928, %v928
    %v942 = vmul.f32 %v933, %v933
    %vm943 = vcmask 130048
    %v944 = vsel %vm943, %v936, 0.0
    %945 = vadd.xlane.f32.xlu0 %v944
    %v946 = vpop.xlane.xlu0 %945
    %v947 = vsel %vm943, %v937, 0.0
    %948 = vadd.xlane.f32.xlu0 %v947
    %v949 = vpop.xlane.xlu0 %948
    %v950 = vsel %vm943, %v938, 0.0
    %951 = vadd.xlane.f32.xlu0 %v950
    %v952 = vpop.xlane.xlu0 %951
    %v953 = vsel %vm943, %v939, 0.0
    %954 = vadd.xlane.f32.xlu0 %v953
    %v955 = vpop.xlane.xlu0 %954
    %v956 = vsel %vm943, %v940, 0.0
    %957 = vadd.xlane.f32.xlu0 %v956
    %v958 = vpop.xlane.xlu0 %957
    %v959 = vsel %vm943, %v941, 0.0
    %960 = vadd.xlane.f32.xlu0 %v959
    %v961 = vpop.xlane.xlu0 %960
    %v962 = vsel %vm943, %v942, 0.0
    %963 = vadd.xlane.f32.xlu0 %v962
    %v964 = vpop.xlane.xlu0 %963
    %v965 = vmax.f32 %v946, 1e-24
    %v966 = vmax.f32 %v949, 1e-24
    %v967 = vmax.f32 %v952, 1e-24
    %v968 = vmax.f32 %v955, 1e-24
    %v969 = vmax.f32 %v958, 1e-24
    %v970 = vmax.f32 %v961, 1e-24
    %v971 = vmax.f32 %v964, 1e-24
    %v972 = vrsqrt.pop %v965
    %v973 = vrsqrt.pop %v966
    %v974 = vrsqrt.pop %v967
    %v975 = vrsqrt.pop %v968
    %v976 = vrsqrt.pop %v969
    %v977 = vrsqrt.pop %v970
    %v978 = vrsqrt.pop %v971
    %v979 = vmul.f32 %v903, %v972
    %v980 = vmul.f32 %v908, %v973
    %v981 = vmul.f32 %v913, %v974
    %v982 = vmul.f32 %v918, %v975
    %v983 = vmul.f32 %v923, %v976
    %v984 = vmul.f32 %v928, %v977
    %v985 = vmul.f32 %v933, %v978
    %v987 = vsel %vm224, %v312, 0
    %989 = vmatprep.subr.bf16.mxu0 0
    %990 = vmatpush1.bf16.msra.mxu0 %v987
    %991 = vmatprep.subr.bf16.mxu0 0
    %992 = vmatpush1.bf16.msra.mxu0 0
    %993 = vmatprep.subr.bf16.mxu0 0
    %994 = vmatpush1.bf16.msra.mxu0 0
    %995 = vmatprep.subr.bf16.mxu0 0
    %996 = vmatpush1.bf16.msra.mxu0 0
    %997 = vmatprep.subr.bf16.mxu0 0
    %998 = vmatpush1.bf16.msra.mxu0 0
    %999 = vmatprep.subr.bf16.mxu0 0
    %1000 = vmatpush1.bf16.msra.mxu0 0
    %1001 = vmatprep.subr.bf16.mxu0 0
    %1002 = vmatpush1.bf16.msra.mxu0 0
    %1003 = vmatprep.subr.bf16.mxu0 0
    %1004 = vmatpush1.bf16.msra.mxu0 0
    %1005 = vmatprep.subr.bf16.mxu0 0
    %1006 = vmatpush1.bf16.msra.mxu0 0
    %1007 = vmatprep.subr.bf16.mxu0 0
    %1008 = vmatpush1.bf16.msra.mxu0 0
    %1009 = vmatprep.subr.bf16.mxu0 0
    %1010 = vmatpush1.bf16.msra.mxu0 0
    %1011 = vmatprep.subr.bf16.mxu0 0
    %1012 = vmatpush1.bf16.msra.mxu0 0
    %1013 = vmatprep.subr.bf16.mxu0 0
    %1014 = vmatpush1.bf16.msra.mxu0 0
    %1015 = vmatprep.subr.bf16.mxu0 0
    %1016 = vmatpush1.bf16.msra.mxu0 0
    %1017 = vmatprep.subr.bf16.mxu0 0
    %1018 = vmatpush1.bf16.msra.mxu0 0
    %1019 = vmatprep.subr.bf16.mxu0 0
    %1020 = vmatpush1.bf16.msra.mxu0 0
    %1021 = vmatprep.mubr.bf16.mxu0 0
    %1022 = vmatmul.mubr.bf16.gmra.mrb[0].mxu0 %v430
    %v1023 = vpop.f32.mrb[0].mxu0
    %v1024 = vadd.f32 %v382, %v1023
    %v1025 = vpop.f32.mrb[0].mxu0
    %v1026 = vpop.f32.mrb[0].mxu0
    %v1027 = vadd.f32 %v385, %v1026
    %v1028 = vpop.f32.mrb[0].mxu0
    %1029 = vmatprep.mubr.bf16.mxu0 0
    %1030 = vmatmul.mubr.bf16.gmra.mrb[0].mxu0 %v433
    %v1031 = vpop.f32.mrb[0].mxu0
    %v1032 = vadd.f32 %v390, %v1031
    %v1033 = vpop.f32.mrb[0].mxu0
    %v1034 = vpop.f32.mrb[0].mxu0
    %v1035 = vadd.f32 %v393, %v1034
    %v1036 = vpop.f32.mrb[0].mxu0
    %1037 = vmatprep.mubr.bf16.mxu0 0
    %1038 = vmatmul.mubr.bf16.gmra.mrb[0].mxu0 %v436
    %v1039 = vpop.f32.mrb[0].mxu0
    %v1040 = vadd.f32 %v398, %v1039
    %v1041 = vpop.f32.mrb[0].mxu0
    %v1042 = vpop.f32.mrb[0].mxu0
    %v1043 = vadd.f32 %v401, %v1042
    %v1044 = vpop.f32.mrb[0].mxu0
    %1045 = vmatprep.mubr.bf16.mxu0 0
    %1046 = vmatmul.mubr.bf16.gmra.mrb[0].mxu0 %v439
    %v1047 = vpop.f32.mrb[0].mxu0
    %v1048 = vadd.f32 %v406, %v1047
    %v1049 = vpop.f32.mrb[0].mxu0
    %v1050 = vpop.f32.mrb[0].mxu0
    %v1051 = vpop.f32.mrb[0].mxu0
    %1052 = vdwg.mxu0
    %v1053 = vpack.c.bf16 %v980, %v979
    %v1054 = vpack.c.bf16 %v982, %v981
    %v1055 = vpack.c.bf16 %v984, %v983
    %v1056 = vpack.c.bf16 %v985, %v985
    %v1057 = vld [vmem:[%s12] sm:$0xf]
    %v1058 = vld [vmem:[%s12 + $0x4] sm:$0xf]
    %v1061 = vunpack.c.l.b16 %v1057
    %v1062 = vunpack.c.l.b16 %v1058
    %v1063 = vpack.c.b16 %v1062, %v1061
    %v1066 = vsel %vm943, %v1053, 0
    %v1069 = vsel %vm943, %v1054, 0
    %v1072 = vsel %vm943, %v1055, 0
    %v1075 = vsel %vm943, %v1056, 0
    %1077 = vmatprep.subr.bf16.mxu0 0
    %1078 = vmatpush1.bf16.msra.mxu0 %v1063
    %1079 = vmatprep.subr.bf16.mxu0 0
    %1080 = vmatpush1.bf16.msra.mxu0 0
    %1081 = vmatprep.subr.bf16.mxu0 0
    %1082 = vmatpush1.bf16.msra.mxu0 0
    %1083 = vmatprep.subr.bf16.mxu0 0
    %1084 = vmatpush1.bf16.msra.mxu0 0
    %1085 = vmatprep.subr.bf16.mxu0 0
    %1086 = vmatpush1.bf16.msra.mxu0 0
    %1087 = vmatprep.subr.bf16.mxu0 0
    %1088 = vmatpush1.bf16.msra.mxu0 0
    %1089 = vmatprep.subr.bf16.mxu0 0
    %1090 = vmatpush1.bf16.msra.mxu0 0
    %1091 = vmatprep.subr.bf16.mxu0 0
    %1092 = vmatpush1.bf16.msra.mxu0 0
    %1093 = vmatprep.subr.bf16.mxu0 0
    %1094 = vmatpush1.bf16.msra.mxu0 0
    %1095 = vmatprep.subr.bf16.mxu0 0
    %1096 = vmatpush1.bf16.msra.mxu0 0
    %1097 = vmatprep.subr.bf16.mxu0 0
    %1098 = vmatpush1.bf16.msra.mxu0 0
    %1099 = vmatprep.subr.bf16.mxu0 0
    %1100 = vmatpush1.bf16.msra.mxu0 0
    %1101 = vmatprep.subr.bf16.mxu0 0
    %1102 = vmatpush1.bf16.msra.mxu0 0
    %1103 = vmatprep.subr.bf16.mxu0 0
    %1104 = vmatpush1.bf16.msra.mxu0 0
    %1105 = vmatprep.subr.bf16.mxu0 0
    %1106 = vmatpush1.bf16.msra.mxu0 0
    %1107 = vmatprep.subr.bf16.mxu0 0
    %1108 = vmatpush1.bf16.msra.mxu0 0
    %1109 = vmatprep.mubr.bf16.mxu0 0
    %1110 = vmatmul.mubr.bf16.gmra.mrb[0].mxu0 %v1066
    %v1111 = vpop.f32.mrb[0].mxu0
    %v1112 = vadd.f32 0.0, %v1111
    %v1113 = vpop.f32.mrb[0].mxu0
    %v1114 = vpop.f32.mrb[0].mxu0
    %v1115 = vadd.f32 0.0, %v1114
    %v1116 = vpop.f32.mrb[0].mxu0
    %1117 = vmatprep.mubr.bf16.mxu0 0
    %1118 = vmatmul.mubr.bf16.gmra.mrb[0].mxu0 %v1069
    %v1119 = vpop.f32.mrb[0].mxu0
    %v1120 = vadd.f32 0.0, %v1119
    %v1121 = vpop.f32.mrb[0].mxu0
    %v1122 = vpop.f32.mrb[0].mxu0
    %v1123 = vadd.f32 0.0, %v1122
    %v1124 = vpop.f32.mrb[0].mxu0
    %1125 = vmatprep.mubr.bf16.mxu0 0
    %1126 = vmatmul.mubr.bf16.gmra.mrb[0].mxu0 %v1072
    %v1127 = vpop.f32.mrb[0].mxu0
    %v1128 = vadd.f32 0.0, %v1127
    %v1129 = vpop.f32.mrb[0].mxu0
    %v1130 = vpop.f32.mrb[0].mxu0
    %v1131 = vadd.f32 0.0, %v1130
    %v1132 = vpop.f32.mrb[0].mxu0
    %1133 = vmatprep.mubr.bf16.mxu0 0
    %1134 = vmatmul.mubr.bf16.gmra.mrb[0].mxu0 %v1075
    %v1135 = vpop.f32.mrb[0].mxu0
    %v1136 = vadd.f32 0.0, %v1135
    %v1137 = vpop.f32.mrb[0].mxu0
    %v1138 = vpop.f32.mrb[0].mxu0
    %v1139 = vpop.f32.mrb[0].mxu0
    %1140 = vdwg.mxu0
    %v1141 = vadd.f32 %v1024, %v1112
    %v1142 = vadd.f32 %v1027, %v1115
    %v1143 = vadd.f32 %v1032, %v1120
    %v1144 = vadd.f32 %v1035, %v1123
    %v1145 = vadd.f32 %v1040, %v1128
    %v1146 = vadd.f32 %v1043, %v1131
    %v1147 = vadd.f32 %v1048, %v1136
    %v1148 = vadd.f32 %v1141, %v186
    %v1149 = vadd.f32 %v1142, %v189
    %v1150 = vadd.f32 %v1143, %v194
    %v1151 = vadd.f32 %v1144, %v197
    %v1152 = vadd.f32 %v1145, %v202
    %v1153 = vadd.f32 %v1146, %v205
    %v1154 = vadd.f32 %v1147, %v210
    %v1155 = vld [vmem:[%s14] sm:$0x1]
    %v1157 = vlaneseq
    %v1158 = vshrl.u32 %v1157, 7
    %v1159 = vsub.s32 0, %v1158
    %v1160 = vrot.slane %v1155, %v1159
    %v1162 = vadd.f32 %v1148, %v1160
    %v1163 = vadd.f32 %v1149, %v1160
    %v1164 = vadd.f32 %v1150, %v1160
    %v1165 = vadd.f32 %v1151, %v1160
    %v1166 = vadd.f32 %v1152, %v1160
    %v1167 = vadd.f32 %v1153, %v1160
    %v1168 = vadd.f32 %v1154, %v1160
    %v1169 = vmax.f32 %v1162, 0.0
    %v1170 = vmax.f32 %v1163, 0.0
    %v1171 = vmax.f32 %v1164, 0.0
    %v1172 = vmax.f32 %v1165, 0.0
    %v1173 = vmax.f32 %v1166, 0.0
    %v1174 = vmax.f32 %v1167, 0.0
    %v1175 = vmax.f32 %v1168, 0.0
    %v1176 = vpack.c.bf16 %v1170, %v1169
    %v1177 = vpack.c.bf16 %v1172, %v1171
    %v1178 = vpack.c.bf16 %v1174, %v1173
    %v1179 = vpack.c.bf16 %v1175, %v1175
    %v1180 = vld [vmem:[%s15] sm:$0xf]
    %v1181 = vld [vmem:[%s15 + $0x4] sm:$0xf]
    %v1182 = vld [vmem:[%s15 + $0x8] sm:$0xf]
    %v1183 = vld [vmem:[%s15 + $0xc] sm:$0xf]
    %v1184 = vld [vmem:[%s16] sm:$0x1]
    %v1186 = vlaneseq
    %v1187 = vshrl.u32 %v1186, 7
    %v1188 = vsub.s32 0, %v1187
    %v1189 = vrot.slane %v1184, %v1188
    %v1195 = vunpack.c.l.b16 %v1180
    %v1196 = vunpack.c.l.b16 %v1181
    %v1197 = vunpack.c.l.b16 %v1182
    %v1198 = vunpack.c.l.b16 %v1183
    %v1199 = vpack.c.b16 %v1196, %v1195
    %v1200 = vpack.c.b16 %v1198, %v1197
    %vm1203 = vcmask 261120
    %v1205 = vsel %vm1203, %v1176, 0
    %v1208 = vsel %vm1203, %v1177, 0
    %v1211 = vsel %vm1203, %v1178, 0
    %v1214 = vsel %vm1203, %v1179, 0
    %1216 = vmatprep.subr.bf16.mxu0 0
    %1217 = vmatpush1.bf16.msra.mxu0 %v1199
    %1218 = vmatprep.subr.bf16.mxu0 0
    %1219 = vmatpush1.bf16.msra.mxu0 %v1200
    %1220 = vmatprep.subr.bf16.mxu0 0
    %1221 = vmatpush1.bf16.msra.mxu0 0
    %1222 = vmatprep.subr.bf16.mxu0 0
    %1223 = vmatpush1.bf16.msra.mxu0 0
    %1224 = vmatprep.subr.bf16.mxu0 0
    %1225 = vmatpush1.bf16.msra.mxu0 0
    %1226 = vmatprep.subr.bf16.mxu0 0
    %1227 = vmatpush1.bf16.msra.mxu0 0
    %1228 = vmatprep.subr.bf16.mxu0 0
    %1229 = vmatpush1.bf16.msra.mxu0 0
    %1230 = vmatprep.subr.bf16.mxu0 0
    %1231 = vmatpush1.bf16.msra.mxu0 0
    %1232 = vmatprep.subr.bf16.mxu0 0
    %1233 = vmatpush1.bf16.msra.mxu0 0
    %1234 = vmatprep.subr.bf16.mxu0 0
    %1235 = vmatpush1.bf16.msra.mxu0 0
    %1236 = vmatprep.subr.bf16.mxu0 0
    %1237 = vmatpush1.bf16.msra.mxu0 0
    %1238 = vmatprep.subr.bf16.mxu0 0
    %1239 = vmatpush1.bf16.msra.mxu0 0
    %1240 = vmatprep.subr.bf16.mxu0 0
    %1241 = vmatpush1.bf16.msra.mxu0 0
    %1242 = vmatprep.subr.bf16.mxu0 0
    %1243 = vmatpush1.bf16.msra.mxu0 0
    %1244 = vmatprep.subr.bf16.mxu0 0
    %1245 = vmatpush1.bf16.msra.mxu0 0
    %1246 = vmatprep.subr.bf16.mxu0 0
    %1247 = vmatpush1.bf16.msra.mxu0 0
    %1248 = vmatprep.mubr.bf16.mxu0 0
    %1249 = vmatmul.mubr.bf16.gmra.mrb[0].mxu0 %v1205
    %v1250 = vpop.f32.mrb[0].mxu0
    %v1251 = vadd.f32 %v1189, %v1250
    %v1252 = vpop.f32.mrb[0].mxu0
    %v1253 = vpop.f32.mrb[0].mxu0
    %v1254 = vadd.f32 %v1189, %v1253
    %v1255 = vpop.f32.mrb[0].mxu0
    %1256 = vmatprep.mubr.bf16.mxu0 0
    %1257 = vmatmul.mubr.bf16.gmra.mrb[0].mxu0 %v1208
    %v1258 = vpop.f32.mrb[0].mxu0
    %v1259 = vadd.f32 %v1189, %v1258
    %v1260 = vpop.f32.mrb[0].mxu0
    %v1261 = vpop.f32.mrb[0].mxu0
    %v1262 = vadd.f32 %v1189, %v1261
    %v1263 = vpop.f32.mrb[0].mxu0
    %1264 = vmatprep.mubr.bf16.mxu0 0
    %1265 = vmatmul.mubr.bf16.gmra.mrb[0].mxu0 %v1211
    %v1266 = vpop.f32.mrb[0].mxu0
    %v1267 = vadd.f32 %v1189, %v1266
    %v1268 = vpop.f32.mrb[0].mxu0
    %v1269 = vpop.f32.mrb[0].mxu0
    %v1270 = vadd.f32 %v1189, %v1269
    %v1271 = vpop.f32.mrb[0].mxu0
    %1272 = vmatprep.mubr.bf16.mxu0 0
    %1273 = vmatmul.mubr.bf16.gmra.mrb[0].mxu0 %v1214
    %v1274 = vpop.f32.mrb[0].mxu0
    %v1275 = vadd.f32 %v1189, %v1274
    %v1276 = vpop.f32.mrb[0].mxu0
    %v1277 = vpop.f32.mrb[0].mxu0
    %v1278 = vpop.f32.mrb[0].mxu0
    %1279 = vdwg.mxu0
    %v1280 = vmax.f32 %v1251, 0.0
    %v1281 = vmax.f32 %v1254, 0.0
    %v1282 = vmax.f32 %v1259, 0.0
    %v1283 = vmax.f32 %v1262, 0.0
    %v1284 = vmax.f32 %v1267, 0.0
    %v1285 = vmax.f32 %v1270, 0.0
    %v1286 = vmax.f32 %v1275, 0.0
    %v1287 = vpack.c.bf16 %v1281, %v1280
    %v1288 = vpack.c.bf16 %v1283, %v1282
    %v1289 = vpack.c.bf16 %v1285, %v1284
    %v1290 = vpack.c.bf16 %v1286, %v1286
    %v1291 = vld [vmem:[%s17] sm:$0xf]
    %v1292 = vld [vmem:[%s17 + $0x4] sm:$0xf]
    %v1293 = vld [vmem:[%s17 + $0x8] sm:$0xf]
    %v1294 = vld [vmem:[%s17 + $0xc] sm:$0xf]
    %v1295 = vld [vmem:[%s18] sm:$0x1]
    %v1297 = vlaneseq
    %v1298 = vshrl.u32 %v1297, 7
    %v1299 = vsub.s32 0, %v1298
    %v1300 = vrot.slane %v1295, %v1299
    %v1306 = vunpack.c.l.b16 %v1291
    %v1307 = vunpack.c.l.b16 %v1292
    %v1308 = vunpack.c.l.b16 %v1293
    %v1309 = vunpack.c.l.b16 %v1294
    %v1310 = vpack.c.b16 %v1307, %v1306
    %v1311 = vpack.c.b16 %v1309, %v1308
    %v1315 = vsel %vm1203, %v1287, 0
    %v1318 = vsel %vm1203, %v1288, 0
    %v1321 = vsel %vm1203, %v1289, 0
    %v1324 = vsel %vm1203, %v1290, 0
    %1326 = vmatprep.subr.bf16.mxu0 0
    %1327 = vmatpush1.bf16.msra.mxu0 %v1310
    %1328 = vmatprep.subr.bf16.mxu0 0
    %1329 = vmatpush1.bf16.msra.mxu0 %v1311
    %1330 = vmatprep.subr.bf16.mxu0 0
    %1331 = vmatpush1.bf16.msra.mxu0 0
    %1332 = vmatprep.subr.bf16.mxu0 0
    %1333 = vmatpush1.bf16.msra.mxu0 0
    %1334 = vmatprep.subr.bf16.mxu0 0
    %1335 = vmatpush1.bf16.msra.mxu0 0
    %1336 = vmatprep.subr.bf16.mxu0 0
    %1337 = vmatpush1.bf16.msra.mxu0 0
    %1338 = vmatprep.subr.bf16.mxu0 0
    %1339 = vmatpush1.bf16.msra.mxu0 0
    %1340 = vmatprep.subr.bf16.mxu0 0
    %1341 = vmatpush1.bf16.msra.mxu0 0
    %1342 = vmatprep.subr.bf16.mxu0 0
    %1343 = vmatpush1.bf16.msra.mxu0 0
    %1344 = vmatprep.subr.bf16.mxu0 0
    %1345 = vmatpush1.bf16.msra.mxu0 0
    %1346 = vmatprep.subr.bf16.mxu0 0
    %1347 = vmatpush1.bf16.msra.mxu0 0
    %1348 = vmatprep.subr.bf16.mxu0 0
    %1349 = vmatpush1.bf16.msra.mxu0 0
    %1350 = vmatprep.subr.bf16.mxu0 0
    %1351 = vmatpush1.bf16.msra.mxu0 0
    %1352 = vmatprep.subr.bf16.mxu0 0
    %1353 = vmatpush1.bf16.msra.mxu0 0
    %1354 = vmatprep.subr.bf16.mxu0 0
    %1355 = vmatpush1.bf16.msra.mxu0 0
    %1356 = vmatprep.subr.bf16.mxu0 0
    %1357 = vmatpush1.bf16.msra.mxu0 0
    %1358 = vmatprep.mubr.bf16.mxu0 0
    %1359 = vmatmul.mubr.bf16.gmra.mrb[0].mxu0 %v1315
    %v1360 = vpop.f32.mrb[0].mxu0
    %v1361 = vadd.f32 %v1300, %v1360
    %v1362 = vpop.f32.mrb[0].mxu0
    %v1363 = vpop.f32.mrb[0].mxu0
    %v1364 = vadd.f32 %v1300, %v1363
    %v1365 = vpop.f32.mrb[0].mxu0
    %1366 = vmatprep.mubr.bf16.mxu0 0
    %1367 = vmatmul.mubr.bf16.gmra.mrb[0].mxu0 %v1318
    %v1368 = vpop.f32.mrb[0].mxu0
    %v1369 = vadd.f32 %v1300, %v1368
    %v1370 = vpop.f32.mrb[0].mxu0
    %v1371 = vpop.f32.mrb[0].mxu0
    %v1372 = vadd.f32 %v1300, %v1371
    %v1373 = vpop.f32.mrb[0].mxu0
    %1374 = vmatprep.mubr.bf16.mxu0 0
    %1375 = vmatmul.mubr.bf16.gmra.mrb[0].mxu0 %v1321
    %v1376 = vpop.f32.mrb[0].mxu0
    %v1377 = vadd.f32 %v1300, %v1376
    %v1378 = vpop.f32.mrb[0].mxu0
    %v1379 = vpop.f32.mrb[0].mxu0
    %v1380 = vadd.f32 %v1300, %v1379
    %v1381 = vpop.f32.mrb[0].mxu0
    %1382 = vmatprep.mubr.bf16.mxu0 0
    %1383 = vmatmul.mubr.bf16.gmra.mrb[0].mxu0 %v1324
    %v1384 = vpop.f32.mrb[0].mxu0
    %v1385 = vadd.f32 %v1300, %v1384
    %v1386 = vpop.f32.mrb[0].mxu0
    %v1387 = vpop.f32.mrb[0].mxu0
    %v1388 = vpop.f32.mrb[0].mxu0
    %1389 = vdwg.mxu0
    %v1390 = vmax.f32 %v1361, 0.0
    %v1391 = vmax.f32 %v1364, 0.0
    %v1392 = vmax.f32 %v1369, 0.0
    %v1393 = vmax.f32 %v1372, 0.0
    %v1394 = vmax.f32 %v1377, 0.0
    %v1395 = vmax.f32 %v1380, 0.0
    %v1396 = vmax.f32 %v1385, 0.0
    %v1397 = vpack.c.bf16 %v1391, %v1390
    %v1398 = vpack.c.bf16 %v1393, %v1392
    %v1399 = vpack.c.bf16 %v1395, %v1394
    %v1400 = vpack.c.bf16 %v1396, %v1396
    %v1401 = vld [vmem:[%s19] sm:$0xf]
    %v1402 = vld [vmem:[%s19 + $0x4] sm:$0xf]
    %v1403 = vld [vmem:[%s19 + $0x8] sm:$0xf]
    %v1404 = vld [vmem:[%s19 + $0xc] sm:$0xf]
    %v1409 = vunpack.c.l.b16 %v1401
    %v1410 = vunpack.c.l.b16 %v1402
    %v1411 = vunpack.c.l.b16 %v1403
    %v1412 = vunpack.c.l.b16 %v1404
    %v1413 = vpack.c.b16 %v1410, %v1409
    %v1414 = vpack.c.b16 %v1412, %v1411
    %v1418 = vsel %vm1203, %v1397, 0
    %v1421 = vsel %vm1203, %v1398, 0
    %v1424 = vsel %vm1203, %v1399, 0
    %v1427 = vsel %vm1203, %v1400, 0
    %1429 = vmatprep.subr.bf16.mxu0 0
    %1430 = vmatpush1.bf16.msra.mxu0 %v1413
    %1431 = vmatprep.subr.bf16.mxu0 0
    %1432 = vmatpush1.bf16.msra.mxu0 %v1414
    %1433 = vmatprep.subr.bf16.mxu0 0
    %1434 = vmatpush1.bf16.msra.mxu0 0
    %1435 = vmatprep.subr.bf16.mxu0 0
    %1436 = vmatpush1.bf16.msra.mxu0 0
    %1437 = vmatprep.subr.bf16.mxu0 0
    %1438 = vmatpush1.bf16.msra.mxu0 0
    %1439 = vmatprep.subr.bf16.mxu0 0
    %1440 = vmatpush1.bf16.msra.mxu0 0
    %1441 = vmatprep.subr.bf16.mxu0 0
    %1442 = vmatpush1.bf16.msra.mxu0 0
    %1443 = vmatprep.subr.bf16.mxu0 0
    %1444 = vmatpush1.bf16.msra.mxu0 0
    %1445 = vmatprep.subr.bf16.mxu0 0
    %1446 = vmatpush1.bf16.msra.mxu0 0
    %1447 = vmatprep.subr.bf16.mxu0 0
    %1448 = vmatpush1.bf16.msra.mxu0 0
    %1449 = vmatprep.subr.bf16.mxu0 0
    %1450 = vmatpush1.bf16.msra.mxu0 0
    %1451 = vmatprep.subr.bf16.mxu0 0
    %1452 = vmatpush1.bf16.msra.mxu0 0
    %1453 = vmatprep.subr.bf16.mxu0 0
    %1454 = vmatpush1.bf16.msra.mxu0 0
    %1455 = vmatprep.subr.bf16.mxu0 0
    %1456 = vmatpush1.bf16.msra.mxu0 0
    %1457 = vmatprep.subr.bf16.mxu0 0
    %1458 = vmatpush1.bf16.msra.mxu0 0
    %1459 = vmatprep.subr.bf16.mxu0 0
    %1460 = vmatpush1.bf16.msra.mxu0 0
    %1461 = vmatprep.mubr.bf16.mxu0 0
    %1462 = vmatmul.mubr.bf16.gmra.mrb[0].mxu0 %v1418
    %v1463 = vpop.f32.mrb[0].mxu0
    %v1464 = vadd.f32 0.0, %v1463
    %v1465 = vpop.f32.mrb[0].mxu0
    %v1466 = vpop.f32.mrb[0].mxu0
    %v1467 = vadd.f32 0.0, %v1466
    %v1468 = vpop.f32.mrb[0].mxu0
    %1469 = vmatprep.mubr.bf16.mxu0 0
    %1470 = vmatmul.mubr.bf16.gmra.mrb[0].mxu0 %v1421
    %v1471 = vpop.f32.mrb[0].mxu0
    %v1472 = vadd.f32 0.0, %v1471
    %v1473 = vpop.f32.mrb[0].mxu0
    %v1474 = vpop.f32.mrb[0].mxu0
    %v1475 = vadd.f32 0.0, %v1474
    %v1476 = vpop.f32.mrb[0].mxu0
    %1477 = vmatprep.mubr.bf16.mxu0 0
    %1478 = vmatmul.mubr.bf16.gmra.mrb[0].mxu0 %v1424
    %v1479 = vpop.f32.mrb[0].mxu0
    %v1480 = vadd.f32 0.0, %v1479
    %v1481 = vpop.f32.mrb[0].mxu0
    %v1482 = vpop.f32.mrb[0].mxu0
    %v1483 = vadd.f32 0.0, %v1482
    %v1484 = vpop.f32.mrb[0].mxu0
    %1485 = vmatprep.mubr.bf16.mxu0 0
    %1486 = vmatmul.mubr.bf16.gmra.mrb[0].mxu0 %v1427
    %v1487 = vpop.f32.mrb[0].mxu0
    %v1488 = vadd.f32 0.0, %v1487
    %v1489 = vpop.f32.mrb[0].mxu0
    %v1490 = vpop.f32.mrb[0].mxu0
    %v1491 = vpop.f32.mrb[0].mxu0
    %1492 = vdwg.mxu0
    %v1494 = vsel %vm134, %v1464, 0
    %v1497 = vsel %vm134, %v1467, 0
    %v1500 = vsel %vm134, %v1472, 0
    %v1503 = vsel %vm134, %v1475, 0
    %v1506 = vsel %vm134, %v1480, 0
    %v1509 = vsel %vm134, %v1483, 0
    %v1512 = vsel %vm134, %v1488, 0
    %v1515 = vsel %vm224, %v107, 0
    %1517 = vmatprep.subr.mxu0 0.0
    %1518 = vmatpush1.msra.mxu0 %v1515
    %1519 = vmatprep.subr.mxu0 0.0
    %1520 = vmatpush1.msra.mxu0 0.0
    %1521 = vmatprep.subr.mxu0 0.0
    %1522 = vmatpush1.msra.mxu0 0.0
    %1523 = vmatprep.subr.mxu0 0.0
    %1524 = vmatpush1.msra.mxu0 0.0
    %1525 = vmatprep.subr.mxu0 0.0
    %1526 = vmatpush1.msra.mxu0 0.0
    %1527 = vmatprep.subr.mxu0 0.0
    %1528 = vmatpush1.msra.mxu0 0.0
    %1529 = vmatprep.subr.mxu0 0.0
    %1530 = vmatpush1.msra.mxu0 0.0
    %1531 = vmatprep.subr.mxu0 0.0
    %1532 = vmatpush1.msra.mxu0 0.0
    %1533 = vmatprep.subr.mxu0 0.0
    %1534 = vmatpush1.msra.mxu0 0.0
    %1535 = vmatprep.subr.mxu0 0.0
    %1536 = vmatpush1.msra.mxu0 0.0
    %1537 = vmatprep.subr.mxu0 0.0
    %1538 = vmatpush1.msra.mxu0 0.0
    %1539 = vmatprep.subr.mxu0 0.0
    %1540 = vmatpush1.msra.mxu0 0.0
    %1541 = vmatprep.subr.mxu0 0.0
    %1542 = vmatpush1.msra.mxu0 0.0
    %1543 = vmatprep.subr.mxu0 0.0
    %1544 = vmatpush1.msra.mxu0 0.0
    %1545 = vmatprep.subr.mxu0 0.0
    %1546 = vmatpush1.msra.mxu0 0.0
    %1547 = vmatprep.subr.mxu0 0.0
    %1548 = vmatpush1.msra.mxu0 0.0
    %1549 = vmatprep.subr.mxu0 0.0
    %1550 = vmatpush1.msra.mxu0 0.0
    %1551 = vmatprep.subr.mxu0 0.0
    %1552 = vmatpush1.msra.mxu0 0.0
    %1553 = vmatprep.subr.mxu0 0.0
    %1554 = vmatpush1.msra.mxu0 0.0
    %1555 = vmatprep.subr.mxu0 0.0
    %1556 = vmatpush1.msra.mxu0 0.0
    %1557 = vmatprep.subr.mxu0 0.0
    %1558 = vmatpush1.msra.mxu0 0.0
    %1559 = vmatprep.subr.mxu0 0.0
    %1560 = vmatpush1.msra.mxu0 0.0
    %1561 = vmatprep.subr.mxu0 0.0
    %1562 = vmatpush1.msra.mxu0 0.0
    %1563 = vmatprep.subr.mxu0 0.0
    %1564 = vmatpush1.msra.mxu0 0.0
    %1565 = vmatprep.subr.mxu0 0.0
    %1566 = vmatpush1.msra.mxu0 0.0
    %1567 = vmatprep.subr.mxu0 0.0
    %1568 = vmatpush1.msra.mxu0 0.0
    %1569 = vmatprep.subr.mxu0 0.0
    %1570 = vmatpush1.msra.mxu0 0.0
    %1571 = vmatprep.subr.mxu0 0.0
    %1572 = vmatpush1.msra.mxu0 0.0
    %1573 = vmatprep.subr.mxu0 0.0
    %1574 = vmatpush1.msra.mxu0 0.0
    %1575 = vmatprep.subr.mxu0 0.0
    %1576 = vmatpush1.msra.mxu0 0.0
    %1577 = vmatprep.subr.mxu0 0.0
    %1578 = vmatpush1.msra.mxu0 0.0
    %1579 = vmatprep.subr.mxu0 0.0
    %1580 = vmatpush1.msra.mxu0 0.0
    %1581 = vmatprep.mubr.f32.mxu0 0.0
    %1582 = vmatmul.mubr.f32.gmra.mrb[0].mxu0 %v1494
    %v1583 = vpop.f32.mrb[0].mxu0
    %v1584 = vadd.f32 0.0, %v1583
    %v1585 = vpop.f32.mrb[0].mxu0
    %1586 = vmatprep.mubr.f32.mxu0 0.0
    %1587 = vmatmul.mubr.f32.gmra.mrb[0].mxu0 %v1497
    %v1588 = vpop.f32.mrb[0].mxu0
    %v1589 = vadd.f32 0.0, %v1588
    %v1590 = vpop.f32.mrb[0].mxu0
    %1591 = vmatprep.mubr.f32.mxu0 0.0
    %1592 = vmatmul.mubr.f32.gmra.mrb[0].mxu0 %v1500
    %v1593 = vpop.f32.mrb[0].mxu0
    %v1594 = vadd.f32 0.0, %v1593
    %v1595 = vpop.f32.mrb[0].mxu0
    %1596 = vmatprep.mubr.f32.mxu0 0.0
    %1597 = vmatmul.mubr.f32.gmra.mrb[0].mxu0 %v1503
    %v1598 = vpop.f32.mrb[0].mxu0
    %v1599 = vadd.f32 0.0, %v1598
    %v1600 = vpop.f32.mrb[0].mxu0
    %1601 = vmatprep.mubr.f32.mxu0 0.0
    %1602 = vmatmul.mubr.f32.gmra.mrb[0].mxu0 %v1506
    %v1603 = vpop.f32.mrb[0].mxu0
    %v1604 = vadd.f32 0.0, %v1603
    %v1605 = vpop.f32.mrb[0].mxu0
    %1606 = vmatprep.mubr.f32.mxu0 0.0
    %1607 = vmatmul.mubr.f32.gmra.mrb[0].mxu0 %v1509
    %v1608 = vpop.f32.mrb[0].mxu0
    %v1609 = vadd.f32 0.0, %v1608
    %v1610 = vpop.f32.mrb[0].mxu0
    %1611 = vmatprep.mubr.f32.mxu0 0.0
    %1612 = vmatmul.mubr.f32.gmra.mrb[0].mxu0 %v1512
    %v1613 = vpop.f32.mrb[0].mxu0
    %v1614 = vadd.f32 0.0, %v1613
    %v1615 = vpop.f32.mrb[0].mxu0
    %1616 = vdwg.mxu0
    %v1617 = vmul.f32 %v572, %v1584
    %v1618 = vmul.f32 %v573, %v1589
    %v1619 = vmul.f32 %v574, %v1594
    %v1620 = vmul.f32 %v575, %v1599
    %v1621 = vmul.f32 %v576, %v1604
    %v1622 = vmul.f32 %v577, %v1609
    %v1623 = vmul.f32 %v578, %v1614
    %v1624 = vmax.f32 %v1617, -100.0
    %v1625 = vmax.f32 %v1618, -100.0
    %v1626 = vmax.f32 %v1619, -100.0
    %v1627 = vmax.f32 %v1620, -100.0
    %v1628 = vmax.f32 %v1621, -100.0
    %v1629 = vmax.f32 %v1622, -100.0
    %v1630 = vmax.f32 %v1623, -100.0
    %v1631 = vmin.f32 %v1624, 100.0
    %v1632 = vmin.f32 %v1625, 100.0
    %v1633 = vmin.f32 %v1626, 100.0
    %v1634 = vmin.f32 %v1627, 100.0
    %v1635 = vmin.f32 %v1628, 100.0
    %v1636 = vmin.f32 %v1629, 100.0
    %v1637 = vmin.f32 %v1630, 100.0
    %v1638 = vpack.c.bf16 %v1632, %v1631
    %v1639 = vpack.c.bf16 %v1634, %v1633
    %v1640 = vpack.c.bf16 %v1636, %v1635
    %v1641 = vpack.c.bf16 %v1637, %v1637
    %1646 = vxpose.xlu0.c.b16.start [1/8] %v425, 128
    %1647 = vxpose.xlu0.c.b16.cont [2/8] %v426, 128
    %1648 = vxpose.xlu0.c.b16.cont [3/8] %v427, 128
    %1649 = vxpose.xlu0.c.b16.cont [4/8] %v428, 128
    %1650 = vxpose.xlu0.c.b16.cont [5/8] 0, 128
    %1651 = vxpose.xlu0.c.b16.cont [6/8] 0, 128
    %1652 = vxpose.xlu0.c.b16.cont [7/8] 0, 128
    %1653 = vxpose.xlu0.c.b16.end [8/8] 0, 128
    %v1654 = vpop.trf.xlu0
    %v1655 = vpop.trf.xlu0
    %v1656 = vpop.trf.xlu0
    %v1657 = vpop.trf.xlu0
    %v1658 = vpop.trf.xlu0
    %v1659 = vpop.trf.xlu0
    %v1660 = vpop.trf.xlu0
    %v1661 = vpop.trf.xlu0
    %vm1662 = vcmask 457728
    %v1664 = vsel %vm1662, %v1654, 0
    %v1667 = vsel %vm224, %v1641, 0
    %1669 = vmatprep.subr.bf16.mxu0 0
    %1670 = vmatpush1.bf16.msra.mxu0 %v1638
    %1671 = vmatprep.subr.bf16.mxu0 0
    %1672 = vmatpush1.bf16.msra.mxu0 %v1639
    %1673 = vmatprep.subr.bf16.mxu0 0
    %1674 = vmatpush1.bf16.msra.mxu0 %v1640
    %1675 = vmatprep.subr.bf16.mxu0 0
    %1676 = vmatpush1.bf16.msra.mxu0 %v1667
    %1677 = vmatprep.subr.bf16.mxu0 0
    %1678 = vmatpush1.bf16.msra.mxu0 0
    %1679 = vmatprep.subr.bf16.mxu0 0
    %1680 = vmatpush1.bf16.msra.mxu0 0
    %1681 = vmatprep.subr.bf16.mxu0 0
    %1682 = vmatpush1.bf16.msra.mxu0 0
    %1683 = vmatprep.subr.bf16.mxu0 0
    %1684 = vmatpush1.bf16.msra.mxu0 0
    %1685 = vmatprep.subr.bf16.mxu0 0
    %1686 = vmatpush1.bf16.msra.mxu0 0
    %1687 = vmatprep.subr.bf16.mxu0 0
    %1688 = vmatpush1.bf16.msra.mxu0 0
    %1689 = vmatprep.subr.bf16.mxu0 0
    %1690 = vmatpush1.bf16.msra.mxu0 0
    %1691 = vmatprep.subr.bf16.mxu0 0
    %1692 = vmatpush1.bf16.msra.mxu0 0
    %1693 = vmatprep.subr.bf16.mxu0 0
    %1694 = vmatpush1.bf16.msra.mxu0 0
    %1695 = vmatprep.subr.bf16.mxu0 0
    %1696 = vmatpush1.bf16.msra.mxu0 0
    %1697 = vmatprep.subr.bf16.mxu0 0
    %1698 = vmatpush1.bf16.msra.mxu0 0
    %1699 = vmatprep.subr.bf16.mxu0 0
    %1700 = vmatpush1.bf16.msra.mxu0 0
    %1701 = vmatprep.mubr.bf16.mxu0 0
    %1702 = vmatmul.mubr.bf16.gmra.mrb[0].mxu0 %v1664
    %v1703 = vpop.f32.mrb[0].mxu0
    %v1704 = vadd.f32 0.0, %v1703
    %v1705 = vpop.f32.mrb[0].mxu0
    %v1706 = vpop.f32.mrb[0].mxu0
    %v1707 = vpop.f32.mrb[0].mxu0
    %1708 = vdwg.mxu0
    %1710 = vset.pattern.permute.xlu0 0
    %1711 = vperm.xlu0 %1710, %v96
    %v1712 = vpop.permute.xlu0 %1711
    %v1714 = vmul.f32 %v1704, %v1712
    %v1715 = vadd.f32 %v216, %v1714
    %v1716 = vsel %vm224, %v1290, 0
    %1718 = vmatprep.subr.bf16.mxu0 0
    %1719 = vmatpush1.bf16.msra.mxu0 %v1287
    %1720 = vmatprep.subr.bf16.mxu0 0
    %1721 = vmatpush1.bf16.msra.mxu0 %v1288
    %1722 = vmatprep.subr.bf16.mxu0 0
    %1723 = vmatpush1.bf16.msra.mxu0 %v1289
    %1724 = vmatprep.subr.bf16.mxu0 0
    %1725 = vmatpush1.bf16.msra.mxu0 %v1716
    %1726 = vmatprep.subr.bf16.mxu0 0
    %1727 = vmatpush1.bf16.msra.mxu0 0
    %1728 = vmatprep.subr.bf16.mxu0 0
    %1729 = vmatpush1.bf16.msra.mxu0 0
    %1730 = vmatprep.subr.bf16.mxu0 0
    %1731 = vmatpush1.bf16.msra.mxu0 0
    %1732 = vmatprep.subr.bf16.mxu0 0
    %1733 = vmatpush1.bf16.msra.mxu0 0
    %1734 = vmatprep.subr.bf16.mxu0 0
    %1735 = vmatpush1.bf16.msra.mxu0 0
    %1736 = vmatprep.subr.bf16.mxu0 0
    %1737 = vmatpush1.bf16.msra.mxu0 0
    %1738 = vmatprep.subr.bf16.mxu0 0
    %1739 = vmatpush1.bf16.msra.mxu0 0
    %1740 = vmatprep.subr.bf16.mxu0 0
    %1741 = vmatpush1.bf16.msra.mxu0 0
    %1742 = vmatprep.subr.bf16.mxu0 0
    %1743 = vmatpush1.bf16.msra.mxu0 0
    %1744 = vmatprep.subr.bf16.mxu0 0
    %1745 = vmatpush1.bf16.msra.mxu0 0
    %1746 = vmatprep.subr.bf16.mxu0 0
    %1747 = vmatpush1.bf16.msra.mxu0 0
    %1748 = vmatprep.subr.bf16.mxu0 0
    %1749 = vmatpush1.bf16.msra.mxu0 0
    %1750 = vmatprep.mubr.bf16.mxu0 0
    %1751 = vmatmul.mubr.bf16.gmra.mrb[0].mxu0 %v1664
    %v1752 = vpop.f32.mrb[0].mxu0
    %v1753 = vadd.f32 0.0, %v1752
    %v1754 = vpop.f32.mrb[0].mxu0
    %v1755 = vpop.f32.mrb[0].mxu0
    %v1756 = vpop.f32.mrb[0].mxu0
    %1757 = vdwg.mxu0
    %v1758 = vld [vmem:[%s20] sm:$0xf]
    %v1759 = vpack.c.bf16 %v1753, %v1753
    %v1760 = vld [vmem:[%s21] sm:$0xf]
    %v1761 = vld [vmem:[%s21 + $0x4] sm:$0xf]
    %v1762 = vld [vmem:[%s21 + $0x8] sm:$0xf]
    %v1763 = vld [vmem:[%s21 + $0xc] sm:$0xf]
    %v1768 = vunpack.c.l.b16 %v1760
    %v1769 = vunpack.c.l.b16 %v1761
    %v1770 = vunpack.c.l.b16 %v1762
    %v1771 = vunpack.c.l.b16 %v1763
    %v1772 = vpack.c.b16 %v1769, %v1768
    %v1773 = vpack.c.b16 %v1771, %v1770
    %v1777 = vsel %vm1203, %v1759, 0
    %1779 = vmatprep.subr.bf16.mxu0 0
    %1780 = vmatpush1.bf16.msra.mxu0 %v1772
    %1781 = vmatprep.subr.bf16.mxu0 0
    %1782 = vmatpush1.bf16.msra.mxu0 %v1773
    %1783 = vmatprep.subr.bf16.mxu0 0
    %1784 = vmatpush1.bf16.msra.mxu0 0
    %1785 = vmatprep.subr.bf16.mxu0 0
    %1786 = vmatpush1.bf16.msra.mxu0 0
    %1787 = vmatprep.subr.bf16.mxu0 0
    %1788 = vmatpush1.bf16.msra.mxu0 0
    %1789 = vmatprep.subr.bf16.mxu0 0
    %1790 = vmatpush1.bf16.msra.mxu0 0
    %1791 = vmatprep.subr.bf16.mxu0 0
    %1792 = vmatpush1.bf16.msra.mxu0 0
    %1793 = vmatprep.subr.bf16.mxu0 0
    %1794 = vmatpush1.bf16.msra.mxu0 0
    %1795 = vmatprep.subr.bf16.mxu0 0
    %1796 = vmatpush1.bf16.msra.mxu0 0
    %1797 = vmatprep.subr.bf16.mxu0 0
    %1798 = vmatpush1.bf16.msra.mxu0 0
    %1799 = vmatprep.subr.bf16.mxu0 0
    %1800 = vmatpush1.bf16.msra.mxu0 0
    %1801 = vmatprep.subr.bf16.mxu0 0
    %1802 = vmatpush1.bf16.msra.mxu0 0
    %1803 = vmatprep.subr.bf16.mxu0 0
    %1804 = vmatpush1.bf16.msra.mxu0 0
    %1805 = vmatprep.subr.bf16.mxu0 0
    %1806 = vmatpush1.bf16.msra.mxu0 0
    %1807 = vmatprep.subr.bf16.mxu0 0
    %1808 = vmatpush1.bf16.msra.mxu0 0
    %1809 = vmatprep.subr.bf16.mxu0 0
    %1810 = vmatpush1.bf16.msra.mxu0 0
    %1811 = vmatprep.mubr.bf16.mxu0 0
    %1812 = vmatmul.mubr.bf16.gmra.mrb[0].mxu0 %v1777
    %v1813 = vpop.f32.mrb[0].mxu0
    %v1814 = vadd.f32 0.0, %v1813
    %v1815 = vpop.f32.mrb[0].mxu0
    %v1816 = vpop.f32.mrb[0].mxu0
    %v1817 = vpop.f32.mrb[0].mxu0
    %1818 = vdwg.mxu0
    %v1820 = vsel %vm224, %v1758, 0
    %1822 = vmatprep.subr.bf16.mxu0 0
    %1823 = vmatpush1.bf16.msra.mxu0 %v1820
    %1824 = vmatprep.subr.bf16.mxu0 0
    %1825 = vmatpush1.bf16.msra.mxu0 0
    %1826 = vmatprep.subr.bf16.mxu0 0
    %1827 = vmatpush1.bf16.msra.mxu0 0
    %1828 = vmatprep.subr.bf16.mxu0 0
    %1829 = vmatpush1.bf16.msra.mxu0 0
    %1830 = vmatprep.subr.bf16.mxu0 0
    %1831 = vmatpush1.bf16.msra.mxu0 0
    %1832 = vmatprep.subr.bf16.mxu0 0
    %1833 = vmatpush1.bf16.msra.mxu0 0
    %1834 = vmatprep.subr.bf16.mxu0 0
    %1835 = vmatpush1.bf16.msra.mxu0 0
    %1836 = vmatprep.subr.bf16.mxu0 0
    %1837 = vmatpush1.bf16.msra.mxu0 0
    %1838 = vmatprep.subr.bf16.mxu0 0
    %1839 = vmatpush1.bf16.msra.mxu0 0
    %1840 = vmatprep.subr.bf16.mxu0 0
    %1841 = vmatpush1.bf16.msra.mxu0 0
    %1842 = vmatprep.subr.bf16.mxu0 0
    %1843 = vmatpush1.bf16.msra.mxu0 0
    %1844 = vmatprep.subr.bf16.mxu0 0
    %1845 = vmatpush1.bf16.msra.mxu0 0
    %1846 = vmatprep.subr.bf16.mxu0 0
    %1847 = vmatpush1.bf16.msra.mxu0 0
    %1848 = vmatprep.subr.bf16.mxu0 0
    %1849 = vmatpush1.bf16.msra.mxu0 0
    %1850 = vmatprep.subr.bf16.mxu0 0
    %1851 = vmatpush1.bf16.msra.mxu0 0
    %1852 = vmatprep.subr.bf16.mxu0 0
    %1853 = vmatpush1.bf16.msra.mxu0 0
    %1854 = vmatprep.mubr.bf16.mxu0 0
    %1855 = vmatmul.mubr.bf16.gmra.mrb[0].mxu0 %v222
    %v1856 = vpop.f32.mrb[0].mxu0
    %v1857 = vadd.f32 %v1814, %v1856
    %v1858 = vpop.f32.mrb[0].mxu0
    %v1859 = vpop.f32.mrb[0].mxu0
    %v1860 = vpop.f32.mrb[0].mxu0
    %1861 = vdwg.mxu0
    %v1862 = vld [vmem:[%s22] sm:$0x1]
    %v1864 = vlaneseq
    %v1865 = vshrl.u32 %v1864, 7
    %v1866 = vsub.s32 0, %v1865
    %v1867 = vrot.slane %v1862, %v1866
    %v1869 = vadd.f32 %v1857, %v1867
    %v1870 = vmax.f32 %v1869, 0.0
    %v1871 = vpack.c.bf16 %v1870, %v1870
    %v1872 = vld [vmem:[%s23] sm:$0xf]
    %v1873 = vld [vmem:[%s23 + $0x4] sm:$0xf]
    %v1874 = vld [vmem:[%s23 + $0x8] sm:$0xf]
    %v1875 = vld [vmem:[%s23 + $0xc] sm:$0xf]
    %v1880 = vunpack.c.l.b16 %v1872
    %v1881 = vunpack.c.l.b16 %v1873
    %v1882 = vunpack.c.l.b16 %v1874
    %v1883 = vunpack.c.l.b16 %v1875
    %v1884 = vpack.c.b16 %v1881, %v1880
    %v1885 = vpack.c.b16 %v1883, %v1882
    %v1889 = vsel %vm1203, %v1871, 0
    %1891 = vmatprep.subr.bf16.mxu0 0
    %1892 = vmatpush1.bf16.msra.mxu0 %v1884
    %1893 = vmatprep.subr.bf16.mxu0 0
    %1894 = vmatpush1.bf16.msra.mxu0 %v1885
    %1895 = vmatprep.subr.bf16.mxu0 0
    %1896 = vmatpush1.bf16.msra.mxu0 0
    %1897 = vmatprep.subr.bf16.mxu0 0
    %1898 = vmatpush1.bf16.msra.mxu0 0
    %1899 = vmatprep.subr.bf16.mxu0 0
    %1900 = vmatpush1.bf16.msra.mxu0 0
    %1901 = vmatprep.subr.bf16.mxu0 0
    %1902 = vmatpush1.bf16.msra.mxu0 0
    %1903 = vmatprep.subr.bf16.mxu0 0
    %1904 = vmatpush1.bf16.msra.mxu0 0
    %1905 = vmatprep.subr.bf16.mxu0 0
    %1906 = vmatpush1.bf16.msra.mxu0 0
    %1907 = vmatprep.subr.bf16.mxu0 0
    %1908 = vmatpush1.bf16.msra.mxu0 0
    %1909 = vmatprep.subr.bf16.mxu0 0
    %1910 = vmatpush1.bf16.msra.mxu0 0
    %1911 = vmatprep.subr.bf16.mxu0 0
    %1912 = vmatpush1.bf16.msra.mxu0 0
    %1913 = vmatprep.subr.bf16.mxu0 0
    %1914 = vmatpush1.bf16.msra.mxu0 0
    %1915 = vmatprep.subr.bf16.mxu0 0
    %1916 = vmatpush1.bf16.msra.mxu0 0
    %1917 = vmatprep.subr.bf16.mxu0 0
    %1918 = vmatpush1.bf16.msra.mxu0 0
    %1919 = vmatprep.subr.bf16.mxu0 0
    %1920 = vmatpush1.bf16.msra.mxu0 0
    %1921 = vmatprep.subr.bf16.mxu0 0
    %1922 = vmatpush1.bf16.msra.mxu0 0
    %1923 = vmatprep.mubr.bf16.mxu0 0
    %1924 = vmatmul.mubr.bf16.gmra.mrb[0].mxu0 %v1889
    %v1925 = vpop.f32.mrb[0].mxu0
    %v1926 = vadd.f32 0.0, %v1925
    %v1927 = vpop.f32.mrb[0].mxu0
    %v1928 = vpop.f32.mrb[0].mxu0
    %v1929 = vpop.f32.mrb[0].mxu0
    %1930 = vdwg.mxu0
    %v1931 = vadd.f32 %v215, %v1926
    %v1932 = vld [vmem:[%s24] sm:$0x1]
    %v1934 = vlaneseq
    %v1935 = vshrl.u32 %v1934, 7
    %v1936 = vsub.s32 0, %v1935
    %v1937 = vrot.slane %v1932, %v1936
    %v1939 = vadd.f32 %v1931, %v1937
    %1941 = vrot.lane.b32.xlu0 %v1715, 8
    %v1942 = vpop.permute.xlu0 %1941
    %v1944 = vsel %vm220, %v1939, %v1942
    %vm1945 = vcmask 162816
    %v1946 = vsel %vm1945, %v1944, 0.0
    %1947 = vst [vmem:[#allocation2] sm:$0xff] %v1946
    %s1948 = scalar_lea.vmem %s0, 8
    %v1949 = vld [vmem:[%s1948] sm:$0xff]
    %s1950 = scalar_lea.vmem %s1, 8
    %v1951 = vld [vmem:[%s1950] sm:$0xff]
    %v1952 = vpack.c.bf16 %v1949, %v1949
    %v1953 = vpack.c.bf16 %v1951, %v1951
    %v1954 = vld [vmem:[%s10] sm:$0xf]
    %v1956 = vsel %vm220, %v1952, 0
    %v1959 = vsel %vm224, %v1954, 0
    %1961 = vmatprep.subr.bf16.mxu0 0
    %1962 = vmatpush1.bf16.msra.mxu0 %v1959
    %1963 = vmatprep.subr.bf16.mxu0 0
    %1964 = vmatpush1.bf16.msra.mxu0 0
    %1965 = vmatprep.subr.bf16.mxu0 0
    %1966 = vmatpush1.bf16.msra.mxu0 0
    %1967 = vmatprep.subr.bf16.mxu0 0
    %1968 = vmatpush1.bf16.msra.mxu0 0
    %1969 = vmatprep.subr.bf16.mxu0 0
    %1970 = vmatpush1.bf16.msra.mxu0 0
    %1971 = vmatprep.subr.bf16.mxu0 0
    %1972 = vmatpush1.bf16.msra.mxu0 0
    %1973 = vmatprep.subr.bf16.mxu0 0
    %1974 = vmatpush1.bf16.msra.mxu0 0
    %1975 = vmatprep.subr.bf16.mxu0 0
    %1976 = vmatpush1.bf16.msra.mxu0 0
    %1977 = vmatprep.subr.bf16.mxu0 0
    %1978 = vmatpush1.bf16.msra.mxu0 0
    %1979 = vmatprep.subr.bf16.mxu0 0
    %1980 = vmatpush1.bf16.msra.mxu0 0
    %1981 = vmatprep.subr.bf16.mxu0 0
    %1982 = vmatpush1.bf16.msra.mxu0 0
    %1983 = vmatprep.subr.bf16.mxu0 0
    %1984 = vmatpush1.bf16.msra.mxu0 0
    %1985 = vmatprep.subr.bf16.mxu0 0
    %1986 = vmatpush1.bf16.msra.mxu0 0
    %1987 = vmatprep.subr.bf16.mxu0 0
    %1988 = vmatpush1.bf16.msra.mxu0 0
    %1989 = vmatprep.subr.bf16.mxu0 0
    %1990 = vmatpush1.bf16.msra.mxu0 0
    %1991 = vmatprep.subr.bf16.mxu0 0
    %1992 = vmatpush1.bf16.msra.mxu0 0
    %1993 = vmatprep.mubr.bf16.mxu0 0
    %1994 = vmatmul.mubr.bf16.gmra.mrb[0].mxu0 %v1956
    %v1995 = vpop.f32.mrb[0].mxu0
    %v1996 = vadd.f32 0.0, %v1995
    %v1997 = vpop.f32.mrb[0].mxu0
    %v1998 = vpop.f32.mrb[0].mxu0
    %v1999 = vpop.f32.mrb[0].mxu0
    %2000 = vdwg.mxu0
    %v2001 = vld [vmem:[%s11] sm:$0xf]
    %v2003 = vsel %vm224, %v2001, 0
    %2005 = vmatprep.subr.bf16.mxu0 0
    %2006 = vmatpush1.bf16.msra.mxu0 %v2003
    %2007 = vmatprep.subr.bf16.mxu0 0
    %2008 = vmatpush1.bf16.msra.mxu0 0
    %2009 = vmatprep.subr.bf16.mxu0 0
    %2010 = vmatpush1.bf16.msra.mxu0 0
    %2011 = vmatprep.subr.bf16.mxu0 0
    %2012 = vmatpush1.bf16.msra.mxu0 0
    %2013 = vmatprep.subr.bf16.mxu0 0
    %2014 = vmatpush1.bf16.msra.mxu0 0
    %2015 = vmatprep.subr.bf16.mxu0 0
    %2016 = vmatpush1.bf16.msra.mxu0 0
    %2017 = vmatprep.subr.bf16.mxu0 0
    %2018 = vmatpush1.bf16.msra.mxu0 0
    %2019 = vmatprep.subr.bf16.mxu0 0
    %2020 = vmatpush1.bf16.msra.mxu0 0
    %2021 = vmatprep.subr.bf16.mxu0 0
    %2022 = vmatpush1.bf16.msra.mxu0 0
    %2023 = vmatprep.subr.bf16.mxu0 0
    %2024 = vmatpush1.bf16.msra.mxu0 0
    %2025 = vmatprep.subr.bf16.mxu0 0
    %2026 = vmatpush1.bf16.msra.mxu0 0
    %2027 = vmatprep.subr.bf16.mxu0 0
    %2028 = vmatpush1.bf16.msra.mxu0 0
    %2029 = vmatprep.subr.bf16.mxu0 0
    %2030 = vmatpush1.bf16.msra.mxu0 0
    %2031 = vmatprep.subr.bf16.mxu0 0
    %2032 = vmatpush1.bf16.msra.mxu0 0
    %2033 = vmatprep.subr.bf16.mxu0 0
    %2034 = vmatpush1.bf16.msra.mxu0 0
    %2035 = vmatprep.subr.bf16.mxu0 0
    %2036 = vmatpush1.bf16.msra.mxu0 0
    %2037 = vmatprep.mubr.bf16.mxu0 0
    %2038 = vmatmul.mubr.bf16.gmra.mrb[0].mxu0 %v1956
    %v2039 = vpop.f32.mrb[0].mxu0
    %v2040 = vadd.f32 0.0, %v2039
    %v2041 = vpop.f32.mrb[0].mxu0
    %v2042 = vpop.f32.mrb[0].mxu0
    %v2043 = vpop.f32.mrb[0].mxu0
    %2044 = vdwg.mxu0
    %v2045 = vpack.c.bf16 %v1996, %v1996
    %v2046 = vpack.c.bf16 %v2040, %v2040
    %v2048 = vsel %vm224, %v2046, 0
    %2050 = vmatprep.subr.bf16.mxu0 0
    %2051 = vmatpush1.bf16.msra.mxu0 %v2048
    %2052 = vmatprep.subr.bf16.mxu0 0
    %2053 = vmatpush1.bf16.msra.mxu0 0
    %2054 = vmatprep.subr.bf16.mxu0 0
    %2055 = vmatpush1.bf16.msra.mxu0 0
    %2056 = vmatprep.subr.bf16.mxu0 0
    %2057 = vmatpush1.bf16.msra.mxu0 0
    %2058 = vmatprep.subr.bf16.mxu0 0
    %2059 = vmatpush1.bf16.msra.mxu0 0
    %2060 = vmatprep.subr.bf16.mxu0 0
    %2061 = vmatpush1.bf16.msra.mxu0 0
    %2062 = vmatprep.subr.bf16.mxu0 0
    %2063 = vmatpush1.bf16.msra.mxu0 0
    %2064 = vmatprep.subr.bf16.mxu0 0
    %2065 = vmatpush1.bf16.msra.mxu0 0
    %2066 = vmatprep.subr.bf16.mxu0 0
    %2067 = vmatpush1.bf16.msra.mxu0 0
    %2068 = vmatprep.subr.bf16.mxu0 0
    %2069 = vmatpush1.bf16.msra.mxu0 0
    %2070 = vmatprep.subr.bf16.mxu0 0
    %2071 = vmatpush1.bf16.msra.mxu0 0
    %2072 = vmatprep.subr.bf16.mxu0 0
    %2073 = vmatpush1.bf16.msra.mxu0 0
    %2074 = vmatprep.subr.bf16.mxu0 0
    %2075 = vmatpush1.bf16.msra.mxu0 0
    %2076 = vmatprep.subr.bf16.mxu0 0
    %2077 = vmatpush1.bf16.msra.mxu0 0
    %2078 = vmatprep.subr.bf16.mxu0 0
    %2079 = vmatpush1.bf16.msra.mxu0 0
    %2080 = vmatprep.subr.bf16.mxu0 0
    %2081 = vmatpush1.bf16.msra.mxu0 0
    %2082 = vmatprep.mubr.bf16.mxu0 0
    %2083 = vmatmul.mubr.bf16.gmra.mrb[0].mxu0 %v333
    %v2084 = vpop.f32.mrb[0].mxu0
    %v2085 = vadd.f32 0.0, %v2084
    %v2086 = vpop.f32.mrb[0].mxu0
    %v2087 = vpop.f32.mrb[0].mxu0
    %v2088 = vadd.f32 0.0, %v2087
    %v2089 = vpop.f32.mrb[0].mxu0
    %2090 = vmatprep.mubr.bf16.mxu0 0
    %2091 = vmatmul.mubr.bf16.gmra.mrb[0].mxu0 %v336
    %v2092 = vpop.f32.mrb[0].mxu0
    %v2093 = vadd.f32 0.0, %v2092
    %v2094 = vpop.f32.mrb[0].mxu0
    %v2095 = vpop.f32.mrb[0].mxu0
    %v2096 = vadd.f32 0.0, %v2095
    %v2097 = vpop.f32.mrb[0].mxu0
    %2098 = vmatprep.mubr.bf16.mxu0 0
    %2099 = vmatmul.mubr.bf16.gmra.mrb[0].mxu0 %v339
    %v2100 = vpop.f32.mrb[0].mxu0
    %v2101 = vadd.f32 0.0, %v2100
    %v2102 = vpop.f32.mrb[0].mxu0
    %v2103 = vpop.f32.mrb[0].mxu0
    %v2104 = vadd.f32 0.0, %v2103
    %v2105 = vpop.f32.mrb[0].mxu0
    %2106 = vmatprep.mubr.bf16.mxu0 0
    %2107 = vmatmul.mubr.bf16.gmra.mrb[0].mxu0 %v342
    %v2108 = vpop.f32.mrb[0].mxu0
    %v2109 = vadd.f32 0.0, %v2108
    %v2110 = vpop.f32.mrb[0].mxu0
    %v2111 = vpop.f32.mrb[0].mxu0
    %v2112 = vpop.f32.mrb[0].mxu0
    %2113 = vdwg.mxu0
    %v2115 = vsel %vm224, %v1953, 0
    %2117 = vmatprep.subr.bf16.mxu0 0
    %2118 = vmatpush1.bf16.msra.mxu0 %v2115
    %2119 = vmatprep.subr.bf16.mxu0 0
    %2120 = vmatpush1.bf16.msra.mxu0 0
    %2121 = vmatprep.subr.bf16.mxu0 0
    %2122 = vmatpush1.bf16.msra.mxu0 0
    %2123 = vmatprep.subr.bf16.mxu0 0
    %2124 = vmatpush1.bf16.msra.mxu0 0
    %2125 = vmatprep.subr.bf16.mxu0 0
    %2126 = vmatpush1.bf16.msra.mxu0 0
    %2127 = vmatprep.subr.bf16.mxu0 0
    %2128 = vmatpush1.bf16.msra.mxu0 0
    %2129 = vmatprep.subr.bf16.mxu0 0
    %2130 = vmatpush1.bf16.msra.mxu0 0
    %2131 = vmatprep.subr.bf16.mxu0 0
    %2132 = vmatpush1.bf16.msra.mxu0 0
    %2133 = vmatprep.subr.bf16.mxu0 0
    %2134 = vmatpush1.bf16.msra.mxu0 0
    %2135 = vmatprep.subr.bf16.mxu0 0
    %2136 = vmatpush1.bf16.msra.mxu0 0
    %2137 = vmatprep.subr.bf16.mxu0 0
    %2138 = vmatpush1.bf16.msra.mxu0 0
    %2139 = vmatprep.subr.bf16.mxu0 0
    %2140 = vmatpush1.bf16.msra.mxu0 0
    %2141 = vmatprep.subr.bf16.mxu0 0
    %2142 = vmatpush1.bf16.msra.mxu0 0
    %2143 = vmatprep.subr.bf16.mxu0 0
    %2144 = vmatpush1.bf16.msra.mxu0 0
    %2145 = vmatprep.subr.bf16.mxu0 0
    %2146 = vmatpush1.bf16.msra.mxu0 0
    %2147 = vmatprep.subr.bf16.mxu0 0
    %2148 = vmatpush1.bf16.msra.mxu0 0
    %2149 = vmatprep.mubr.bf16.mxu0 0
    %2150 = vmatmul.mubr.bf16.gmra.mrb[0].mxu0 %v430
    %v2151 = vpop.f32.mrb[0].mxu0
    %v2152 = vadd.f32 0.0, %v2151
    %v2153 = vpop.f32.mrb[0].mxu0
    %v2154 = vpop.f32.mrb[0].mxu0
    %v2155 = vadd.f32 0.0, %v2154
    %v2156 = vpop.f32.mrb[0].mxu0
    %2157 = vmatprep.mubr.bf16.mxu0 0
    %2158 = vmatmul.mubr.bf16.gmra.mrb[0].mxu0 %v433
    %v2159 = vpop.f32.mrb[0].mxu0
    %v2160 = vadd.f32 0.0, %v2159
    %v2161 = vpop.f32.mrb[0].mxu0
    %v2162 = vpop.f32.mrb[0].mxu0
    %v2163 = vadd.f32 0.0, %v2162
    %v2164 = vpop.f32.mrb[0].mxu0
    %2165 = vmatprep.mubr.bf16.mxu0 0
    %2166 = vmatmul.mubr.bf16.gmra.mrb[0].mxu0 %v436
    %v2167 = vpop.f32.mrb[0].mxu0
    %v2168 = vadd.f32 0.0, %v2167
    %v2169 = vpop.f32.mrb[0].mxu0
    %v2170 = vpop.f32.mrb[0].mxu0
    %v2171 = vadd.f32 0.0, %v2170
    %v2172 = vpop.f32.mrb[0].mxu0
    %2173 = vmatprep.mubr.bf16.mxu0 0
    %2174 = vmatmul.mubr.bf16.gmra.mrb[0].mxu0 %v439
    %v2175 = vpop.f32.mrb[0].mxu0
    %v2176 = vadd.f32 0.0, %v2175
    %v2177 = vpop.f32.mrb[0].mxu0
    %v2178 = vpop.f32.mrb[0].mxu0
    %v2179 = vpop.f32.mrb[0].mxu0
    %2180 = vdwg.mxu0
    %2181 = vmatprep.subr.bf16.mxu0 0
    %2182 = vmatpush1.bf16.msra.mxu0 %v2115
    %2183 = vmatprep.subr.bf16.mxu0 0
    %2184 = vmatpush1.bf16.msra.mxu0 0
    %2185 = vmatprep.subr.bf16.mxu0 0
    %2186 = vmatpush1.bf16.msra.mxu0 0
    %2187 = vmatprep.subr.bf16.mxu0 0
    %2188 = vmatpush1.bf16.msra.mxu0 0
    %2189 = vmatprep.subr.bf16.mxu0 0
    %2190 = vmatpush1.bf16.msra.mxu0 0
    %2191 = vmatprep.subr.bf16.mxu0 0
    %2192 = vmatpush1.bf16.msra.mxu0 0
    %2193 = vmatprep.subr.bf16.mxu0 0
    %2194 = vmatpush1.bf16.msra.mxu0 0
    %2195 = vmatprep.subr.bf16.mxu0 0
    %2196 = vmatpush1.bf16.msra.mxu0 0
    %2197 = vmatprep.subr.bf16.mxu0 0
    %2198 = vmatpush1.bf16.msra.mxu0 0
    %2199 = vmatprep.subr.bf16.mxu0 0
    %2200 = vmatpush1.bf16.msra.mxu0 0
    %2201 = vmatprep.subr.bf16.mxu0 0
    %2202 = vmatpush1.bf16.msra.mxu0 0
    %2203 = vmatprep.subr.bf16.mxu0 0
    %2204 = vmatpush1.bf16.msra.mxu0 0
    %2205 = vmatprep.subr.bf16.mxu0 0
    %2206 = vmatpush1.bf16.msra.mxu0 0
    %2207 = vmatprep.subr.bf16.mxu0 0
    %2208 = vmatpush1.bf16.msra.mxu0 0
    %2209 = vmatprep.subr.bf16.mxu0 0
    %2210 = vmatpush1.bf16.msra.mxu0 0
    %2211 = vmatprep.subr.bf16.mxu0 0
    %2212 = vmatpush1.bf16.msra.mxu0 0
    %2213 = vmatprep.mubr.bf16.mxu0 0
    %2214 = vmatmul.mubr.bf16.gmra.mrb[0].mxu0 %v333
    %v2215 = vpop.f32.mrb[0].mxu0
    %v2216 = vadd.f32 0.0, %v2215
    %v2217 = vpop.f32.mrb[0].mxu0
    %v2218 = vpop.f32.mrb[0].mxu0
    %v2219 = vadd.f32 0.0, %v2218
    %v2220 = vpop.f32.mrb[0].mxu0
    %2221 = vmatprep.mubr.bf16.mxu0 0
    %2222 = vmatmul.mubr.bf16.gmra.mrb[0].mxu0 %v336
    %v2223 = vpop.f32.mrb[0].mxu0
    %v2224 = vadd.f32 0.0, %v2223
    %v2225 = vpop.f32.mrb[0].mxu0
    %v2226 = vpop.f32.mrb[0].mxu0
    %v2227 = vadd.f32 0.0, %v2226
    %v2228 = vpop.f32.mrb[0].mxu0
    %2229 = vmatprep.mubr.bf16.mxu0 0
    %2230 = vmatmul.mubr.bf16.gmra.mrb[0].mxu0 %v339
    %v2231 = vpop.f32.mrb[0].mxu0
    %v2232 = vadd.f32 0.0, %v2231
    %v2233 = vpop.f32.mrb[0].mxu0
    %v2234 = vpop.f32.mrb[0].mxu0
    %v2235 = vadd.f32 0.0, %v2234
    %v2236 = vpop.f32.mrb[0].mxu0
    %2237 = vmatprep.mubr.bf16.mxu0 0
    %2238 = vmatmul.mubr.bf16.gmra.mrb[0].mxu0 %v342
    %v2239 = vpop.f32.mrb[0].mxu0
    %v2240 = vadd.f32 0.0, %v2239
    %v2241 = vpop.f32.mrb[0].mxu0
    %v2242 = vpop.f32.mrb[0].mxu0
    %v2243 = vpop.f32.mrb[0].mxu0
    %2244 = vdwg.mxu0
    %v2245 = vsub.f32 %v2152, %v2216
    %v2246 = vsub.f32 %v2155, %v2219
    %v2247 = vsub.f32 %v2160, %v2224
    %v2248 = vsub.f32 %v2163, %v2227
    %v2249 = vsub.f32 %v2168, %v2232
    %v2250 = vsub.f32 %v2171, %v2235
    %v2251 = vsub.f32 %v2176, %v2240
    %v2253 = vsel %vm579, %v2245, 0
    %v2256 = vsel %vm579, %v2246, 0
    %v2259 = vsel %vm579, %v2247, 0
    %v2262 = vsel %vm579, %v2248, 0
    %v2265 = vsel %vm579, %v2249, 0
    %v2268 = vsel %vm579, %v2250, 0
    %v2271 = vsel %vm579, %v2251, 0
    %2273 = vmatprep.subr.mxu0 0.0
    %2274 = vmatpush1.msra.mxu0 %v97
    %2275 = vmatprep.subr.mxu0 0.0
    %2276 = vmatpush1.msra.mxu0 %v602
    %2277 = vmatprep.subr.mxu0 0.0
    %2278 = vmatpush1.msra.mxu0 0.0
    %2279 = vmatprep.subr.mxu0 0.0
    %2280 = vmatpush1.msra.mxu0 0.0
    %2281 = vmatprep.subr.mxu0 0.0
    %2282 = vmatpush1.msra.mxu0 0.0
    %2283 = vmatprep.subr.mxu0 0.0
    %2284 = vmatpush1.msra.mxu0 0.0
    %2285 = vmatprep.subr.mxu0 0.0
    %2286 = vmatpush1.msra.mxu0 0.0
    %2287 = vmatprep.subr.mxu0 0.0
    %2288 = vmatpush1.msra.mxu0 0.0
    %2289 = vmatprep.subr.mxu0 0.0
    %2290 = vmatpush1.msra.mxu0 0.0
    %2291 = vmatprep.subr.mxu0 0.0
    %2292 = vmatpush1.msra.mxu0 0.0
    %2293 = vmatprep.subr.mxu0 0.0
    %2294 = vmatpush1.msra.mxu0 0.0
    %2295 = vmatprep.subr.mxu0 0.0
    %2296 = vmatpush1.msra.mxu0 0.0
    %2297 = vmatprep.subr.mxu0 0.0
    %2298 = vmatpush1.msra.mxu0 0.0
    %2299 = vmatprep.subr.mxu0 0.0
    %2300 = vmatpush1.msra.mxu0 0.0
    %2301 = vmatprep.subr.mxu0 0.0
    %2302 = vmatpush1.msra.mxu0 0.0
    %2303 = vmatprep.subr.mxu0 0.0
    %2304 = vmatpush1.msra.mxu0 0.0
    %2305 = vmatprep.subr.mxu0 0.0
    %2306 = vmatpush1.msra.mxu0 0.0
    %2307 = vmatprep.subr.mxu0 0.0
    %2308 = vmatpush1.msra.mxu0 0.0
    %2309 = vmatprep.subr.mxu0 0.0
    %2310 = vmatpush1.msra.mxu0 0.0
    %2311 = vmatprep.subr.mxu0 0.0
    %2312 = vmatpush1.msra.mxu0 0.0
    %2313 = vmatprep.subr.mxu0 0.0
    %2314 = vmatpush1.msra.mxu0 0.0
    %2315 = vmatprep.subr.mxu0 0.0
    %2316 = vmatpush1.msra.mxu0 0.0
    %2317 = vmatprep.subr.mxu0 0.0
    %2318 = vmatpush1.msra.mxu0 0.0
    %2319 = vmatprep.subr.mxu0 0.0
    %2320 = vmatpush1.msra.mxu0 0.0
    %2321 = vmatprep.subr.mxu0 0.0
    %2322 = vmatpush1.msra.mxu0 0.0
    %2323 = vmatprep.subr.mxu0 0.0
    %2324 = vmatpush1.msra.mxu0 0.0
    %2325 = vmatprep.subr.mxu0 0.0
    %2326 = vmatpush1.msra.mxu0 0.0
    %2327 = vmatprep.subr.mxu0 0.0
    %2328 = vmatpush1.msra.mxu0 0.0
    %2329 = vmatprep.subr.mxu0 0.0
    %2330 = vmatpush1.msra.mxu0 0.0
    %2331 = vmatprep.subr.mxu0 0.0
    %2332 = vmatpush1.msra.mxu0 0.0
    %2333 = vmatprep.subr.mxu0 0.0
    %2334 = vmatpush1.msra.mxu0 0.0
    %2335 = vmatprep.subr.mxu0 0.0
    %2336 = vmatpush1.msra.mxu0 0.0
    %2337 = vmatprep.mubr.f32.mxu0 0.0
    %2338 = vmatmul.mubr.f32.gmra.mrb[0].mxu0 %v2253
    %v2339 = vpop.f32.mrb[0].mxu0
    %v2340 = vadd.f32 0.0, %v2339
    %v2341 = vpop.f32.mrb[0].mxu0
    %2342 = vmatprep.mubr.f32.mxu0 0.0
    %2343 = vmatmul.mubr.f32.gmra.mrb[0].mxu0 %v2256
    %v2344 = vpop.f32.mrb[0].mxu0
    %v2345 = vadd.f32 0.0, %v2344
    %v2346 = vpop.f32.mrb[0].mxu0
    %2347 = vmatprep.mubr.f32.mxu0 0.0
    %2348 = vmatmul.mubr.f32.gmra.mrb[0].mxu0 %v2259
    %v2349 = vpop.f32.mrb[0].mxu0
    %v2350 = vadd.f32 0.0, %v2349
    %v2351 = vpop.f32.mrb[0].mxu0
    %2352 = vmatprep.mubr.f32.mxu0 0.0
    %2353 = vmatmul.mubr.f32.gmra.mrb[0].mxu0 %v2262
    %v2354 = vpop.f32.mrb[0].mxu0
    %v2355 = vadd.f32 0.0, %v2354
    %v2356 = vpop.f32.mrb[0].mxu0
    %2357 = vmatprep.mubr.f32.mxu0 0.0
    %2358 = vmatmul.mubr.f32.gmra.mrb[0].mxu0 %v2265
    %v2359 = vpop.f32.mrb[0].mxu0
    %v2360 = vadd.f32 0.0, %v2359
    %v2361 = vpop.f32.mrb[0].mxu0
    %2362 = vmatprep.mubr.f32.mxu0 0.0
    %2363 = vmatmul.mubr.f32.gmra.mrb[0].mxu0 %v2268
    %v2364 = vpop.f32.mrb[0].mxu0
    %v2365 = vadd.f32 0.0, %v2364
    %v2366 = vpop.f32.mrb[0].mxu0
    %2367 = vmatprep.mubr.f32.mxu0 0.0
    %2368 = vmatmul.mubr.f32.gmra.mrb[0].mxu0 %v2271
    %v2369 = vpop.f32.mrb[0].mxu0
    %v2370 = vadd.f32 0.0, %v2369
    %v2371 = vpop.f32.mrb[0].mxu0
    %2372 = vdwg.mxu0
    %2373 = vmatprep.subr.mxu0 0.0
    %2374 = vmatpush1.msra.mxu0 %v99
    %2375 = vmatprep.subr.mxu0 0.0
    %2376 = vmatpush1.msra.mxu0 %v705
    %2377 = vmatprep.subr.mxu0 0.0
    %2378 = vmatpush1.msra.mxu0 0.0
    %2379 = vmatprep.subr.mxu0 0.0
    %2380 = vmatpush1.msra.mxu0 0.0
    %2381 = vmatprep.subr.mxu0 0.0
    %2382 = vmatpush1.msra.mxu0 0.0
    %2383 = vmatprep.subr.mxu0 0.0
    %2384 = vmatpush1.msra.mxu0 0.0
    %2385 = vmatprep.subr.mxu0 0.0
    %2386 = vmatpush1.msra.mxu0 0.0
    %2387 = vmatprep.subr.mxu0 0.0
    %2388 = vmatpush1.msra.mxu0 0.0
    %2389 = vmatprep.subr.mxu0 0.0
    %2390 = vmatpush1.msra.mxu0 0.0
    %2391 = vmatprep.subr.mxu0 0.0
    %2392 = vmatpush1.msra.mxu0 0.0
    %2393 = vmatprep.subr.mxu0 0.0
    %2394 = vmatpush1.msra.mxu0 0.0
    %2395 = vmatprep.subr.mxu0 0.0
    %2396 = vmatpush1.msra.mxu0 0.0
    %2397 = vmatprep.subr.mxu0 0.0
    %2398 = vmatpush1.msra.mxu0 0.0
    %2399 = vmatprep.subr.mxu0 0.0
    %2400 = vmatpush1.msra.mxu0 0.0
    %2401 = vmatprep.subr.mxu0 0.0
    %2402 = vmatpush1.msra.mxu0 0.0
    %2403 = vmatprep.subr.mxu0 0.0
    %2404 = vmatpush1.msra.mxu0 0.0
    %2405 = vmatprep.subr.mxu0 0.0
    %2406 = vmatpush1.msra.mxu0 0.0
    %2407 = vmatprep.subr.mxu0 0.0
    %2408 = vmatpush1.msra.mxu0 0.0
    %2409 = vmatprep.subr.mxu0 0.0
    %2410 = vmatpush1.msra.mxu0 0.0
    %2411 = vmatprep.subr.mxu0 0.0
    %2412 = vmatpush1.msra.mxu0 0.0
    %2413 = vmatprep.subr.mxu0 0.0
    %2414 = vmatpush1.msra.mxu0 0.0
    %2415 = vmatprep.subr.mxu0 0.0
    %2416 = vmatpush1.msra.mxu0 0.0
    %2417 = vmatprep.subr.mxu0 0.0
    %2418 = vmatpush1.msra.mxu0 0.0
    %2419 = vmatprep.subr.mxu0 0.0
    %2420 = vmatpush1.msra.mxu0 0.0
    %2421 = vmatprep.subr.mxu0 0.0
    %2422 = vmatpush1.msra.mxu0 0.0
    %2423 = vmatprep.subr.mxu0 0.0
    %2424 = vmatpush1.msra.mxu0 0.0
    %2425 = vmatprep.subr.mxu0 0.0
    %2426 = vmatpush1.msra.mxu0 0.0
    %2427 = vmatprep.subr.mxu0 0.0
    %2428 = vmatpush1.msra.mxu0 0.0
    %2429 = vmatprep.subr.mxu0 0.0
    %2430 = vmatpush1.msra.mxu0 0.0
    %2431 = vmatprep.subr.mxu0 0.0
    %2432 = vmatpush1.msra.mxu0 0.0
    %2433 = vmatprep.subr.mxu0 0.0
    %2434 = vmatpush1.msra.mxu0 0.0
    %2435 = vmatprep.subr.mxu0 0.0
    %2436 = vmatpush1.msra.mxu0 0.0
    %2437 = vmatprep.mubr.f32.mxu0 0.0
    %2438 = vmatmul.mubr.f32.gmra.mrb[0].mxu0 %v2253
    %v2439 = vpop.f32.mrb[0].mxu0
    %v2440 = vadd.f32 0.0, %v2439
    %v2441 = vpop.f32.mrb[0].mxu0
    %2442 = vmatprep.mubr.f32.mxu0 0.0
    %2443 = vmatmul.mubr.f32.gmra.mrb[0].mxu0 %v2256
    %v2444 = vpop.f32.mrb[0].mxu0
    %v2445 = vadd.f32 0.0, %v2444
    %v2446 = vpop.f32.mrb[0].mxu0
    %2447 = vmatprep.mubr.f32.mxu0 0.0
    %2448 = vmatmul.mubr.f32.gmra.mrb[0].mxu0 %v2259
    %v2449 = vpop.f32.mrb[0].mxu0
    %v2450 = vadd.f32 0.0, %v2449
    %v2451 = vpop.f32.mrb[0].mxu0
    %2452 = vmatprep.mubr.f32.mxu0 0.0
    %2453 = vmatmul.mubr.f32.gmra.mrb[0].mxu0 %v2262
    %v2454 = vpop.f32.mrb[0].mxu0
    %v2455 = vadd.f32 0.0, %v2454
    %v2456 = vpop.f32.mrb[0].mxu0
    %2457 = vmatprep.mubr.f32.mxu0 0.0
    %2458 = vmatmul.mubr.f32.gmra.mrb[0].mxu0 %v2265
    %v2459 = vpop.f32.mrb[0].mxu0
    %v2460 = vadd.f32 0.0, %v2459
    %v2461 = vpop.f32.mrb[0].mxu0
    %2462 = vmatprep.mubr.f32.mxu0 0.0
    %2463 = vmatmul.mubr.f32.gmra.mrb[0].mxu0 %v2268
    %v2464 = vpop.f32.mrb[0].mxu0
    %v2465 = vadd.f32 0.0, %v2464
    %v2466 = vpop.f32.mrb[0].mxu0
    %2467 = vmatprep.mubr.f32.mxu0 0.0
    %2468 = vmatmul.mubr.f32.gmra.mrb[0].mxu0 %v2271
    %v2469 = vpop.f32.mrb[0].mxu0
    %v2470 = vadd.f32 0.0, %v2469
    %v2471 = vpop.f32.mrb[0].mxu0
    %2472 = vdwg.mxu0
    %v2473 = vmul.f32 %v2340, %v2440
    %v2474 = vmul.f32 %v2345, %v2445
    %v2475 = vmul.f32 %v2350, %v2450
    %v2476 = vmul.f32 %v2355, %v2455
    %v2477 = vmul.f32 %v2360, %v2460
    %v2478 = vmul.f32 %v2365, %v2465
    %v2479 = vmul.f32 %v2370, %v2470
    %v2481 = vsel %vm814, %v2473, 0
    %v2484 = vsel %vm814, %v2474, 0
    %v2487 = vsel %vm814, %v2475, 0
    %v2490 = vsel %vm814, %v2476, 0
    %v2493 = vsel %vm814, %v2477, 0
    %v2496 = vsel %vm814, %v2478, 0
    %v2499 = vsel %vm814, %v2479, 0
    %2501 = vmatprep.subr.mxu0 0.0
    %2502 = vmatpush1.msra.mxu0 %v101
    %2503 = vmatprep.subr.mxu0 0.0
    %2504 = vmatpush1.msra.mxu0 %v102
    %2505 = vmatprep.subr.mxu0 0.0
    %2506 = vmatpush1.msra.mxu0 %v103
    %2507 = vmatprep.subr.mxu0 0.0
    %2508 = vmatpush1.msra.mxu0 %v104
    %2509 = vmatprep.subr.mxu0 0.0
    %2510 = vmatpush1.msra.mxu0 %v105
    %2511 = vmatprep.subr.mxu0 0.0
    %2512 = vmatpush1.msra.mxu0 %v106
    %2513 = vmatprep.subr.mxu0 0.0
    %2514 = vmatpush1.msra.mxu0 0.0
    %2515 = vmatprep.subr.mxu0 0.0
    %2516 = vmatpush1.msra.mxu0 0.0
    %2517 = vmatprep.subr.mxu0 0.0
    %2518 = vmatpush1.msra.mxu0 0.0
    %2519 = vmatprep.subr.mxu0 0.0
    %2520 = vmatpush1.msra.mxu0 0.0
    %2521 = vmatprep.subr.mxu0 0.0
    %2522 = vmatpush1.msra.mxu0 0.0
    %2523 = vmatprep.subr.mxu0 0.0
    %2524 = vmatpush1.msra.mxu0 0.0
    %2525 = vmatprep.subr.mxu0 0.0
    %2526 = vmatpush1.msra.mxu0 0.0
    %2527 = vmatprep.subr.mxu0 0.0
    %2528 = vmatpush1.msra.mxu0 0.0
    %2529 = vmatprep.subr.mxu0 0.0
    %2530 = vmatpush1.msra.mxu0 0.0
    %2531 = vmatprep.subr.mxu0 0.0
    %2532 = vmatpush1.msra.mxu0 0.0
    %2533 = vmatprep.subr.mxu0 0.0
    %2534 = vmatpush1.msra.mxu0 0.0
    %2535 = vmatprep.subr.mxu0 0.0
    %2536 = vmatpush1.msra.mxu0 0.0
    %2537 = vmatprep.subr.mxu0 0.0
    %2538 = vmatpush1.msra.mxu0 0.0
    %2539 = vmatprep.subr.mxu0 0.0
    %2540 = vmatpush1.msra.mxu0 0.0
    %2541 = vmatprep.subr.mxu0 0.0
    %2542 = vmatpush1.msra.mxu0 0.0
    %2543 = vmatprep.subr.mxu0 0.0
    %2544 = vmatpush1.msra.mxu0 0.0
    %2545 = vmatprep.subr.mxu0 0.0
    %2546 = vmatpush1.msra.mxu0 0.0
    %2547 = vmatprep.subr.mxu0 0.0
    %2548 = vmatpush1.msra.mxu0 0.0
    %2549 = vmatprep.subr.mxu0 0.0
    %2550 = vmatpush1.msra.mxu0 0.0
    %2551 = vmatprep.subr.mxu0 0.0
    %2552 = vmatpush1.msra.mxu0 0.0
    %2553 = vmatprep.subr.mxu0 0.0
    %2554 = vmatpush1.msra.mxu0 0.0
    %2555 = vmatprep.subr.mxu0 0.0
    %2556 = vmatpush1.msra.mxu0 0.0
    %2557 = vmatprep.subr.mxu0 0.0
    %2558 = vmatpush1.msra.mxu0 0.0
    %2559 = vmatprep.subr.mxu0 0.0
    %2560 = vmatpush1.msra.mxu0 0.0
    %2561 = vmatprep.subr.mxu0 0.0
    %2562 = vmatpush1.msra.mxu0 0.0
    %2563 = vmatprep.subr.mxu0 0.0
    %2564 = vmatpush1.msra.mxu0 0.0
    %2565 = vmatprep.mubr.f32.mxu0 0.0
    %2566 = vmatmul.mubr.f32.gmra.mrb[0].mxu0 %v2481
    %v2567 = vpop.f32.mrb[0].mxu0
    %v2568 = vadd.f32 0.0, %v2567
    %v2569 = vpop.f32.mrb[0].mxu0
    %2570 = vmatprep.mubr.f32.mxu0 0.0
    %2571 = vmatmul.mubr.f32.gmra.mrb[0].mxu0 %v2484
    %v2572 = vpop.f32.mrb[0].mxu0
    %v2573 = vadd.f32 0.0, %v2572
    %v2574 = vpop.f32.mrb[0].mxu0
    %2575 = vmatprep.mubr.f32.mxu0 0.0
    %2576 = vmatmul.mubr.f32.gmra.mrb[0].mxu0 %v2487
    %v2577 = vpop.f32.mrb[0].mxu0
    %v2578 = vadd.f32 0.0, %v2577
    %v2579 = vpop.f32.mrb[0].mxu0
    %2580 = vmatprep.mubr.f32.mxu0 0.0
    %2581 = vmatmul.mubr.f32.gmra.mrb[0].mxu0 %v2490
    %v2582 = vpop.f32.mrb[0].mxu0
    %v2583 = vadd.f32 0.0, %v2582
    %v2584 = vpop.f32.mrb[0].mxu0
    %2585 = vmatprep.mubr.f32.mxu0 0.0
    %2586 = vmatmul.mubr.f32.gmra.mrb[0].mxu0 %v2493
    %v2587 = vpop.f32.mrb[0].mxu0
    %v2588 = vadd.f32 0.0, %v2587
    %v2589 = vpop.f32.mrb[0].mxu0
    %2590 = vmatprep.mubr.f32.mxu0 0.0
    %2591 = vmatmul.mubr.f32.gmra.mrb[0].mxu0 %v2496
    %v2592 = vpop.f32.mrb[0].mxu0
    %v2593 = vadd.f32 0.0, %v2592
    %v2594 = vpop.f32.mrb[0].mxu0
    %2595 = vmatprep.mubr.f32.mxu0 0.0
    %2596 = vmatmul.mubr.f32.gmra.mrb[0].mxu0 %v2499
    %v2597 = vpop.f32.mrb[0].mxu0
    %v2598 = vadd.f32 0.0, %v2597
    %v2599 = vpop.f32.mrb[0].mxu0
    %2600 = vdwg.mxu0
    %v2601 = vmul.f32 %v2568, %v2568
    %v2602 = vmul.f32 %v2573, %v2573
    %v2603 = vmul.f32 %v2578, %v2578
    %v2604 = vmul.f32 %v2583, %v2583
    %v2605 = vmul.f32 %v2588, %v2588
    %v2606 = vmul.f32 %v2593, %v2593
    %v2607 = vmul.f32 %v2598, %v2598
    %v2608 = vsel %vm943, %v2601, 0.0
    %2609 = vadd.xlane.f32.xlu0 %v2608
    %v2610 = vpop.xlane.xlu0 %2609
    %v2611 = vsel %vm943, %v2602, 0.0
    %2612 = vadd.xlane.f32.xlu0 %v2611
    %v2613 = vpop.xlane.xlu0 %2612
    %v2614 = vsel %vm943, %v2603, 0.0
    %2615 = vadd.xlane.f32.xlu0 %v2614
    %v2616 = vpop.xlane.xlu0 %2615
    %v2617 = vsel %vm943, %v2604, 0.0
    %2618 = vadd.xlane.f32.xlu0 %v2617
    %v2619 = vpop.xlane.xlu0 %2618
    %v2620 = vsel %vm943, %v2605, 0.0
    %2621 = vadd.xlane.f32.xlu0 %v2620
    %v2622 = vpop.xlane.xlu0 %2621
    %v2623 = vsel %vm943, %v2606, 0.0
    %2624 = vadd.xlane.f32.xlu0 %v2623
    %v2625 = vpop.xlane.xlu0 %2624
    %v2626 = vsel %vm943, %v2607, 0.0
    %2627 = vadd.xlane.f32.xlu0 %v2626
    %v2628 = vpop.xlane.xlu0 %2627
    %v2629 = vmax.f32 %v2610, 1e-24
    %v2630 = vmax.f32 %v2613, 1e-24
    %v2631 = vmax.f32 %v2616, 1e-24
    %v2632 = vmax.f32 %v2619, 1e-24
    %v2633 = vmax.f32 %v2622, 1e-24
    %v2634 = vmax.f32 %v2625, 1e-24
    %v2635 = vmax.f32 %v2628, 1e-24
    %v2636 = vrsqrt.pop %v2629
    %v2637 = vrsqrt.pop %v2630
    %v2638 = vrsqrt.pop %v2631
    %v2639 = vrsqrt.pop %v2632
    %v2640 = vrsqrt.pop %v2633
    %v2641 = vrsqrt.pop %v2634
    %v2642 = vrsqrt.pop %v2635
    %v2643 = vmul.f32 %v2568, %v2636
    %v2644 = vmul.f32 %v2573, %v2637
    %v2645 = vmul.f32 %v2578, %v2638
    %v2646 = vmul.f32 %v2583, %v2639
    %v2647 = vmul.f32 %v2588, %v2640
    %v2648 = vmul.f32 %v2593, %v2641
    %v2649 = vmul.f32 %v2598, %v2642
    %v2651 = vsel %vm224, %v2045, 0
    %2653 = vmatprep.subr.bf16.mxu0 0
    %2654 = vmatpush1.bf16.msra.mxu0 %v2651
    %2655 = vmatprep.subr.bf16.mxu0 0
    %2656 = vmatpush1.bf16.msra.mxu0 0
    %2657 = vmatprep.subr.bf16.mxu0 0
    %2658 = vmatpush1.bf16.msra.mxu0 0
    %2659 = vmatprep.subr.bf16.mxu0 0
    %2660 = vmatpush1.bf16.msra.mxu0 0
    %2661 = vmatprep.subr.bf16.mxu0 0
    %2662 = vmatpush1.bf16.msra.mxu0 0
    %2663 = vmatprep.subr.bf16.mxu0 0
    %2664 = vmatpush1.bf16.msra.mxu0 0
    %2665 = vmatprep.subr.bf16.mxu0 0
    %2666 = vmatpush1.bf16.msra.mxu0 0
    %2667 = vmatprep.subr.bf16.mxu0 0
    %2668 = vmatpush1.bf16.msra.mxu0 0
    %2669 = vmatprep.subr.bf16.mxu0 0
    %2670 = vmatpush1.bf16.msra.mxu0 0
    %2671 = vmatprep.subr.bf16.mxu0 0
    %2672 = vmatpush1.bf16.msra.mxu0 0
    %2673 = vmatprep.subr.bf16.mxu0 0
    %2674 = vmatpush1.bf16.msra.mxu0 0
    %2675 = vmatprep.subr.bf16.mxu0 0
    %2676 = vmatpush1.bf16.msra.mxu0 0
    %2677 = vmatprep.subr.bf16.mxu0 0
    %2678 = vmatpush1.bf16.msra.mxu0 0
    %2679 = vmatprep.subr.bf16.mxu0 0
    %2680 = vmatpush1.bf16.msra.mxu0 0
    %2681 = vmatprep.subr.bf16.mxu0 0
    %2682 = vmatpush1.bf16.msra.mxu0 0
    %2683 = vmatprep.subr.bf16.mxu0 0
    %2684 = vmatpush1.bf16.msra.mxu0 0
    %2685 = vmatprep.mubr.bf16.mxu0 0
    %2686 = vmatmul.mubr.bf16.gmra.mrb[0].mxu0 %v430
    %v2687 = vpop.f32.mrb[0].mxu0
    %v2688 = vadd.f32 %v2085, %v2687
    %v2689 = vpop.f32.mrb[0].mxu0
    %v2690 = vpop.f32.mrb[0].mxu0
    %v2691 = vadd.f32 %v2088, %v2690
    %v2692 = vpop.f32.mrb[0].mxu0
    %2693 = vmatprep.mubr.bf16.mxu0 0
    %2694 = vmatmul.mubr.bf16.gmra.mrb[0].mxu0 %v433
    %v2695 = vpop.f32.mrb[0].mxu0
    %v2696 = vadd.f32 %v2093, %v2695
    %v2697 = vpop.f32.mrb[0].mxu0
    %v2698 = vpop.f32.mrb[0].mxu0
    %v2699 = vadd.f32 %v2096, %v2698
    %v2700 = vpop.f32.mrb[0].mxu0
    %2701 = vmatprep.mubr.bf16.mxu0 0
    %2702 = vmatmul.mubr.bf16.gmra.mrb[0].mxu0 %v436
    %v2703 = vpop.f32.mrb[0].mxu0
    %v2704 = vadd.f32 %v2101, %v2703
    %v2705 = vpop.f32.mrb[0].mxu0
    %v2706 = vpop.f32.mrb[0].mxu0
    %v2707 = vadd.f32 %v2104, %v2706
    %v2708 = vpop.f32.mrb[0].mxu0
    %2709 = vmatprep.mubr.bf16.mxu0 0
    %2710 = vmatmul.mubr.bf16.gmra.mrb[0].mxu0 %v439
    %v2711 = vpop.f32.mrb[0].mxu0
    %v2712 = vadd.f32 %v2109, %v2711
    %v2713 = vpop.f32.mrb[0].mxu0
    %v2714 = vpop.f32.mrb[0].mxu0
    %v2715 = vpop.f32.mrb[0].mxu0
    %2716 = vdwg.mxu0
    %v2717 = vpack.c.bf16 %v2644, %v2643
    %v2718 = vpack.c.bf16 %v2646, %v2645
    %v2719 = vpack.c.bf16 %v2648, %v2647
    %v2720 = vpack.c.bf16 %v2649, %v2649
    %v2721 = vld [vmem:[%s12] sm:$0xf]
    %v2722 = vld [vmem:[%s12 + $0x4] sm:$0xf]
    %v2725 = vunpack.c.l.b16 %v2721
    %v2726 = vunpack.c.l.b16 %v2722
    %v2727 = vpack.c.b16 %v2726, %v2725
    %v2730 = vsel %vm943, %v2717, 0
    %v2733 = vsel %vm943, %v2718, 0
    %v2736 = vsel %vm943, %v2719, 0
    %v2739 = vsel %vm943, %v2720, 0
    %2741 = vmatprep.subr.bf16.mxu0 0
    %2742 = vmatpush1.bf16.msra.mxu0 %v2727
    %2743 = vmatprep.subr.bf16.mxu0 0
    %2744 = vmatpush1.bf16.msra.mxu0 0
    %2745 = vmatprep.subr.bf16.mxu0 0
    %2746 = vmatpush1.bf16.msra.mxu0 0
    %2747 = vmatprep.subr.bf16.mxu0 0
    %2748 = vmatpush1.bf16.msra.mxu0 0
    %2749 = vmatprep.subr.bf16.mxu0 0
    %2750 = vmatpush1.bf16.msra.mxu0 0
    %2751 = vmatprep.subr.bf16.mxu0 0
    %2752 = vmatpush1.bf16.msra.mxu0 0
    %2753 = vmatprep.subr.bf16.mxu0 0
    %2754 = vmatpush1.bf16.msra.mxu0 0
    %2755 = vmatprep.subr.bf16.mxu0 0
    %2756 = vmatpush1.bf16.msra.mxu0 0
    %2757 = vmatprep.subr.bf16.mxu0 0
    %2758 = vmatpush1.bf16.msra.mxu0 0
    %2759 = vmatprep.subr.bf16.mxu0 0
    %2760 = vmatpush1.bf16.msra.mxu0 0
    %2761 = vmatprep.subr.bf16.mxu0 0
    %2762 = vmatpush1.bf16.msra.mxu0 0
    %2763 = vmatprep.subr.bf16.mxu0 0
    %2764 = vmatpush1.bf16.msra.mxu0 0
    %2765 = vmatprep.subr.bf16.mxu0 0
    %2766 = vmatpush1.bf16.msra.mxu0 0
    %2767 = vmatprep.subr.bf16.mxu0 0
    %2768 = vmatpush1.bf16.msra.mxu0 0
    %2769 = vmatprep.subr.bf16.mxu0 0
    %2770 = vmatpush1.bf16.msra.mxu0 0
    %2771 = vmatprep.subr.bf16.mxu0 0
    %2772 = vmatpush1.bf16.msra.mxu0 0
    %2773 = vmatprep.mubr.bf16.mxu0 0
    %2774 = vmatmul.mubr.bf16.gmra.mrb[0].mxu0 %v2730
    %v2775 = vpop.f32.mrb[0].mxu0
    %v2776 = vadd.f32 0.0, %v2775
    %v2777 = vpop.f32.mrb[0].mxu0
    %v2778 = vpop.f32.mrb[0].mxu0
    %v2779 = vadd.f32 0.0, %v2778
    %v2780 = vpop.f32.mrb[0].mxu0
    %2781 = vmatprep.mubr.bf16.mxu0 0
    %2782 = vmatmul.mubr.bf16.gmra.mrb[0].mxu0 %v2733
    %v2783 = vpop.f32.mrb[0].mxu0
    %v2784 = vadd.f32 0.0, %v2783
    %v2785 = vpop.f32.mrb[0].mxu0
    %v2786 = vpop.f32.mrb[0].mxu0
    %v2787 = vadd.f32 0.0, %v2786
    %v2788 = vpop.f32.mrb[0].mxu0
    %2789 = vmatprep.mubr.bf16.mxu0 0
    %2790 = vmatmul.mubr.bf16.gmra.mrb[0].mxu0 %v2736
    %v2791 = vpop.f32.mrb[0].mxu0
    %v2792 = vadd.f32 0.0, %v2791
    %v2793 = vpop.f32.mrb[0].mxu0
    %v2794 = vpop.f32.mrb[0].mxu0
    %v2795 = vadd.f32 0.0, %v2794
    %v2796 = vpop.f32.mrb[0].mxu0
    %2797 = vmatprep.mubr.bf16.mxu0 0
    %2798 = vmatmul.mubr.bf16.gmra.mrb[0].mxu0 %v2739
    %v2799 = vpop.f32.mrb[0].mxu0
    %v2800 = vadd.f32 0.0, %v2799
    %v2801 = vpop.f32.mrb[0].mxu0
    %v2802 = vpop.f32.mrb[0].mxu0
    %v2803 = vpop.f32.mrb[0].mxu0
    %2804 = vdwg.mxu0
    %v2805 = vadd.f32 %v2688, %v2776
    %v2806 = vadd.f32 %v2691, %v2779
    %v2807 = vadd.f32 %v2696, %v2784
    %v2808 = vadd.f32 %v2699, %v2787
    %v2809 = vadd.f32 %v2704, %v2792
    %v2810 = vadd.f32 %v2707, %v2795
    %v2811 = vadd.f32 %v2712, %v2800
    %v2812 = vadd.f32 %v2805, %v186
    %v2813 = vadd.f32 %v2806, %v189
    %v2814 = vadd.f32 %v2807, %v194
    %v2815 = vadd.f32 %v2808, %v197
    %v2816 = vadd.f32 %v2809, %v202
    %v2817 = vadd.f32 %v2810, %v205
    %v2818 = vadd.f32 %v2811, %v210
    %v2819 = vld [vmem:[%s14] sm:$0x1]
    %v2821 = vlaneseq
    %v2822 = vshrl.u32 %v2821, 7
    %v2823 = vsub.s32 0, %v2822
    %v2824 = vrot.slane %v2819, %v2823
    %v2826 = vadd.f32 %v2812, %v2824
    %v2827 = vadd.f32 %v2813, %v2824
    %v2828 = vadd.f32 %v2814, %v2824
    %v2829 = vadd.f32 %v2815, %v2824
    %v2830 = vadd.f32 %v2816, %v2824
    %v2831 = vadd.f32 %v2817, %v2824
    %v2832 = vadd.f32 %v2818, %v2824
    %v2833 = vmax.f32 %v2826, 0.0
    %v2834 = vmax.f32 %v2827, 0.0
    %v2835 = vmax.f32 %v2828, 0.0
    %v2836 = vmax.f32 %v2829, 0.0
    %v2837 = vmax.f32 %v2830, 0.0
    %v2838 = vmax.f32 %v2831, 0.0
    %v2839 = vmax.f32 %v2832, 0.0
    %v2840 = vpack.c.bf16 %v2834, %v2833
    %v2841 = vpack.c.bf16 %v2836, %v2835
    %v2842 = vpack.c.bf16 %v2838, %v2837
    %v2843 = vpack.c.bf16 %v2839, %v2839
    %v2844 = vld [vmem:[%s15] sm:$0xf]
    %v2845 = vld [vmem:[%s15 + $0x4] sm:$0xf]
    %v2846 = vld [vmem:[%s15 + $0x8] sm:$0xf]
    %v2847 = vld [vmem:[%s15 + $0xc] sm:$0xf]
    %v2848 = vld [vmem:[%s16] sm:$0x1]
    %v2850 = vlaneseq
    %v2851 = vshrl.u32 %v2850, 7
    %v2852 = vsub.s32 0, %v2851
    %v2853 = vrot.slane %v2848, %v2852
    %v2859 = vunpack.c.l.b16 %v2844
    %v2860 = vunpack.c.l.b16 %v2845
    %v2861 = vunpack.c.l.b16 %v2846
    %v2862 = vunpack.c.l.b16 %v2847
    %v2863 = vpack.c.b16 %v2860, %v2859
    %v2864 = vpack.c.b16 %v2862, %v2861
    %v2868 = vsel %vm1203, %v2840, 0
    %v2871 = vsel %vm1203, %v2841, 0
    %v2874 = vsel %vm1203, %v2842, 0
    %v2877 = vsel %vm1203, %v2843, 0
    %2879 = vmatprep.subr.bf16.mxu0 0
    %2880 = vmatpush1.bf16.msra.mxu0 %v2863
    %2881 = vmatprep.subr.bf16.mxu0 0
    %2882 = vmatpush1.bf16.msra.mxu0 %v2864
    %2883 = vmatprep.subr.bf16.mxu0 0
    %2884 = vmatpush1.bf16.msra.mxu0 0
    %2885 = vmatprep.subr.bf16.mxu0 0
    %2886 = vmatpush1.bf16.msra.mxu0 0
    %2887 = vmatprep.subr.bf16.mxu0 0
    %2888 = vmatpush1.bf16.msra.mxu0 0
    %2889 = vmatprep.subr.bf16.mxu0 0
    %2890 = vmatpush1.bf16.msra.mxu0 0
    %2891 = vmatprep.subr.bf16.mxu0 0
    %2892 = vmatpush1.bf16.msra.mxu0 0
    %2893 = vmatprep.subr.bf16.mxu0 0
    %2894 = vmatpush1.bf16.msra.mxu0 0
    %2895 = vmatprep.subr.bf16.mxu0 0
    %2896 = vmatpush1.bf16.msra.mxu0 0
    %2897 = vmatprep.subr.bf16.mxu0 0
    %2898 = vmatpush1.bf16.msra.mxu0 0
    %2899 = vmatprep.subr.bf16.mxu0 0
    %2900 = vmatpush1.bf16.msra.mxu0 0
    %2901 = vmatprep.subr.bf16.mxu0 0
    %2902 = vmatpush1.bf16.msra.mxu0 0
    %2903 = vmatprep.subr.bf16.mxu0 0
    %2904 = vmatpush1.bf16.msra.mxu0 0
    %2905 = vmatprep.subr.bf16.mxu0 0
    %2906 = vmatpush1.bf16.msra.mxu0 0
    %2907 = vmatprep.subr.bf16.mxu0 0
    %2908 = vmatpush1.bf16.msra.mxu0 0
    %2909 = vmatprep.subr.bf16.mxu0 0
    %2910 = vmatpush1.bf16.msra.mxu0 0
    %2911 = vmatprep.mubr.bf16.mxu0 0
    %2912 = vmatmul.mubr.bf16.gmra.mrb[0].mxu0 %v2868
    %v2913 = vpop.f32.mrb[0].mxu0
    %v2914 = vadd.f32 %v2853, %v2913
    %v2915 = vpop.f32.mrb[0].mxu0
    %v2916 = vpop.f32.mrb[0].mxu0
    %v2917 = vadd.f32 %v2853, %v2916
    %v2918 = vpop.f32.mrb[0].mxu0
    %2919 = vmatprep.mubr.bf16.mxu0 0
    %2920 = vmatmul.mubr.bf16.gmra.mrb[0].mxu0 %v2871
    %v2921 = vpop.f32.mrb[0].mxu0
    %v2922 = vadd.f32 %v2853, %v2921
    %v2923 = vpop.f32.mrb[0].mxu0
    %v2924 = vpop.f32.mrb[0].mxu0
    %v2925 = vadd.f32 %v2853, %v2924
    %v2926 = vpop.f32.mrb[0].mxu0
    %2927 = vmatprep.mubr.bf16.mxu0 0
    %2928 = vmatmul.mubr.bf16.gmra.mrb[0].mxu0 %v2874
    %v2929 = vpop.f32.mrb[0].mxu0
    %v2930 = vadd.f32 %v2853, %v2929
    %v2931 = vpop.f32.mrb[0].mxu0
    %v2932 = vpop.f32.mrb[0].mxu0
    %v2933 = vadd.f32 %v2853, %v2932
    %v2934 = vpop.f32.mrb[0].mxu0
    %2935 = vmatprep.mubr.bf16.mxu0 0
    %2936 = vmatmul.mubr.bf16.gmra.mrb[0].mxu0 %v2877
    %v2937 = vpop.f32.mrb[0].mxu0
    %v2938 = vadd.f32 %v2853, %v2937
    %v2939 = vpop.f32.mrb[0].mxu0
    %v2940 = vpop.f32.mrb[0].mxu0
    %v2941 = vpop.f32.mrb[0].mxu0
    %2942 = vdwg.mxu0
    %v2943 = vmax.f32 %v2914, 0.0
    %v2944 = vmax.f32 %v2917, 0.0
    %v2945 = vmax.f32 %v2922, 0.0
    %v2946 = vmax.f32 %v2925, 0.0
    %v2947 = vmax.f32 %v2930, 0.0
    %v2948 = vmax.f32 %v2933, 0.0
    %v2949 = vmax.f32 %v2938, 0.0
    %v2950 = vpack.c.bf16 %v2944, %v2943
    %v2951 = vpack.c.bf16 %v2946, %v2945
    %v2952 = vpack.c.bf16 %v2948, %v2947
    %v2953 = vpack.c.bf16 %v2949, %v2949
    %v2954 = vld [vmem:[%s17] sm:$0xf]
    %v2955 = vld [vmem:[%s17 + $0x4] sm:$0xf]
    %v2956 = vld [vmem:[%s17 + $0x8] sm:$0xf]
    %v2957 = vld [vmem:[%s17 + $0xc] sm:$0xf]
    %v2958 = vld [vmem:[%s18] sm:$0x1]
    %v2960 = vlaneseq
    %v2961 = vshrl.u32 %v2960, 7
    %v2962 = vsub.s32 0, %v2961
    %v2963 = vrot.slane %v2958, %v2962
    %v2969 = vunpack.c.l.b16 %v2954
    %v2970 = vunpack.c.l.b16 %v2955
    %v2971 = vunpack.c.l.b16 %v2956
    %v2972 = vunpack.c.l.b16 %v2957
    %v2973 = vpack.c.b16 %v2970, %v2969
    %v2974 = vpack.c.b16 %v2972, %v2971
    %v2978 = vsel %vm1203, %v2950, 0
    %v2981 = vsel %vm1203, %v2951, 0
    %v2984 = vsel %vm1203, %v2952, 0
    %v2987 = vsel %vm1203, %v2953, 0
    %2989 = vmatprep.subr.bf16.mxu0 0
    %2990 = vmatpush1.bf16.msra.mxu0 %v2973
    %2991 = vmatprep.subr.bf16.mxu0 0
    %2992 = vmatpush1.bf16.msra.mxu0 %v2974
    %2993 = vmatprep.subr.bf16.mxu0 0
    %2994 = vmatpush1.bf16.msra.mxu0 0
    %2995 = vmatprep.subr.bf16.mxu0 0
    %2996 = vmatpush1.bf16.msra.mxu0 0
    %2997 = vmatprep.subr.bf16.mxu0 0
    %2998 = vmatpush1.bf16.msra.mxu0 0
    %2999 = vmatprep.subr.bf16.mxu0 0
    %3000 = vmatpush1.bf16.msra.mxu0 0
    %3001 = vmatprep.subr.bf16.mxu0 0
    %3002 = vmatpush1.bf16.msra.mxu0 0
    %3003 = vmatprep.subr.bf16.mxu0 0
    %3004 = vmatpush1.bf16.msra.mxu0 0
    %3005 = vmatprep.subr.bf16.mxu0 0
    %3006 = vmatpush1.bf16.msra.mxu0 0
    %3007 = vmatprep.subr.bf16.mxu0 0
    %3008 = vmatpush1.bf16.msra.mxu0 0
    %3009 = vmatprep.subr.bf16.mxu0 0
    %3010 = vmatpush1.bf16.msra.mxu0 0
    %3011 = vmatprep.subr.bf16.mxu0 0
    %3012 = vmatpush1.bf16.msra.mxu0 0
    %3013 = vmatprep.subr.bf16.mxu0 0
    %3014 = vmatpush1.bf16.msra.mxu0 0
    %3015 = vmatprep.subr.bf16.mxu0 0
    %3016 = vmatpush1.bf16.msra.mxu0 0
    %3017 = vmatprep.subr.bf16.mxu0 0
    %3018 = vmatpush1.bf16.msra.mxu0 0
    %3019 = vmatprep.subr.bf16.mxu0 0
    %3020 = vmatpush1.bf16.msra.mxu0 0
    %3021 = vmatprep.mubr.bf16.mxu0 0
    %3022 = vmatmul.mubr.bf16.gmra.mrb[0].mxu0 %v2978
    %v3023 = vpop.f32.mrb[0].mxu0
    %v3024 = vadd.f32 %v2963, %v3023
    %v3025 = vpop.f32.mrb[0].mxu0
    %v3026 = vpop.f32.mrb[0].mxu0
    %v3027 = vadd.f32 %v2963, %v3026
    %v3028 = vpop.f32.mrb[0].mxu0
    %3029 = vmatprep.mubr.bf16.mxu0 0
    %3030 = vmatmul.mubr.bf16.gmra.mrb[0].mxu0 %v2981
    %v3031 = vpop.f32.mrb[0].mxu0
    %v3032 = vadd.f32 %v2963, %v3031
    %v3033 = vpop.f32.mrb[0].mxu0
    %v3034 = vpop.f32.mrb[0].mxu0
    %v3035 = vadd.f32 %v2963, %v3034
    %v3036 = vpop.f32.mrb[0].mxu0
    %3037 = vmatprep.mubr.bf16.mxu0 0
    %3038 = vmatmul.mubr.bf16.gmra.mrb[0].mxu0 %v2984
    %v3039 = vpop.f32.mrb[0].mxu0
    %v3040 = vadd.f32 %v2963, %v3039
    %v3041 = vpop.f32.mrb[0].mxu0
    %v3042 = vpop.f32.mrb[0].mxu0
    %v3043 = vadd.f32 %v2963, %v3042
    %v3044 = vpop.f32.mrb[0].mxu0
    %3045 = vmatprep.mubr.bf16.mxu0 0
    %3046 = vmatmul.mubr.bf16.gmra.mrb[0].mxu0 %v2987
    %v3047 = vpop.f32.mrb[0].mxu0
    %v3048 = vadd.f32 %v2963, %v3047
    %v3049 = vpop.f32.mrb[0].mxu0
    %v3050 = vpop.f32.mrb[0].mxu0
    %v3051 = vpop.f32.mrb[0].mxu0
    %3052 = vdwg.mxu0
    %v3053 = vmax.f32 %v3024, 0.0
    %v3054 = vmax.f32 %v3027, 0.0
    %v3055 = vmax.f32 %v3032, 0.0
    %v3056 = vmax.f32 %v3035, 0.0
    %v3057 = vmax.f32 %v3040, 0.0
    %v3058 = vmax.f32 %v3043, 0.0
    %v3059 = vmax.f32 %v3048, 0.0
    %v3060 = vpack.c.bf16 %v3054, %v3053
    %v3061 = vpack.c.bf16 %v3056, %v3055
    %v3062 = vpack.c.bf16 %v3058, %v3057
    %v3063 = vpack.c.bf16 %v3059, %v3059
    %v3064 = vld [vmem:[%s19] sm:$0xf]
    %v3065 = vld [vmem:[%s19 + $0x4] sm:$0xf]
    %v3066 = vld [vmem:[%s19 + $0x8] sm:$0xf]
    %v3067 = vld [vmem:[%s19 + $0xc] sm:$0xf]
    %v3072 = vunpack.c.l.b16 %v3064
    %v3073 = vunpack.c.l.b16 %v3065
    %v3074 = vunpack.c.l.b16 %v3066
    %v3075 = vunpack.c.l.b16 %v3067
    %v3076 = vpack.c.b16 %v3073, %v3072
    %v3077 = vpack.c.b16 %v3075, %v3074
    %v3081 = vsel %vm1203, %v3060, 0
    %v3084 = vsel %vm1203, %v3061, 0
    %v3087 = vsel %vm1203, %v3062, 0
    %v3090 = vsel %vm1203, %v3063, 0
    %3092 = vmatprep.subr.bf16.mxu0 0
    %3093 = vmatpush1.bf16.msra.mxu0 %v3076
    %3094 = vmatprep.subr.bf16.mxu0 0
    %3095 = vmatpush1.bf16.msra.mxu0 %v3077
    %3096 = vmatprep.subr.bf16.mxu0 0
    %3097 = vmatpush1.bf16.msra.mxu0 0
    %3098 = vmatprep.subr.bf16.mxu0 0
    %3099 = vmatpush1.bf16.msra.mxu0 0
    %3100 = vmatprep.subr.bf16.mxu0 0
    %3101 = vmatpush1.bf16.msra.mxu0 0
    %3102 = vmatprep.subr.bf16.mxu0 0
    %3103 = vmatpush1.bf16.msra.mxu0 0
    %3104 = vmatprep.subr.bf16.mxu0 0
    %3105 = vmatpush1.bf16.msra.mxu0 0
    %3106 = vmatprep.subr.bf16.mxu0 0
    %3107 = vmatpush1.bf16.msra.mxu0 0
    %3108 = vmatprep.subr.bf16.mxu0 0
    %3109 = vmatpush1.bf16.msra.mxu0 0
    %3110 = vmatprep.subr.bf16.mxu0 0
    %3111 = vmatpush1.bf16.msra.mxu0 0
    %3112 = vmatprep.subr.bf16.mxu0 0
    %3113 = vmatpush1.bf16.msra.mxu0 0
    %3114 = vmatprep.subr.bf16.mxu0 0
    %3115 = vmatpush1.bf16.msra.mxu0 0
    %3116 = vmatprep.subr.bf16.mxu0 0
    %3117 = vmatpush1.bf16.msra.mxu0 0
    %3118 = vmatprep.subr.bf16.mxu0 0
    %3119 = vmatpush1.bf16.msra.mxu0 0
    %3120 = vmatprep.subr.bf16.mxu0 0
    %3121 = vmatpush1.bf16.msra.mxu0 0
    %3122 = vmatprep.subr.bf16.mxu0 0
    %3123 = vmatpush1.bf16.msra.mxu0 0
    %3124 = vmatprep.mubr.bf16.mxu0 0
    %3125 = vmatmul.mubr.bf16.gmra.mrb[0].mxu0 %v3081
    %v3126 = vpop.f32.mrb[0].mxu0
    %v3127 = vadd.f32 0.0, %v3126
    %v3128 = vpop.f32.mrb[0].mxu0
    %v3129 = vpop.f32.mrb[0].mxu0
    %v3130 = vadd.f32 0.0, %v3129
    %v3131 = vpop.f32.mrb[0].mxu0
    %3132 = vmatprep.mubr.bf16.mxu0 0
    %3133 = vmatmul.mubr.bf16.gmra.mrb[0].mxu0 %v3084
    %v3134 = vpop.f32.mrb[0].mxu0
    %v3135 = vadd.f32 0.0, %v3134
    %v3136 = vpop.f32.mrb[0].mxu0
    %v3137 = vpop.f32.mrb[0].mxu0
    %v3138 = vadd.f32 0.0, %v3137
    %v3139 = vpop.f32.mrb[0].mxu0
    %3140 = vmatprep.mubr.bf16.mxu0 0
    %3141 = vmatmul.mubr.bf16.gmra.mrb[0].mxu0 %v3087
    %v3142 = vpop.f32.mrb[0].mxu0
    %v3143 = vadd.f32 0.0, %v3142
    %v3144 = vpop.f32.mrb[0].mxu0
    %v3145 = vpop.f32.mrb[0].mxu0
    %v3146 = vadd.f32 0.0, %v3145
    %v3147 = vpop.f32.mrb[0].mxu0
    %3148 = vmatprep.mubr.bf16.mxu0 0
    %3149 = vmatmul.mubr.bf16.gmra.mrb[0].mxu0 %v3090
    %v3150 = vpop.f32.mrb[0].mxu0
    %v3151 = vadd.f32 0.0, %v3150
    %v3152 = vpop.f32.mrb[0].mxu0
    %v3153 = vpop.f32.mrb[0].mxu0
    %v3154 = vpop.f32.mrb[0].mxu0
    %3155 = vdwg.mxu0
    %v3157 = vsel %vm134, %v3127, 0
    %v3160 = vsel %vm134, %v3130, 0
    %v3163 = vsel %vm134, %v3135, 0
    %v3166 = vsel %vm134, %v3138, 0
    %v3169 = vsel %vm134, %v3143, 0
    %v3172 = vsel %vm134, %v3146, 0
    %v3175 = vsel %vm134, %v3151, 0
    %3177 = vmatprep.subr.mxu0 0.0
    %3178 = vmatpush1.msra.mxu0 %v1515
    %3179 = vmatprep.subr.mxu0 0.0
    %3180 = vmatpush1.msra.mxu0 0.0
    %3181 = vmatprep.subr.mxu0 0.0
    %3182 = vmatpush1.msra.mxu0 0.0
    %3183 = vmatprep.subr.mxu0 0.0
    %3184 = vmatpush1.msra.mxu0 0.0
    %3185 = vmatprep.subr.mxu0 0.0
    %3186 = vmatpush1.msra.mxu0 0.0
    %3187 = vmatprep.subr.mxu0 0.0
    %3188 = vmatpush1.msra.mxu0 0.0
    %3189 = vmatprep.subr.mxu0 0.0
    %3190 = vmatpush1.msra.mxu0 0.0
    %3191 = vmatprep.subr.mxu0 0.0
    %3192 = vmatpush1.msra.mxu0 0.0
    %3193 = vmatprep.subr.mxu0 0.0
    %3194 = vmatpush1.msra.mxu0 0.0
    %3195 = vmatprep.subr.mxu0 0.0
    %3196 = vmatpush1.msra.mxu0 0.0
    %3197 = vmatprep.subr.mxu0 0.0
    %3198 = vmatpush1.msra.mxu0 0.0
    %3199 = vmatprep.subr.mxu0 0.0
    %3200 = vmatpush1.msra.mxu0 0.0
    %3201 = vmatprep.subr.mxu0 0.0
    %3202 = vmatpush1.msra.mxu0 0.0
    %3203 = vmatprep.subr.mxu0 0.0
    %3204 = vmatpush1.msra.mxu0 0.0
    %3205 = vmatprep.subr.mxu0 0.0
    %3206 = vmatpush1.msra.mxu0 0.0
    %3207 = vmatprep.subr.mxu0 0.0
    %3208 = vmatpush1.msra.mxu0 0.0
    %3209 = vmatprep.subr.mxu0 0.0
    %3210 = vmatpush1.msra.mxu0 0.0
    %3211 = vmatprep.subr.mxu0 0.0
    %3212 = vmatpush1.msra.mxu0 0.0
    %3213 = vmatprep.subr.mxu0 0.0
    %3214 = vmatpush1.msra.mxu0 0.0
    %3215 = vmatprep.subr.mxu0 0.0
    %3216 = vmatpush1.msra.mxu0 0.0
    %3217 = vmatprep.subr.mxu0 0.0
    %3218 = vmatpush1.msra.mxu0 0.0
    %3219 = vmatprep.subr.mxu0 0.0
    %3220 = vmatpush1.msra.mxu0 0.0
    %3221 = vmatprep.subr.mxu0 0.0
    %3222 = vmatpush1.msra.mxu0 0.0
    %3223 = vmatprep.subr.mxu0 0.0
    %3224 = vmatpush1.msra.mxu0 0.0
    %3225 = vmatprep.subr.mxu0 0.0
    %3226 = vmatpush1.msra.mxu0 0.0
    %3227 = vmatprep.subr.mxu0 0.0
    %3228 = vmatpush1.msra.mxu0 0.0
    %3229 = vmatprep.subr.mxu0 0.0
    %3230 = vmatpush1.msra.mxu0 0.0
    %3231 = vmatprep.subr.mxu0 0.0
    %3232 = vmatpush1.msra.mxu0 0.0
    %3233 = vmatprep.subr.mxu0 0.0
    %3234 = vmatpush1.msra.mxu0 0.0
    %3235 = vmatprep.subr.mxu0 0.0
    %3236 = vmatpush1.msra.mxu0 0.0
    %3237 = vmatprep.subr.mxu0 0.0
    %3238 = vmatpush1.msra.mxu0 0.0
    %3239 = vmatprep.subr.mxu0 0.0
    %3240 = vmatpush1.msra.mxu0 0.0
    %3241 = vmatprep.mubr.f32.mxu0 0.0
    %3242 = vmatmul.mubr.f32.gmra.mrb[0].mxu0 %v3157
    %v3243 = vpop.f32.mrb[0].mxu0
    %v3244 = vadd.f32 0.0, %v3243
    %v3245 = vpop.f32.mrb[0].mxu0
    %3246 = vmatprep.mubr.f32.mxu0 0.0
    %3247 = vmatmul.mubr.f32.gmra.mrb[0].mxu0 %v3160
    %v3248 = vpop.f32.mrb[0].mxu0
    %v3249 = vadd.f32 0.0, %v3248
    %v3250 = vpop.f32.mrb[0].mxu0
    %3251 = vmatprep.mubr.f32.mxu0 0.0
    %3252 = vmatmul.mubr.f32.gmra.mrb[0].mxu0 %v3163
    %v3253 = vpop.f32.mrb[0].mxu0
    %v3254 = vadd.f32 0.0, %v3253
    %v3255 = vpop.f32.mrb[0].mxu0
    %3256 = vmatprep.mubr.f32.mxu0 0.0
    %3257 = vmatmul.mubr.f32.gmra.mrb[0].mxu0 %v3166
    %v3258 = vpop.f32.mrb[0].mxu0
    %v3259 = vadd.f32 0.0, %v3258
    %v3260 = vpop.f32.mrb[0].mxu0
    %3261 = vmatprep.mubr.f32.mxu0 0.0
    %3262 = vmatmul.mubr.f32.gmra.mrb[0].mxu0 %v3169
    %v3263 = vpop.f32.mrb[0].mxu0
    %v3264 = vadd.f32 0.0, %v3263
    %v3265 = vpop.f32.mrb[0].mxu0
    %3266 = vmatprep.mubr.f32.mxu0 0.0
    %3267 = vmatmul.mubr.f32.gmra.mrb[0].mxu0 %v3172
    %v3268 = vpop.f32.mrb[0].mxu0
    %v3269 = vadd.f32 0.0, %v3268
    %v3270 = vpop.f32.mrb[0].mxu0
    %3271 = vmatprep.mubr.f32.mxu0 0.0
    %3272 = vmatmul.mubr.f32.gmra.mrb[0].mxu0 %v3175
    %v3273 = vpop.f32.mrb[0].mxu0
    %v3274 = vadd.f32 0.0, %v3273
    %v3275 = vpop.f32.mrb[0].mxu0
    %3276 = vdwg.mxu0
    %v3277 = vmul.f32 %v2245, %v3244
    %v3278 = vmul.f32 %v2246, %v3249
    %v3279 = vmul.f32 %v2247, %v3254
    %v3280 = vmul.f32 %v2248, %v3259
    %v3281 = vmul.f32 %v2249, %v3264
    %v3282 = vmul.f32 %v2250, %v3269
    %v3283 = vmul.f32 %v2251, %v3274
    %v3284 = vmax.f32 %v3277, -100.0
    %v3285 = vmax.f32 %v3278, -100.0
    %v3286 = vmax.f32 %v3279, -100.0
    %v3287 = vmax.f32 %v3280, -100.0
    %v3288 = vmax.f32 %v3281, -100.0
    %v3289 = vmax.f32 %v3282, -100.0
    %v3290 = vmax.f32 %v3283, -100.0
    %v3291 = vmin.f32 %v3284, 100.0
    %v3292 = vmin.f32 %v3285, 100.0
    %v3293 = vmin.f32 %v3286, 100.0
    %v3294 = vmin.f32 %v3287, 100.0
    %v3295 = vmin.f32 %v3288, 100.0
    %v3296 = vmin.f32 %v3289, 100.0
    %v3297 = vmin.f32 %v3290, 100.0
    %v3298 = vpack.c.bf16 %v3292, %v3291
    %v3299 = vpack.c.bf16 %v3294, %v3293
    %v3300 = vpack.c.bf16 %v3296, %v3295
    %v3301 = vpack.c.bf16 %v3297, %v3297
    %v3303 = vsel %vm224, %v3301, 0
    %3305 = vmatprep.subr.bf16.mxu0 0
    %3306 = vmatpush1.bf16.msra.mxu0 %v3298
    %3307 = vmatprep.subr.bf16.mxu0 0
    %3308 = vmatpush1.bf16.msra.mxu0 %v3299
    %3309 = vmatprep.subr.bf16.mxu0 0
    %3310 = vmatpush1.bf16.msra.mxu0 %v3300
    %3311 = vmatprep.subr.bf16.mxu0 0
    %3312 = vmatpush1.bf16.msra.mxu0 %v3303
    %3313 = vmatprep.subr.bf16.mxu0 0
    %3314 = vmatpush1.bf16.msra.mxu0 0
    %3315 = vmatprep.subr.bf16.mxu0 0
    %3316 = vmatpush1.bf16.msra.mxu0 0
    %3317 = vmatprep.subr.bf16.mxu0 0
    %3318 = vmatpush1.bf16.msra.mxu0 0
    %3319 = vmatprep.subr.bf16.mxu0 0
    %3320 = vmatpush1.bf16.msra.mxu0 0
    %3321 = vmatprep.subr.bf16.mxu0 0
    %3322 = vmatpush1.bf16.msra.mxu0 0
    %3323 = vmatprep.subr.bf16.mxu0 0
    %3324 = vmatpush1.bf16.msra.mxu0 0
    %3325 = vmatprep.subr.bf16.mxu0 0
    %3326 = vmatpush1.bf16.msra.mxu0 0
    %3327 = vmatprep.subr.bf16.mxu0 0
    %3328 = vmatpush1.bf16.msra.mxu0 0
    %3329 = vmatprep.subr.bf16.mxu0 0
    %3330 = vmatpush1.bf16.msra.mxu0 0
    %3331 = vmatprep.subr.bf16.mxu0 0
    %3332 = vmatpush1.bf16.msra.mxu0 0
    %3333 = vmatprep.subr.bf16.mxu0 0
    %3334 = vmatpush1.bf16.msra.mxu0 0
    %3335 = vmatprep.subr.bf16.mxu0 0
    %3336 = vmatpush1.bf16.msra.mxu0 0
    %3337 = vmatprep.mubr.bf16.mxu0 0
    %3338 = vmatmul.mubr.bf16.gmra.mrb[0].mxu0 %v1664
    %v3339 = vpop.f32.mrb[0].mxu0
    %v3340 = vadd.f32 0.0, %v3339
    %v3341 = vpop.f32.mrb[0].mxu0
    %v3342 = vpop.f32.mrb[0].mxu0
    %v3343 = vpop.f32.mrb[0].mxu0
    %3344 = vdwg.mxu0
    %v3345 = vmul.f32 %v3340, %v1712
    %v3346 = vadd.f32 %v1951, %v3345
    %v3347 = vsel %vm224, %v2953, 0
    %3349 = vmatprep.subr.bf16.mxu0 0
    %3350 = vmatpush1.bf16.msra.mxu0 %v2950
    %3351 = vmatprep.subr.bf16.mxu0 0
    %3352 = vmatpush1.bf16.msra.mxu0 %v2951
    %3353 = vmatprep.subr.bf16.mxu0 0
    %3354 = vmatpush1.bf16.msra.mxu0 %v2952
    %3355 = vmatprep.subr.bf16.mxu0 0
    %3356 = vmatpush1.bf16.msra.mxu0 %v3347
    %3357 = vmatprep.subr.bf16.mxu0 0
    %3358 = vmatpush1.bf16.msra.mxu0 0
    %3359 = vmatprep.subr.bf16.mxu0 0
    %3360 = vmatpush1.bf16.msra.mxu0 0
    %3361 = vmatprep.subr.bf16.mxu0 0
    %3362 = vmatpush1.bf16.msra.mxu0 0
    %3363 = vmatprep.subr.bf16.mxu0 0
    %3364 = vmatpush1.bf16.msra.mxu0 0
    %3365 = vmatprep.subr.bf16.mxu0 0
    %3366 = vmatpush1.bf16.msra.mxu0 0
    %3367 = vmatprep.subr.bf16.mxu0 0
    %3368 = vmatpush1.bf16.msra.mxu0 0
    %3369 = vmatprep.subr.bf16.mxu0 0
    %3370 = vmatpush1.bf16.msra.mxu0 0
    %3371 = vmatprep.subr.bf16.mxu0 0
    %3372 = vmatpush1.bf16.msra.mxu0 0
    %3373 = vmatprep.subr.bf16.mxu0 0
    %3374 = vmatpush1.bf16.msra.mxu0 0
    %3375 = vmatprep.subr.bf16.mxu0 0
    %3376 = vmatpush1.bf16.msra.mxu0 0
    %3377 = vmatprep.subr.bf16.mxu0 0
    %3378 = vmatpush1.bf16.msra.mxu0 0
    %3379 = vmatprep.subr.bf16.mxu0 0
    %3380 = vmatpush1.bf16.msra.mxu0 0
    %3381 = vmatprep.mubr.bf16.mxu0 0
    %3382 = vmatmul.mubr.bf16.gmra.mrb[0].mxu0 %v1664
    %v3383 = vpop.f32.mrb[0].mxu0
    %v3384 = vadd.f32 0.0, %v3383
    %v3385 = vpop.f32.mrb[0].mxu0
    %v3386 = vpop.f32.mrb[0].mxu0
    %v3387 = vpop.f32.mrb[0].mxu0
    %3388 = vdwg.mxu0
    %v3389 = vld [vmem:[%s20] sm:$0xf]
    %v3390 = vpack.c.bf16 %v3384, %v3384
    %v3391 = vld [vmem:[%s21] sm:$0xf]
    %v3392 = vld [vmem:[%s21 + $0x4] sm:$0xf]
    %v3393 = vld [vmem:[%s21 + $0x8] sm:$0xf]
    %v3394 = vld [vmem:[%s21 + $0xc] sm:$0xf]
    %v3399 = vunpack.c.l.b16 %v3391
    %v3400 = vunpack.c.l.b16 %v3392
    %v3401 = vunpack.c.l.b16 %v3393
    %v3402 = vunpack.c.l.b16 %v3394
    %v3403 = vpack.c.b16 %v3400, %v3399
    %v3404 = vpack.c.b16 %v3402, %v3401
    %v3408 = vsel %vm1203, %v3390, 0
    %3410 = vmatprep.subr.bf16.mxu0 0
    %3411 = vmatpush1.bf16.msra.mxu0 %v3403
    %3412 = vmatprep.subr.bf16.mxu0 0
    %3413 = vmatpush1.bf16.msra.mxu0 %v3404
    %3414 = vmatprep.subr.bf16.mxu0 0
    %3415 = vmatpush1.bf16.msra.mxu0 0
    %3416 = vmatprep.subr.bf16.mxu0 0
    %3417 = vmatpush1.bf16.msra.mxu0 0
    %3418 = vmatprep.subr.bf16.mxu0 0
    %3419 = vmatpush1.bf16.msra.mxu0 0
    %3420 = vmatprep.subr.bf16.mxu0 0
    %3421 = vmatpush1.bf16.msra.mxu0 0
    %3422 = vmatprep.subr.bf16.mxu0 0
    %3423 = vmatpush1.bf16.msra.mxu0 0
    %3424 = vmatprep.subr.bf16.mxu0 0
    %3425 = vmatpush1.bf16.msra.mxu0 0
    %3426 = vmatprep.subr.bf16.mxu0 0
    %3427 = vmatpush1.bf16.msra.mxu0 0
    %3428 = vmatprep.subr.bf16.mxu0 0
    %3429 = vmatpush1.bf16.msra.mxu0 0
    %3430 = vmatprep.subr.bf16.mxu0 0
    %3431 = vmatpush1.bf16.msra.mxu0 0
    %3432 = vmatprep.subr.bf16.mxu0 0
    %3433 = vmatpush1.bf16.msra.mxu0 0
    %3434 = vmatprep.subr.bf16.mxu0 0
    %3435 = vmatpush1.bf16.msra.mxu0 0
    %3436 = vmatprep.subr.bf16.mxu0 0
    %3437 = vmatpush1.bf16.msra.mxu0 0
    %3438 = vmatprep.subr.bf16.mxu0 0
    %3439 = vmatpush1.bf16.msra.mxu0 0
    %3440 = vmatprep.subr.bf16.mxu0 0
    %3441 = vmatpush1.bf16.msra.mxu0 0
    %3442 = vmatprep.mubr.bf16.mxu0 0
    %3443 = vmatmul.mubr.bf16.gmra.mrb[0].mxu0 %v3408
    %v3444 = vpop.f32.mrb[0].mxu0
    %v3445 = vadd.f32 0.0, %v3444
    %v3446 = vpop.f32.mrb[0].mxu0
    %v3447 = vpop.f32.mrb[0].mxu0
    %v3448 = vpop.f32.mrb[0].mxu0
    %3449 = vdwg.mxu0
    %v3451 = vsel %vm224, %v3389, 0
    %3453 = vmatprep.subr.bf16.mxu0 0
    %3454 = vmatpush1.bf16.msra.mxu0 %v3451
    %3455 = vmatprep.subr.bf16.mxu0 0
    %3456 = vmatpush1.bf16.msra.mxu0 0
    %3457 = vmatprep.subr.bf16.mxu0 0
    %3458 = vmatpush1.bf16.msra.mxu0 0
    %3459 = vmatprep.subr.bf16.mxu0 0
    %3460 = vmatpush1.bf16.msra.mxu0 0
    %3461 = vmatprep.subr.bf16.mxu0 0
    %3462 = vmatpush1.bf16.msra.mxu0 0
    %3463 = vmatprep.subr.bf16.mxu0 0
    %3464 = vmatpush1.bf16.msra.mxu0 0
    %3465 = vmatprep.subr.bf16.mxu0 0
    %3466 = vmatpush1.bf16.msra.mxu0 0
    %3467 = vmatprep.subr.bf16.mxu0 0
    %3468 = vmatpush1.bf16.msra.mxu0 0
    %3469 = vmatprep.subr.bf16.mxu0 0
    %3470 = vmatpush1.bf16.msra.mxu0 0
    %3471 = vmatprep.subr.bf16.mxu0 0
    %3472 = vmatpush1.bf16.msra.mxu0 0
    %3473 = vmatprep.subr.bf16.mxu0 0
    %3474 = vmatpush1.bf16.msra.mxu0 0
    %3475 = vmatprep.subr.bf16.mxu0 0
    %3476 = vmatpush1.bf16.msra.mxu0 0
    %3477 = vmatprep.subr.bf16.mxu0 0
    %3478 = vmatpush1.bf16.msra.mxu0 0
    %3479 = vmatprep.subr.bf16.mxu0 0
    %3480 = vmatpush1.bf16.msra.mxu0 0
    %3481 = vmatprep.subr.bf16.mxu0 0
    %3482 = vmatpush1.bf16.msra.mxu0 0
    %3483 = vmatprep.subr.bf16.mxu0 0
    %3484 = vmatpush1.bf16.msra.mxu0 0
    %3485 = vmatprep.mubr.bf16.mxu0 0
    %3486 = vmatmul.mubr.bf16.gmra.mrb[0].mxu0 %v1956
    %v3487 = vpop.f32.mrb[0].mxu0
    %v3488 = vadd.f32 %v3445, %v3487
    %v3489 = vpop.f32.mrb[0].mxu0
    %v3490 = vpop.f32.mrb[0].mxu0
    %v3491 = vpop.f32.mrb[0].mxu0
    %3492 = vdwg.mxu0
    %v3493 = vld [vmem:[%s22] sm:$0x1]
    %v3495 = vlaneseq
    %v3496 = vshrl.u32 %v3495, 7
    %v3497 = vsub.s32 0, %v3496
    %v3498 = vrot.slane %v3493, %v3497
    %v3500 = vadd.f32 %v3488, %v3498
    %v3501 = vmax.f32 %v3500, 0.0
    %v3502 = vpack.c.bf16 %v3501, %v3501
    %v3503 = vld [vmem:[%s23] sm:$0xf]
    %v3504 = vld [vmem:[%s23 + $0x4] sm:$0xf]
    %v3505 = vld [vmem:[%s23 + $0x8] sm:$0xf]
    %v3506 = vld [vmem:[%s23 + $0xc] sm:$0xf]
    %v3511 = vunpack.c.l.b16 %v3503
    %v3512 = vunpack.c.l.b16 %v3504
    %v3513 = vunpack.c.l.b16 %v3505
    %v3514 = vunpack.c.l.b16 %v3506
    %v3515 = vpack.c.b16 %v3512, %v3511
    %v3516 = vpack.c.b16 %v3514, %v3513
    %v3520 = vsel %vm1203, %v3502, 0
    %3522 = vmatprep.subr.bf16.mxu0 0
    %3523 = vmatpush1.bf16.msra.mxu0 %v3515
    %3524 = vmatprep.subr.bf16.mxu0 0
    %3525 = vmatpush1.bf16.msra.mxu0 %v3516
    %3526 = vmatprep.subr.bf16.mxu0 0
    %3527 = vmatpush1.bf16.msra.mxu0 0
    %3528 = vmatprep.subr.bf16.mxu0 0
    %3529 = vmatpush1.bf16.msra.mxu0 0
    %3530 = vmatprep.subr.bf16.mxu0 0
    %3531 = vmatpush1.bf16.msra.mxu0 0
    %3532 = vmatprep.subr.bf16.mxu0 0
    %3533 = vmatpush1.bf16.msra.mxu0 0
    %3534 = vmatprep.subr.bf16.mxu0 0
    %3535 = vmatpush1.bf16.msra.mxu0 0
    %3536 = vmatprep.subr.bf16.mxu0 0
    %3537 = vmatpush1.bf16.msra.mxu0 0
    %3538 = vmatprep.subr.bf16.mxu0 0
    %3539 = vmatpush1.bf16.msra.mxu0 0
    %3540 = vmatprep.subr.bf16.mxu0 0
    %3541 = vmatpush1.bf16.msra.mxu0 0
    %3542 = vmatprep.subr.bf16.mxu0 0
    %3543 = vmatpush1.bf16.msra.mxu0 0
    %3544 = vmatprep.subr.bf16.mxu0 0
    %3545 = vmatpush1.bf16.msra.mxu0 0
    %3546 = vmatprep.subr.bf16.mxu0 0
    %3547 = vmatpush1.bf16.msra.mxu0 0
    %3548 = vmatprep.subr.bf16.mxu0 0
    %3549 = vmatpush1.bf16.msra.mxu0 0
    %3550 = vmatprep.subr.bf16.mxu0 0
    %3551 = vmatpush1.bf16.msra.mxu0 0
    %3552 = vmatprep.subr.bf16.mxu0 0
    %3553 = vmatpush1.bf16.msra.mxu0 0
    %3554 = vmatprep.mubr.bf16.mxu0 0
    %3555 = vmatmul.mubr.bf16.gmra.mrb[0].mxu0 %v3520
    %v3556 = vpop.f32.mrb[0].mxu0
    %v3557 = vadd.f32 0.0, %v3556
    %v3558 = vpop.f32.mrb[0].mxu0
    %v3559 = vpop.f32.mrb[0].mxu0
    %v3560 = vpop.f32.mrb[0].mxu0
    %3561 = vdwg.mxu0
    %v3562 = vadd.f32 %v1949, %v3557
    %v3563 = vld [vmem:[%s24] sm:$0x1]
    %v3565 = vlaneseq
    %v3566 = vshrl.u32 %v3565, 7
    %v3567 = vsub.s32 0, %v3566
    %v3568 = vrot.slane %v3563, %v3567
    %v3570 = vadd.f32 %v3562, %v3568
    %3572 = vrot.lane.b32.xlu0 %v3346, 8
    %v3573 = vpop.permute.xlu0 %3572
    %v3575 = vsel %vm220, %v3570, %v3573
    %v3576 = vsel %vm1945, %v3575, 0.0
    %s3577 = scalar_lea.vmem [#allocation2], 8
    %3578 = vst [vmem:[%s3577] sm:$0xff] %v3576
    // Predicated region
    $region102: #{tpu_custom_call.1} parent=1 // pred_check
      _
    $region103: #{tpu_custom_call.1} parent=1 // pred_check_branch
      %3580 = sbr.rel (0) target = $region105
    $region104: #{tpu_custom_call.1} parent=1 // pred_region
      %s3582 = ssub.s32 256, 256
      %3583 = vsyncadd [#allocation3], %s3582
      %s3584 = sshll.u32 [#allocation2], 4
      %s3585 = int_to_ptr.vmem [resolvable:$true] %s3584
      %3590 = dma.vmem_to_hbm [thread:$0]  %s3585, 256, %s25, [#allocation3], 128, 128, 8
    $region105: #{tpu_custom_call.1} parent=1 // pred_fallthru
      _
    // Predicated region
    $region106: #{tpu_custom_call.1} parent=1 // pred_check
      _
    $region107: #{tpu_custom_call.1} parent=1 // pred_check_branch
      %3592 = sbr.rel (0) target = $region109
    $region108: #{tpu_custom_call.1} parent=1 // pred_region
      %3593 = dma.done [#allocation3], 256
    $region109: #{tpu_custom_call.1} parent=1 // pred_fallthru
      _
    %3594 = vsyncpa [#allocation3], 1

</llo_original>
